<compile_context>
chip_gen: v7x
topology: tpu7x:2x2x1
jax: 0.10.0
libtpu: 0.0.40
codegen_flags: <defaults>
</compile_context>

<pallas_src>
import functools
import math

import jax
import jax.numpy as jnp
from jax.experimental import pallas as pl
from jax.experimental.pallas import tpu as pltpu


# ----------------------------------------------------------------------------
# Kernel
# ----------------------------------------------------------------------------
def _mha_kernel(x_ref, pos_ref, wqkv_ref, bqkv_ref, wo_ref, bo_ref, out_ref,
                *, num_heads, head_dim, embed_dim, compute_dtype, approx_recip):
    Bt, S, _ = x_ref.shape
    E = embed_dim
    H, Dh = num_heads, head_dim
    f32 = jnp.float32
    mx = compute_dtype

    # Positional-encoding add fused in-kernel (x already resident in VMEM).
    x = x_ref[...].astype(f32) + pos_ref[...].astype(f32)[None]          # (Bt,S,E)
    xf = x.reshape(Bt * S, E).astype(mx)

    # Fused QKV projection for all heads: one lane-dense matmul.
    # wqkv columns: [q(h0..hH-1) | k(h0..) | v(h0..) | zero padding to 128*].
    qkv = jnp.dot(xf, wqkv_ref[...], preferred_element_type=f32) + bqkv_ref[...]
    qkv = qkv.reshape(Bt, S, -1)                                         # (Bt,S,QKVp)

    acc = None
    for h in range(H):                       # static loop; H is small
        off = h * Dh
        q = qkv[:, :, off:off + Dh]                    # scale folded into weights
        k = qkv[:, :, E + off:E + off + Dh]
        v = qkv[:, :, 2 * E + off:2 * E + off + Dh]

        s = jnp.einsum('bqd,bkd->bqk', q.astype(mx), k.astype(mx),
                       preferred_element_type=f32)     # (Bt,S,S)
        m = jnp.max(s, axis=-1, keepdims=True)
        e = jnp.exp(s - m)
        l = jnp.sum(e, axis=-1, keepdims=True)
        p = e * pl.reciprocal(l, approx=approx_recip)  # EUP recip-multiply

        ctx = jnp.einsum('bqk,bkd->bqd', p.astype(mx), v.astype(mx),
                         preferred_element_type=f32)   # (Bt,S,Dh)

        # Per-head output projection accumulated over heads (== concat @ Wo),
        # lane-dense N=Ep; wo rows h*Dh:(h+1)*Dh are sublane-aligned slices.
        wo_h = wo_ref[off:off + Dh, :]                 # (Dh, Ep)
        proj = jnp.dot(ctx.reshape(Bt * S, Dh).astype(mx), wo_h.astype(mx),
                       preferred_element_type=f32)     # (Bt*S, Ep)
        acc = proj if acc is None else acc + proj

    out = acc + bo_ref[...]
    out_ref[...] = out.reshape(Bt, S, -1).astype(out_ref.dtype)


# ----------------------------------------------------------------------------
# Tiling choice
# ----------------------------------------------------------------------------
def _pick_batch_tile(N, S, *, row_target=256):
    """Largest divisor Bt of N with Bt*S <= max(row_target, S) rows per step,
    capped so the 'parallel' grid extent N//Bt is >= 2 when N >= 2 (v7x has
    two TensorCores; nbt==1 would idle one of them)."""
    cap = N if N < 2 else max(1, N // 2)
    best = 1
    for d in range(1, N + 1):
        if N % d == 0 and d <= cap and d * S <= max(row_target, S):
            best = d
    return best


def _pad_to(n, m):
    return ((n + m - 1) // m) * m


# ----------------------------------------------------------------------------
# Wrapper: batch-first multi-head self-attention (torch.nn.MultiheadAttention
# semantics, q = k = v = x, attention weights discarded).
# ----------------------------------------------------------------------------
def mha_batch_first(x, pos, in_proj_w, in_proj_b, out_proj_w, out_proj_b,
                    num_heads, *, compute_dtype=jnp.float32,
                    approx_recip=True, row_target=256, vmem_limit_bytes=None):
    N, S, E = x.shape
    assert E % num_heads == 0, "embed_dim must be divisible by num_heads"
    Dh = E // num_heads
    scale = 1.0 / math.sqrt(Dh)

    QKVp = _pad_to(3 * E, 128)        # lane-dense fused-QKV output width
    Ep = _pad_to(E, 128)              # lane-dense output-projection width

    # torch layout: y = x @ W.T + b  with  in_proj_w = [Wq; Wk; Wv]  (3E, E).
    w = in_proj_w.T.astype(jnp.float32)                       # (E, 3E)
    b = in_proj_b.astype(jnp.float32)                         # (3E,)
    col_scale = jnp.concatenate(
        [jnp.full((E,), scale, jnp.float32), jnp.ones((2 * E,), jnp.float32)])
    w = w * col_scale[None, :]                                # fold 1/sqrt(Dh) into q
    b = b * col_scale
    wqkv = jnp.pad(w, ((0, 0), (0, QKVp - 3 * E))).astype(compute_dtype)
    bqkv = jnp.pad(b, (0, QKVp - 3 * E)).reshape(1, QKVp).astype(jnp.float32)

    wo = jnp.pad(out_proj_w.T.astype(jnp.float32),
                 ((0, 0), (0, Ep - E))).astype(compute_dtype)  # (E, Ep)
    bo = jnp.pad(out_proj_b.astype(jnp.float32),
                 (0, Ep - E)).reshape(1, Ep)

    Bt = _pick_batch_tile(N, S, row_target=row_target)
    nbt = N // Bt

    kernel = functools.partial(
        _mha_kernel, num_heads=num_heads, head_dim=Dh, embed_dim=E,
        compute_dtype=compute_dtype, approx_recip=approx_recip)

    cp_kwargs = dict(dimension_semantics=("parallel",))
    if vmem_limit_bytes is not None:
        # Tune per generation: <= ~48 MiB on v7x (64 MiB physical),
        # up to ~96-100 MiB on v5e/v6e (128 MiB physical) for larger tiles.
        cp_kwargs["vmem_limit_bytes"] = vmem_limit_bytes

    y = pl.pallas_call(
        kernel,
        out_shape=jax.ShapeDtypeStruct((N, S, Ep), x.dtype),
        grid=(nbt,),
        in_specs=[
            pl.BlockSpec((Bt, S, E), lambda i: (i, 0, 0)),     # x (per batch tile)
            pl.BlockSpec((S, E), lambda i: (0, 0)),            # pos (invariant)
            pl.BlockSpec((E, QKVp), lambda i: (0, 0)),          # fused QKV weight
            pl.BlockSpec((1, QKVp), lambda i: (0, 0)),          # fused QKV bias
            pl.BlockSpec((E, Ep), lambda i: (0, 0)),            # out-proj weight
            pl.BlockSpec((1, Ep), lambda i: (0, 0)),            # out-proj bias
        ],
        out_specs=pl.BlockSpec((Bt, S, Ep), lambda i: (i, 0, 0)),
        compiler_params=pltpu.CompilerParams(**cp_kwargs),
    )(x.astype(compute_dtype), pos.astype(jnp.float32),
      wqkv, bqkv, wo, bo)

    # Drop lane padding; this slice fuses into the caller's residual add.
    return y[..., :E]


# ----------------------------------------------------------------------------
# SEMambaAt attention insertion (positional encoding + MHA + residual)
# ----------------------------------------------------------------------------
def sinusoids(length, channels, max_timescale=10000):
    assert channels % 2 == 0
    log_timescale_increment = math.log(max_timescale) / (channels // 2 - 1)
    inv_timescales = jnp.exp(
        -log_timescale_increment * jnp.arange(channels // 2, dtype=jnp.float32))
    scaled_time = (jnp.arange(length, dtype=jnp.float32)[:, None]
                   * inv_timescales[None, :])
    return jnp.concatenate([jnp.sin(scaled_time), jnp.cos(scaled_time)], axis=1)


def _extend_pos_embedding(pe, T):
    L = pe.shape[0]
    if T > L:
        rep = T // L + 1
        pe = jnp.tile(pe, (rep, 1))
    return pe[:T]


def semamba_attention_insertion(x, in_proj_w, in_proj_b, out_proj_w, out_proj_b,
                                num_heads, positional_embedding=None,
                                *, compute_dtype=jnp.float32, approx_recip=True,
                                vmem_limit_bytes=None):
    """x: (B, C, T, F) activation between Mamba blocks; returns x + attention(x+pe)."""
    B, C, T, F = x.shape
    x_seq = x.reshape(B * C, T, F)
    if positional_embedding is not None:
        pe = _extend_pos_embedding(positional_embedding, T).astype(jnp.float32)
    else:
        pe = jnp.zeros((T, F), jnp.float32)
    x_att = mha_batch_first(x_seq, pe, in_proj_w, in_proj_b, out_proj_w,
                            out_proj_b, num_heads,
                            compute_dtype=compute_dtype,
                            approx_recip=approx_recip,
                            vmem_limit_bytes=vmem_limit_bytes)
    return x + x_att.astype(x.dtype).reshape(B, C, T, F)


# ----------------------------------------------------------------------------
# Pure-JAX reference (mirrors torch.nn.MultiheadAttention + the insertion)
# ----------------------------------------------------------------------------
def reference_insertion(x, in_proj_w, in_proj_b, out_proj_w, out_proj_b,
                        num_heads, positional_embedding=None):
    B, C, T, F = x.shape
    E = F
    Dh = E // num_heads
    x_seq = x.reshape(B * C, T, F)
    if positional_embedding is not None:
        pe = _extend_pos_embedding(positional_embedding, T)
        x_seq = x_seq + pe[None]

    q = x_seq @ in_proj_w[0 * E:1 * E].T + in_proj_b[0 * E:1 * E]
    k = x_seq @ in_proj_w[1 * E:2 * E].T + in_proj_b[1 * E:2 * E]
    v = x_seq @ in_proj_w[2 * E:3 * E].T + in_proj_b[2 * E:3 * E]

    def split(a):
        return a.reshape(B * C, T, num_heads, Dh).transpose(0, 2, 1, 3)

    qh, kh, vh = split(q), split(k), split(v)
    s = jnp.einsum('bhqd,bhkd->bhqk', qh, kh) / math.sqrt(Dh)
    p = jax.nn.softmax(s, axis=-1)
    ctx = jnp.einsum('bhqk,bhkd->bhqd', p, vh)
    ctx = ctx.transpose(0, 2, 1, 3).reshape(B * C, T, E)
    att = ctx @ out_proj_w.T + out_proj_b
    return x + att.reshape(B, C, T, F)


# ----------------------------------------------------------------------------
if __name__ == "__main__":
    # Small shapes consistent with the module: x between Mamba blocks is
    # (B, C, T, F) with F = attention_embed_dim; PE length < T exercises the
    # repeat/extend branch.
    B, C, T, F, H = 2, 4, 16, 32, 4
    PE_LEN = 8

    key = jax.random.PRNGKey(0)
    kx, kw, kb, kow, kob = jax.random.split(key, 5)
    x = jax.random.normal(kx, (B, C, T, F), jnp.float32)
    in_proj_w = 0.1 * jax.random.normal(kw, (3 * F, F), jnp.float32)
    in_proj_b = 0.1 * jax.random.normal(kb, (3 * F,), jnp.float32)
    out_proj_w = 0.1 * jax.random.normal(kow, (F, F), jnp.float32)
    out_proj_b = 0.1 * jax.random.normal(kob, (F,), jnp.float32)
    pos_emb = sinusoids(PE_LEN, F)

    with jax.default_matmul_precision("float32"):
        ref = reference_insertion(x, in_proj_w, in_proj_b, out_proj_w,
                                  out_proj_b, H, pos_emb)
    ref = jax.block_until_ready(ref)

    # 1) f32 path, exact reciprocal (tight check)
    out = semamba_attention_insertion(x, in_proj_w, in_proj_b, out_proj_w,
                                      out_proj_b, H, pos_emb,
                                      compute_dtype=jnp.float32,
                                      approx_recip=False)
    out = jax.block_until_ready(out)
    assert out.shape == (B, C, T, F)
    assert jnp.allclose(out, ref, atol=2e-3, rtol=2e-3), "exact f32 path mismatch"

    # 2) default fast path (approx EUP reciprocal)
    out_fast = semamba_attention_insertion(x, in_proj_w, in_proj_b, out_proj_w,
                                           out_proj_b, H, pos_emb,
                                           compute_dtype=jnp.float32,
                                           approx_recip=True)
    out_fast = jax.block_until_ready(out_fast)
    assert jnp.allclose(out_fast, ref, atol=1e-2, rtol=1e-2), "approx path mismatch"

    # 3) bf16 MXU path (f32 accumulation / softmax), loose check
    out_bf = semamba_attention_insertion(x, in_proj_w, in_proj_b, out_proj_w,
                                         out_proj_b, H, pos_emb,
                                         compute_dtype=jnp.bfloat16,
                                         approx_recip=True)
    out_bf = jax.block_until_ready(out_bf)
    assert jnp.allclose(out_bf.astype(jnp.float32), ref, atol=1.5e-1, rtol=1.5e-1), \
        "bf16 path mismatch"

    print("KERNEL_OK")
</pallas_src>

<mosaic_0001>
module attributes {stable_mosaic.version = 11 : i64} {
  func.func @_mha_kernel(%arg0: i32, %arg1: memref<4x16x32xf32, #tpu.memory_space<vmem>>, %arg2: memref<16x32xf32, #tpu.memory_space<vmem>>, %arg3: memref<32x128xf32, #tpu.memory_space<vmem>>, %arg4: memref<1x128xf32, #tpu.memory_space<vmem>>, %arg5: memref<32x128xf32, #tpu.memory_space<vmem>>, %arg6: memref<1x128xf32, #tpu.memory_space<vmem>>, %arg7: memref<4x16x128xf32, #tpu.memory_space<vmem>>) attributes {dimension_semantics = [#tpu.dimension_semantics<parallel>], iteration_bounds = array<i64: 2>, scalar_prefetch = 0 : i64, scratch_operands = 0 : i64, tpu.core_type = #tpu.core_type<tc>, window_params = [{transform_indices = @transform_0, window_bounds = array<i64: 4, 16, 32>}, {pipeline_mode = #tpu.pipeline_mode<synchronous>, transform_indices = @transform_1, window_bounds = array<i64: 16, 32>}, {pipeline_mode = #tpu.pipeline_mode<synchronous>, transform_indices = @transform_2, window_bounds = array<i64: 32, 128>}, {pipeline_mode = #tpu.pipeline_mode<synchronous>, transform_indices = @transform_3, window_bounds = array<i64: 1, 128>}, {pipeline_mode = #tpu.pipeline_mode<synchronous>, transform_indices = @transform_4, window_bounds = array<i64: 32, 128>}, {pipeline_mode = #tpu.pipeline_mode<synchronous>, transform_indices = @transform_5, window_bounds = array<i64: 1, 128>}, {transform_indices = @transform_6, window_bounds = array<i64: 4, 16, 128>}]} {
    %c0 = arith.constant 0 : index
    %c0_0 = arith.constant 0 : index
    %c0_1 = arith.constant 0 : index
    %0 = vector.load %arg1[%c0, %c0_0, %c0_1] : memref<4x16x32xf32, #tpu.memory_space<vmem>>, vector<4x16x32xf32>
    %c0_2 = arith.constant 0 : index
    %c0_3 = arith.constant 0 : index
    %1 = vector.load %arg2[%c0_2, %c0_3] : memref<16x32xf32, #tpu.memory_space<vmem>>, vector<16x32xf32>
    %2 = vector.shape_cast %1 : vector<16x32xf32> to vector<1x16x32xf32>
    %3 = vector.broadcast %2 : vector<1x16x32xf32> to vector<4x16x32xf32>
    %4 = arith.addf %0, %3 : vector<4x16x32xf32>
    %5 = vector.shape_cast %4 : vector<4x16x32xf32> to vector<64x32xf32>
    %c0_4 = arith.constant 0 : index
    %c0_5 = arith.constant 0 : index
    %6 = vector.load %arg3[%c0_4, %c0_5] : memref<32x128xf32, #tpu.memory_space<vmem>>, vector<32x128xf32>
    %cst = arith.constant dense<0.000000e+00> : vector<64x128xf32>
    %7 = tpu.matmul %5, %6, %cst {dimension_numbers = #tpu.dot_dimension_numbers<[1], [0], [0], [1], [0, 0, 1, 1], [], []>} : vector<64x32xf32>, vector<32x128xf32>, vector<64x128xf32> -> vector<64x128xf32>
    %c0_6 = arith.constant 0 : index
    %c0_7 = arith.constant 0 : index
    %8 = vector.load %arg4[%c0_6, %c0_7] : memref<1x128xf32, #tpu.memory_space<vmem>>, vector<1x128xf32>
    %9 = vector.broadcast %8 : vector<1x128xf32> to vector<64x128xf32>
    %10 = arith.addf %7, %9 : vector<64x128xf32>
    %11 = vector.shape_cast %10 : vector<64x128xf32> to vector<4x16x128xf32>
    %12 = vector.extract_strided_slice %11 {offsets = [0, 0, 0], sizes = [4, 16, 8], strides = [1, 1, 1]} : vector<4x16x128xf32> to vector<4x16x8xf32>
    %13 = vector.extract_strided_slice %11 {offsets = [0, 0, 32], sizes = [4, 16, 8], strides = [1, 1, 1]} : vector<4x16x128xf32> to vector<4x16x8xf32>
    %14 = vector.extract_strided_slice %11 {offsets = [0, 0, 64], sizes = [4, 16, 8], strides = [1, 1, 1]} : vector<4x16x128xf32> to vector<4x16x8xf32>
    "tpu.trace_start"() <{level = 10 : i32, message = "bqd,bkd->bqk"}> : () -> ()
    %cst_8 = arith.constant dense<0.000000e+00> : vector<4x16x16xf32>
    %15 = tpu.matmul %12, %13, %cst_8 {dimension_numbers = #tpu.dot_dimension_numbers<[2], [2], [1], [1], [0, 0, 0, 1, 1, 1], [0], [0]>} : vector<4x16x8xf32>, vector<4x16x8xf32>, vector<4x16x16xf32> -> vector<4x16x16xf32>
    "tpu.trace_stop"() : () -> ()
    %cst_9 = arith.constant dense<0xFF800000> : vector<4x16xf32>
    %16 = vector.multi_reduction <maximumf>, %15, %cst_9 [2] : vector<4x16x16xf32> to vector<4x16xf32>
    %17 = vector.shape_cast %16 : vector<4x16xf32> to vector<4x16x1xf32>
    %18 = vector.broadcast %17 : vector<4x16x1xf32> to vector<4x16x16xf32>
    %19 = arith.subf %15, %18 : vector<4x16x16xf32>
    %20 = math.exp %19 : vector<4x16x16xf32>
    %cst_10 = arith.constant dense<0.000000e+00> : vector<4x16xf32>
    %21 = vector.multi_reduction <add>, %20, %cst_10 [2] : vector<4x16x16xf32> to vector<4x16xf32>
    %22 = vector.shape_cast %21 : vector<4x16xf32> to vector<4x16x1xf32>
    %23 = tpu.reciprocal %22 : vector<4x16x1xf32> -> vector<4x16x1xf32>
    %24 = vector.broadcast %23 : vector<4x16x1xf32> to vector<4x16x16xf32>
    %25 = arith.mulf %20, %24 : vector<4x16x16xf32>
    "tpu.trace_start"() <{level = 10 : i32, message = "bqk,bkd->bqd"}> : () -> ()
    %cst_11 = arith.constant dense<0.000000e+00> : vector<4x16x8xf32>
    %26 = tpu.matmul %25, %14, %cst_11 {dimension_numbers = #tpu.dot_dimension_numbers<[2], [1], [1], [2], [0, 0, 0, 1, 1, 2], [0], [0]>} : vector<4x16x16xf32>, vector<4x16x8xf32>, vector<4x16x8xf32> -> vector<4x16x8xf32>
    "tpu.trace_stop"() : () -> ()
    %c0_12 = arith.constant 0 : index
    %c0_13 = arith.constant 0 : index
    %27 = vector.load %arg5[%c0_12, %c0_13] : memref<32x128xf32, #tpu.memory_space<vmem>>, vector<8x128xf32>
    %28 = vector.shape_cast %26 : vector<4x16x8xf32> to vector<64x8xf32>
    %cst_14 = arith.constant dense<0.000000e+00> : vector<64x128xf32>
    %29 = tpu.matmul %28, %27, %cst_14 {dimension_numbers = #tpu.dot_dimension_numbers<[1], [0], [0], [1], [0, 0, 1, 1], [], []>} : vector<64x8xf32>, vector<8x128xf32>, vector<64x128xf32> -> vector<64x128xf32>
    %30 = vector.extract_strided_slice %11 {offsets = [0, 0, 8], sizes = [4, 16, 8], strides = [1, 1, 1]} : vector<4x16x128xf32> to vector<4x16x8xf32>
    %31 = vector.extract_strided_slice %11 {offsets = [0, 0, 40], sizes = [4, 16, 8], strides = [1, 1, 1]} : vector<4x16x128xf32> to vector<4x16x8xf32>
    %32 = vector.extract_strided_slice %11 {offsets = [0, 0, 72], sizes = [4, 16, 8], strides = [1, 1, 1]} : vector<4x16x128xf32> to vector<4x16x8xf32>
    "tpu.trace_start"() <{level = 10 : i32, message = "bqd,bkd->bqk"}> : () -> ()
    %cst_15 = arith.constant dense<0.000000e+00> : vector<4x16x16xf32>
    %33 = tpu.matmul %30, %31, %cst_15 {dimension_numbers = #tpu.dot_dimension_numbers<[2], [2], [1], [1], [0, 0, 0, 1, 1, 1], [0], [0]>} : vector<4x16x8xf32>, vector<4x16x8xf32>, vector<4x16x16xf32> -> vector<4x16x16xf32>
    "tpu.trace_stop"() : () -> ()
    %cst_16 = arith.constant dense<0xFF800000> : vector<4x16xf32>
    %34 = vector.multi_reduction <maximumf>, %33, %cst_16 [2] : vector<4x16x16xf32> to vector<4x16xf32>
    %35 = vector.shape_cast %34 : vector<4x16xf32> to vector<4x16x1xf32>
    %36 = vector.broadcast %35 : vector<4x16x1xf32> to vector<4x16x16xf32>
    %37 = arith.subf %33, %36 : vector<4x16x16xf32>
    %38 = math.exp %37 : vector<4x16x16xf32>
    %cst_17 = arith.constant dense<0.000000e+00> : vector<4x16xf32>
    %39 = vector.multi_reduction <add>, %38, %cst_17 [2] : vector<4x16x16xf32> to vector<4x16xf32>
    %40 = vector.shape_cast %39 : vector<4x16xf32> to vector<4x16x1xf32>
    %41 = tpu.reciprocal %40 : vector<4x16x1xf32> -> vector<4x16x1xf32>
    %42 = vector.broadcast %41 : vector<4x16x1xf32> to vector<4x16x16xf32>
    %43 = arith.mulf %38, %42 : vector<4x16x16xf32>
    "tpu.trace_start"() <{level = 10 : i32, message = "bqk,bkd->bqd"}> : () -> ()
    %cst_18 = arith.constant dense<0.000000e+00> : vector<4x16x8xf32>
    %44 = tpu.matmul %43, %32, %cst_18 {dimension_numbers = #tpu.dot_dimension_numbers<[2], [1], [1], [2], [0, 0, 0, 1, 1, 2], [0], [0]>} : vector<4x16x16xf32>, vector<4x16x8xf32>, vector<4x16x8xf32> -> vector<4x16x8xf32>
    "tpu.trace_stop"() : () -> ()
    %c8 = arith.constant 8 : index
    %c0_19 = arith.constant 0 : index
    %45 = vector.load %arg5[%c8, %c0_19] : memref<32x128xf32, #tpu.memory_space<vmem>>, vector<8x128xf32>
    %46 = vector.shape_cast %44 : vector<4x16x8xf32> to vector<64x8xf32>
    %cst_20 = arith.constant dense<0.000000e+00> : vector<64x128xf32>
    %47 = tpu.matmul %46, %45, %cst_20 {dimension_numbers = #tpu.dot_dimension_numbers<[1], [0], [0], [1], [0, 0, 1, 1], [], []>} : vector<64x8xf32>, vector<8x128xf32>, vector<64x128xf32> -> vector<64x128xf32>
    %48 = arith.addf %29, %47 : vector<64x128xf32>
    %49 = vector.extract_strided_slice %11 {offsets = [0, 0, 16], sizes = [4, 16, 8], strides = [1, 1, 1]} : vector<4x16x128xf32> to vector<4x16x8xf32>
    %50 = vector.extract_strided_slice %11 {offsets = [0, 0, 48], sizes = [4, 16, 8], strides = [1, 1, 1]} : vector<4x16x128xf32> to vector<4x16x8xf32>
    %51 = vector.extract_strided_slice %11 {offsets = [0, 0, 80], sizes = [4, 16, 8], strides = [1, 1, 1]} : vector<4x16x128xf32> to vector<4x16x8xf32>
    "tpu.trace_start"() <{level = 10 : i32, message = "bqd,bkd->bqk"}> : () -> ()
    %cst_21 = arith.constant dense<0.000000e+00> : vector<4x16x16xf32>
    %52 = tpu.matmul %49, %50, %cst_21 {dimension_numbers = #tpu.dot_dimension_numbers<[2], [2], [1], [1], [0, 0, 0, 1, 1, 1], [0], [0]>} : vector<4x16x8xf32>, vector<4x16x8xf32>, vector<4x16x16xf32> -> vector<4x16x16xf32>
    "tpu.trace_stop"() : () -> ()
    %cst_22 = arith.constant dense<0xFF800000> : vector<4x16xf32>
    %53 = vector.multi_reduction <maximumf>, %52, %cst_22 [2] : vector<4x16x16xf32> to vector<4x16xf32>
    %54 = vector.shape_cast %53 : vector<4x16xf32> to vector<4x16x1xf32>
    %55 = vector.broadcast %54 : vector<4x16x1xf32> to vector<4x16x16xf32>
    %56 = arith.subf %52, %55 : vector<4x16x16xf32>
    %57 = math.exp %56 : vector<4x16x16xf32>
    %cst_23 = arith.constant dense<0.000000e+00> : vector<4x16xf32>
    %58 = vector.multi_reduction <add>, %57, %cst_23 [2] : vector<4x16x16xf32> to vector<4x16xf32>
    %59 = vector.shape_cast %58 : vector<4x16xf32> to vector<4x16x1xf32>
    %60 = tpu.reciprocal %59 : vector<4x16x1xf32> -> vector<4x16x1xf32>
    %61 = vector.broadcast %60 : vector<4x16x1xf32> to vector<4x16x16xf32>
    %62 = arith.mulf %57, %61 : vector<4x16x16xf32>
    "tpu.trace_start"() <{level = 10 : i32, message = "bqk,bkd->bqd"}> : () -> ()
    %cst_24 = arith.constant dense<0.000000e+00> : vector<4x16x8xf32>
    %63 = tpu.matmul %62, %51, %cst_24 {dimension_numbers = #tpu.dot_dimension_numbers<[2], [1], [1], [2], [0, 0, 0, 1, 1, 2], [0], [0]>} : vector<4x16x16xf32>, vector<4x16x8xf32>, vector<4x16x8xf32> -> vector<4x16x8xf32>
    "tpu.trace_stop"() : () -> ()
    %c16 = arith.constant 16 : index
    %c0_25 = arith.constant 0 : index
    %64 = vector.load %arg5[%c16, %c0_25] : memref<32x128xf32, #tpu.memory_space<vmem>>, vector<8x128xf32>
    %65 = vector.shape_cast %63 : vector<4x16x8xf32> to vector<64x8xf32>
    %cst_26 = arith.constant dense<0.000000e+00> : vector<64x128xf32>
    %66 = tpu.matmul %65, %64, %cst_26 {dimension_numbers = #tpu.dot_dimension_numbers<[1], [0], [0], [1], [0, 0, 1, 1], [], []>} : vector<64x8xf32>, vector<8x128xf32>, vector<64x128xf32> -> vector<64x128xf32>
    %67 = arith.addf %48, %66 : vector<64x128xf32>
    %68 = vector.extract_strided_slice %11 {offsets = [0, 0, 24], sizes = [4, 16, 8], strides = [1, 1, 1]} : vector<4x16x128xf32> to vector<4x16x8xf32>
    %69 = vector.extract_strided_slice %11 {offsets = [0, 0, 56], sizes = [4, 16, 8], strides = [1, 1, 1]} : vector<4x16x128xf32> to vector<4x16x8xf32>
    %70 = vector.extract_strided_slice %11 {offsets = [0, 0, 88], sizes = [4, 16, 8], strides = [1, 1, 1]} : vector<4x16x128xf32> to vector<4x16x8xf32>
    "tpu.trace_start"() <{level = 10 : i32, message = "bqd,bkd->bqk"}> : () -> ()
    %cst_27 = arith.constant dense<0.000000e+00> : vector<4x16x16xf32>
    %71 = tpu.matmul %68, %69, %cst_27 {dimension_numbers = #tpu.dot_dimension_numbers<[2], [2], [1], [1], [0, 0, 0, 1, 1, 1], [0], [0]>} : vector<4x16x8xf32>, vector<4x16x8xf32>, vector<4x16x16xf32> -> vector<4x16x16xf32>
    "tpu.trace_stop"() : () -> ()
    %cst_28 = arith.constant dense<0xFF800000> : vector<4x16xf32>
    %72 = vector.multi_reduction <maximumf>, %71, %cst_28 [2] : vector<4x16x16xf32> to vector<4x16xf32>
    %73 = vector.shape_cast %72 : vector<4x16xf32> to vector<4x16x1xf32>
    %74 = vector.broadcast %73 : vector<4x16x1xf32> to vector<4x16x16xf32>
    %75 = arith.subf %71, %74 : vector<4x16x16xf32>
    %76 = math.exp %75 : vector<4x16x16xf32>
    %cst_29 = arith.constant dense<0.000000e+00> : vector<4x16xf32>
    %77 = vector.multi_reduction <add>, %76, %cst_29 [2] : vector<4x16x16xf32> to vector<4x16xf32>
    %78 = vector.shape_cast %77 : vector<4x16xf32> to vector<4x16x1xf32>
    %79 = tpu.reciprocal %78 : vector<4x16x1xf32> -> vector<4x16x1xf32>
    %80 = vector.broadcast %79 : vector<4x16x1xf32> to vector<4x16x16xf32>
    %81 = arith.mulf %76, %80 : vector<4x16x16xf32>
    "tpu.trace_start"() <{level = 10 : i32, message = "bqk,bkd->bqd"}> : () -> ()
    %cst_30 = arith.constant dense<0.000000e+00> : vector<4x16x8xf32>
    %82 = tpu.matmul %81, %70, %cst_30 {dimension_numbers = #tpu.dot_dimension_numbers<[2], [1], [1], [2], [0, 0, 0, 1, 1, 2], [0], [0]>} : vector<4x16x16xf32>, vector<4x16x8xf32>, vector<4x16x8xf32> -> vector<4x16x8xf32>
    "tpu.trace_stop"() : () -> ()
    %c24 = arith.constant 24 : index
    %c0_31 = arith.constant 0 : index
    %83 = vector.load %arg5[%c24, %c0_31] : memref<32x128xf32, #tpu.memory_space<vmem>>, vector<8x128xf32>
    %84 = vector.shape_cast %82 : vector<4x16x8xf32> to vector<64x8xf32>
    %cst_32 = arith.constant dense<0.000000e+00> : vector<64x128xf32>
    %85 = tpu.matmul %84, %83, %cst_32 {dimension_numbers = #tpu.dot_dimension_numbers<[1], [0], [0], [1], [0, 0, 1, 1], [], []>} : vector<64x8xf32>, vector<8x128xf32>, vector<64x128xf32> -> vector<64x128xf32>
    %86 = arith.addf %67, %85 : vector<64x128xf32>
    %c0_33 = arith.constant 0 : index
    %c0_34 = arith.constant 0 : index
    %87 = vector.load %arg6[%c0_33, %c0_34] : memref<1x128xf32, #tpu.memory_space<vmem>>, vector<1x128xf32>
    %88 = vector.broadcast %87 : vector<1x128xf32> to vector<64x128xf32>
    %89 = arith.addf %86, %88 : vector<64x128xf32>
    %90 = vector.shape_cast %89 : vector<64x128xf32> to vector<4x16x128xf32>
    %c0_35 = arith.constant 0 : index
    %c0_36 = arith.constant 0 : index
    %c0_37 = arith.constant 0 : index
    %91 = vector.load %arg7[%c0_35, %c0_36, %c0_37] : memref<4x16x128xf32, #tpu.memory_space<vmem>>, vector<4x16x128xf32>
    tpu.vector_store %arg7[%c0_35, %c0_36, %c0_37], %90 {strides = array<i32>} : memref<4x16x128xf32, #tpu.memory_space<vmem>>, vector<4x16x128xf32>,
    return
  }
  func.func @transform_0(%arg0: i32) -> (i32, i32, i32) {
    %c0_i32 = arith.constant 0 : i32
    %c0_i32_0 = arith.constant 0 : i32
    %c0_i32_1 = arith.constant 0 : i32
    return %arg0, %c0_i32, %c0_i32_0 : i32, i32, i32
  }
  func.func @transform_1(%arg0: i32) -> (i32, i32) {
    %c0_i32 = arith.constant 0 : i32
    %c0_i32_0 = arith.constant 0 : i32
    %c0_i32_1 = arith.constant 0 : i32
    return %c0_i32, %c0_i32_0 : i32, i32
  }
  func.func @transform_2(%arg0: i32) -> (i32, i32) {
    %c0_i32 = arith.constant 0 : i32
    %c0_i32_0 = arith.constant 0 : i32
    %c0_i32_1 = arith.constant 0 : i32
    return %c0_i32, %c0_i32_0 : i32, i32
  }
  func.func @transform_3(%arg0: i32) -> (i32, i32) {
    %c0_i32 = arith.constant 0 : i32
    %c0_i32_0 = arith.constant 0 : i32
    %c0_i32_1 = arith.constant 0 : i32
    return %c0_i32, %c0_i32_0 : i32, i32
  }
  func.func @transform_4(%arg0: i32) -> (i32, i32) {
    %c0_i32 = arith.constant 0 : i32
    %c0_i32_0 = arith.constant 0 : i32
    %c0_i32_1 = arith.constant 0 : i32
    return %c0_i32, %c0_i32_0 : i32, i32
  }
  func.func @transform_5(%arg0: i32) -> (i32, i32) {
    %c0_i32 = arith.constant 0 : i32
    %c0_i32_0 = arith.constant 0 : i32
    %c0_i32_1 = arith.constant 0 : i32
    return %c0_i32, %c0_i32_0 : i32, i32
  }
  func.func @transform_6(%arg0: i32) -> (i32, i32, i32) {
    %c0_i32 = arith.constant 0 : i32
    %c0_i32_0 = arith.constant 0 : i32
    %c0_i32_1 = arith.constant 0 : i32
    return %arg0, %c0_i32, %c0_i32_0 : i32, i32, i32
  }
}

</mosaic_0001>

<llo_original>
// kernel: tpu_custom_call.1
$region0: #{tpu_custom_call.1}
  #allocation0 [shape = 'u32[]', space=smem, size = 0x4, offset = 0x4, fixed_abs, tag = 'smem constant byte address 0x4 - core index']
  #allocation1 [shape = 'u32[144,128]{1,0:T(1,128)}', space=vmem, size = 0x12000, scoped, tag = 'internal scratch']
  %s0 = inlined_call_operand.hbm [shape: f32[8,16,32], index: 0, kind: input, shape index: {}]
  %s1 = inlined_call_operand.hbm [shape: f32[16,32], index: 1, kind: input, shape index: {}]
  %s2 = inlined_call_operand.hbm [shape: f32[32,128], index: 2, kind: input, shape index: {}]
  %s3 = inlined_call_operand.vmem [shape: f32[1,128], index: 3, kind: input, shape index: {}]
  %s4 = inlined_call_operand.hbm [shape: f32[32,128], index: 4, kind: input, shape index: {}]
  %s5 = inlined_call_operand.vmem [shape: f32[1,128], index: 5, kind: input, shape index: {}]
  %s6 = inlined_call_operand.hbm [shape: f32[8,16,128], index: 6, kind: output, shape index: {}]
  %s7 = sld [smem:[#allocation0]]
  $region73: #{tpu_custom_call.1} parent=0
    _
  %s9 = ssub.s32 1, %s7
  %s10 = scalar_select 0, %s9, %s7
  $region1: #{tpu_custom_call.1} parent=0
    #allocation2 [shape = 'u8[65536]{0}', space=vmem, size = 0x10000, scoped, tag = 'input window, operand 0']
    #allocation3 [shape = 's32[2]{0}', space=sflag, size = 0x8, scoped, tag = 'scoped memory for tpu_custom_call.1']
    #allocation4 [shape = 's32[2]{0}', space=sflag, size = 0x8, scoped, tag = 'scoped memory for tpu_custom_call.1']
    #allocation5 [shape = 'u8[8192]{0}', space=vmem, size = 0x2000, scoped, tag = 'input window, operand 1, single buffered']
    #allocation6 [shape = 's32[1]{0}', space=sflag, size = 0x4, scoped, tag = 'scoped memory for tpu_custom_call.1']
    #allocation7 [shape = 'u8[16384]{0}', space=vmem, size = 0x4000, scoped, tag = 'input window, operand 2, single buffered']
    #allocation8 [shape = 'u8[16384]{0}', space=vmem, size = 0x4000, scoped, tag = 'input window, operand 4, single buffered']
    #allocation9 [shape = 's32[1]{0}', space=sflag, size = 0x4, scoped, tag = 'scoped memory for tpu_custom_call.1']
    #allocation10 [shape = 'u8[65536]{0}', space=vmem, size = 0x10000, scoped, tag = 'output window, operand 0']
    %11 = vsyncpa [#allocation3], 0
    %s12 = scalar_lea.sflag [#allocation3], 1
    %13 = vsyncpa %s12, 0
    %14 = vsyncpa [#allocation6], 0
    %15 = vsyncpa [#allocation9], 0
    %16 = vsyncpa [#allocation4], 0
    %s17 = scalar_lea.sflag [#allocation4], 1
    %18 = vsyncpa %s17, 0
    loop: start=0, step=1, limit=4
    $region2: #{tpu_custom_call.1} parent=1 // loop_pre_header
      _
    $region3: #{tpu_custom_call.1} parent=1 // loop_header
      %s20 = sphi 0, %s24
      %p21 = scmp.ge.s32.totalorder %s20, 4
      %s30 = sphi 0, %s32
      %s33 = sphi 0, %s30
      %s34 = sphi 0, %s33
      %s50 = sphi 0, %s34
      %s54 = sphi 0, %s54
      %s56 = sphi 0, %s54
      %s57 = sphi 0, %s56
      %s71 = sphi 0, %s57
      %s75 = sphi 0, %s75
      %s77 = sphi 0, %s75
      %s78 = sphi 0, %s77
      %s92 = sphi 0, %s78
      %s96 = sphi 0, %s96
      %s98 = sphi 0, %s96
      %s99 = sphi 0, %s98
      %s113 = sphi 0, %s99
      %s117 = sphi 0, %s117
      %s119 = sphi 0, %s117
      %s120 = sphi 0, %s119
      %s134 = sphi 0, %s120
      %s138 = sphi 0, %s138
      %s140 = sphi 0, %s138
      %s141 = sphi 0, %s140
      %s155 = sphi 0, %s141
      %s161 = sphi 0, %s163
      %s164 = sphi 0, %s161
      %s165 = sphi 0, %s164
      %s181 = sphi 0, %s165
    $region4: #{tpu_custom_call.1} parent=1 // loop_header_branch
      %23 = sbr.rel (%p21) target = $region8
    $region5: #{tpu_custom_call.1} parent=1 // loop_body
      %s25 = ssub.s32 %s20, 1
      %s26 = ssub.s32 %s20, 2
      %s27 = sadd.s32 %s20, 1
      %s28 = ssub.s32 %s20, %s27
      %p29 = scmp.eq.s32.totalorder %s28, 0
      %s31 = sadd.s32 %s30, 1
      %s32 = scalar_select %p29, %s30, %s31
      %p35 = pneg %p29
      %p36 = scmp.eq.s32.totalorder %s20, 1
      %p37 = por %p35, %p36
      %p38 = scmp.ne.s32.totalorder %s30, %s33
      %p39 = scmp.eq.s32.totalorder %s20, 0
      %p40 = por %p38, %p39
      %p41 = scmp.ne.s32.totalorder %s30, %s33
      %p42 = scmp.eq.s32.totalorder %s25, 1
      %p43 = por %p41, %p42
      %p44 = scmp.ne.s32.totalorder %s33, %s34
      %p45 = scmp.eq.s32.totalorder %s25, 0
      %p46 = por %p44, %p45
      %p47 = scmp.ne.s32.totalorder %s33, %s34
      %p48 = scmp.eq.s32.totalorder %s26, 1
      %p49 = por %p47, %p48
      %p51 = scmp.ne.s32.totalorder %s34, %s50
      %p52 = scmp.eq.s32.totalorder %s26, 0
      %p53 = por %p51, %p52
      %s55 = sadd.s32 %s54, 1
      %p58 = scmp.eq.s32.totalorder %s20, 1
      %p59 = scmp.ne.s32.totalorder %s54, %s56
      %p60 = scmp.eq.s32.totalorder %s20, 0
      %p61 = por %p59, %p60
      %p62 = scmp.ne.s32.totalorder %s54, %s56
      %p63 = scmp.eq.s32.totalorder %s25, 1
      %p64 = por %p62, %p63
      %p65 = scmp.ne.s32.totalorder %s56, %s57
      %p66 = scmp.eq.s32.totalorder %s25, 0
      %p67 = por %p65, %p66
      %p68 = scmp.ne.s32.totalorder %s56, %s57
      %p69 = scmp.eq.s32.totalorder %s26, 1
      %p70 = por %p68, %p69
      %p72 = scmp.ne.s32.totalorder %s57, %s71
      %p73 = scmp.eq.s32.totalorder %s26, 0
      %p74 = por %p72, %p73
      %s76 = sadd.s32 %s75, 1
      %p79 = scmp.eq.s32.totalorder %s20, 1
      %p80 = scmp.ne.s32.totalorder %s75, %s77
      %p81 = scmp.eq.s32.totalorder %s20, 0
      %p82 = por %p80, %p81
      %p83 = scmp.ne.s32.totalorder %s75, %s77
      %p84 = scmp.eq.s32.totalorder %s25, 1
      %p85 = por %p83, %p84
      %p86 = scmp.ne.s32.totalorder %s77, %s78
      %p87 = scmp.eq.s32.totalorder %s25, 0
      %p88 = por %p86, %p87
      %p89 = scmp.ne.s32.totalorder %s77, %s78
      %p90 = scmp.eq.s32.totalorder %s26, 1
      %p91 = por %p89, %p90
      %p93 = scmp.ne.s32.totalorder %s78, %s92
      %p94 = scmp.eq.s32.totalorder %s26, 0
      %p95 = por %p93, %p94
      %s97 = sadd.s32 %s96, 1
      %p100 = scmp.eq.s32.totalorder %s20, 1
      %p101 = scmp.ne.s32.totalorder %s96, %s98
      %p102 = scmp.eq.s32.totalorder %s20, 0
      %p103 = por %p101, %p102
      %p104 = scmp.ne.s32.totalorder %s96, %s98
      %p105 = scmp.eq.s32.totalorder %s25, 1
      %p106 = por %p104, %p105
      %p107 = scmp.ne.s32.totalorder %s98, %s99
      %p108 = scmp.eq.s32.totalorder %s25, 0
      %p109 = por %p107, %p108
      %p110 = scmp.ne.s32.totalorder %s98, %s99
      %p111 = scmp.eq.s32.totalorder %s26, 1
      %p112 = por %p110, %p111
      %p114 = scmp.ne.s32.totalorder %s99, %s113
      %p115 = scmp.eq.s32.totalorder %s26, 0
      %p116 = por %p114, %p115
      %s118 = sadd.s32 %s117, 1
      %p121 = scmp.eq.s32.totalorder %s20, 1
      %p122 = scmp.ne.s32.totalorder %s117, %s119
      %p123 = scmp.eq.s32.totalorder %s20, 0
      %p124 = por %p122, %p123
      %p125 = scmp.ne.s32.totalorder %s117, %s119
      %p126 = scmp.eq.s32.totalorder %s25, 1
      %p127 = por %p125, %p126
      %p128 = scmp.ne.s32.totalorder %s119, %s120
      %p129 = scmp.eq.s32.totalorder %s25, 0
      %p130 = por %p128, %p129
      %p131 = scmp.ne.s32.totalorder %s119, %s120
      %p132 = scmp.eq.s32.totalorder %s26, 1
      %p133 = por %p131, %p132
      %p135 = scmp.ne.s32.totalorder %s120, %s134
      %p136 = scmp.eq.s32.totalorder %s26, 0
      %p137 = por %p135, %p136
      %s139 = sadd.s32 %s138, 1
      %p142 = scmp.eq.s32.totalorder %s20, 1
      %p143 = scmp.ne.s32.totalorder %s138, %s140
      %p144 = scmp.eq.s32.totalorder %s20, 0
      %p145 = por %p143, %p144
      %p146 = scmp.ne.s32.totalorder %s138, %s140
      %p147 = scmp.eq.s32.totalorder %s25, 1
      %p148 = por %p146, %p147
      %p149 = scmp.ne.s32.totalorder %s140, %s141
      %p150 = scmp.eq.s32.totalorder %s25, 0
      %p151 = por %p149, %p150
      %p152 = scmp.ne.s32.totalorder %s140, %s141
      %p153 = scmp.eq.s32.totalorder %s26, 1
      %p154 = por %p152, %p153
      %p156 = scmp.ne.s32.totalorder %s141, %s155
      %p157 = scmp.eq.s32.totalorder %s26, 0
      %p158 = por %p156, %p157
      %s159 = ssub.s32 %s20, %s27
      %p160 = scmp.eq.s32.totalorder %s159, 0
      %s162 = sadd.s32 %s161, 1
      %s163 = scalar_select %p160, %s161, %s162
      %p166 = pneg %p160
      %p167 = scmp.eq.s32.totalorder %s20, 1
      %p168 = por %p166, %p167
      %p169 = scmp.ne.s32.totalorder %s161, %s164
      %p170 = scmp.eq.s32.totalorder %s20, 0
      %p171 = por %p169, %p170
      %p172 = scmp.ne.s32.totalorder %s161, %s164
      %p173 = scmp.eq.s32.totalorder %s25, 1
      %p174 = por %p172, %p173
      %p175 = scmp.ne.s32.totalorder %s164, %s165
      %p176 = scmp.eq.s32.totalorder %s25, 0
      %p177 = por %p175, %p176
      %p178 = scmp.ne.s32.totalorder %s164, %s165
      %p179 = scmp.eq.s32.totalorder %s26, 1
      %p180 = por %p178, %p179
      %p182 = scmp.ne.s32.totalorder %s165, %s181
      %p183 = scmp.eq.s32.totalorder %s26, 0
      %p184 = por %p182, %p183
      %p185 = scmp.le.s32.totalorder 1, %s20
      %p186 = scmp.lt.s32.totalorder %s20, 3
      %p187 = pnand %p185, %p186
      %p188 = pneg %p187
      // Predicated region
      $region9: #{tpu_custom_call.1} parent=5 // pred_check
        _
      $region10: #{tpu_custom_call.1} parent=5 // pred_check_branch
        %190 = sbr.rel (%p187) target = $region12
      $region11: #{tpu_custom_call.1} parent=5 // pred_region
        %s191 = ssub.s32 %s20, 1
        // Predicated region
        $region13: #{tpu_custom_call.1} parent=11 // pred_check
          %p192 = pneg %p67
        $region14: #{tpu_custom_call.1} parent=11 // pred_check_branch
          %194 = sbr.rel (%p192) target = $region16
        $region15: #{tpu_custom_call.1} parent=11 // pred_region
          %s196 = ssub.s32 256, 256
          %197 = vsyncadd [#allocation6], %s196
          %s198 = sshll.u32 [#allocation5], 4
          %s199 = int_to_ptr.vmem [resolvable:$true] %s198
          %204 = dma.hbm_to_vmem [thread:$0]  %s1, 256, %s199, [#allocation6], 128, 128, 8
        $region16: #{tpu_custom_call.1} parent=11 // pred_fallthru
          _
        // Predicated region
        $region17: #{tpu_custom_call.1} parent=11 // pred_check
          %p205 = pneg %p88
        $region18: #{tpu_custom_call.1} parent=11 // pred_check_branch
          %207 = sbr.rel (%p205) target = $region20
        $region19: #{tpu_custom_call.1} parent=11 // pred_region
          %s209 = ssub.s32 512, 512
          %210 = vsyncadd [#allocation6], %s209
          %s211 = sshll.u32 [#allocation7], 4
          %s212 = int_to_ptr.vmem [resolvable:$true] %s211
          %217 = dma.hbm_to_vmem [thread:$0]  %s2, 512, %s212, [#allocation6], 128, 128, 8
        $region20: #{tpu_custom_call.1} parent=11 // pred_fallthru
          _
        // Predicated region
        $region21: #{tpu_custom_call.1} parent=11 // pred_check
          %p218 = pneg %p109
        $region22: #{tpu_custom_call.1} parent=11 // pred_check_branch
          %220 = sbr.rel (%p218) target = $region24
        $region23: #{tpu_custom_call.1} parent=11 // pred_region
          _
        $region24: #{tpu_custom_call.1} parent=11 // pred_fallthru
          _
        // Predicated region
        $region25: #{tpu_custom_call.1} parent=11 // pred_check
          %p221 = pneg %p130
        $region26: #{tpu_custom_call.1} parent=11 // pred_check_branch
          %223 = sbr.rel (%p221) target = $region28
        $region27: #{tpu_custom_call.1} parent=11 // pred_region
          %s225 = ssub.s32 512, 512
          %226 = vsyncadd [#allocation9], %s225
          %s227 = sshll.u32 [#allocation8], 4
          %s228 = int_to_ptr.vmem [resolvable:$true] %s227
          %233 = dma.hbm_to_vmem [thread:$0]  %s4, 512, %s228, [#allocation9], 128, 128, 8
        $region28: #{tpu_custom_call.1} parent=11 // pred_fallthru
          _
        // Predicated region
        $region29: #{tpu_custom_call.1} parent=11 // pred_check
          %p234 = pneg %p151
        $region30: #{tpu_custom_call.1} parent=11 // pred_check_branch
          %236 = sbr.rel (%p234) target = $region32
        $region31: #{tpu_custom_call.1} parent=11 // pred_region
          _
        $region32: #{tpu_custom_call.1} parent=11 // pred_fallthru
          _
      $region12: #{tpu_custom_call.1} parent=5 // pred_fallthru
        _
      %p237 = scmp.lt.s32.totalorder %s20, 2
      // Predicated region
      $region33: #{tpu_custom_call.1} parent=5 // pred_check
        %p238 = pneg %p237
      $region34: #{tpu_custom_call.1} parent=5 // pred_check_branch
        %240 = sbr.rel (%p238) target = $region36
      $region35: #{tpu_custom_call.1} parent=5 // pred_region
        // Predicated region
        $region37: #{tpu_custom_call.1} parent=35 // pred_check
          %p241 = pneg %p40
        $region38: #{tpu_custom_call.1} parent=35 // pred_check_branch
          %243 = sbr.rel (%p241) target = $region40
        $region39: #{tpu_custom_call.1} parent=35 // pred_region
          %s244 = sand.u32 %s30, 1
          %s245 = scalar_lea.sflag [#allocation3], %s244
          %s246 = sand.u32 %s30, 1
          %s247 = smul.addr %s246, 64
          %s248 = scalar_lea.vmem [#allocation2], %s247
          %s249 = smul.u32 4, %s20
          %s251 = ssub.s32 1024, 1024
          %252 = vsyncadd %s245, %s251
          %s253 = smul.addr %s249, 2
          %s254 = smul.addr %s253, 128
          %s255 = scalar_lea.hbm %s0, %s254
          %s256 = sshll.u32 %s248, 4
          %s257 = int_to_ptr.vmem [resolvable:$true] %s256
          %262 = dma.hbm_to_vmem [thread:$0]  %s255, 1024, %s257, %s245, 128, 128, 8
        $region40: #{tpu_custom_call.1} parent=35 // pred_fallthru
          _
      $region36: #{tpu_custom_call.1} parent=5 // pred_fallthru
        _
      %p263 = scmp.le.s32.totalorder 1, %s20
      %p264 = scmp.lt.s32.totalorder %s20, 3
      %p265 = pnand %p263, %p264
      %p266 = pneg %p265
      // Predicated region
      $region41: #{tpu_custom_call.1} parent=5 // pred_check
        _
      $region42: #{tpu_custom_call.1} parent=5 // pred_check_branch
        %268 = sbr.rel (%p265) target = $region44
      $region43: #{tpu_custom_call.1} parent=5 // pred_region
        %s269 = ssub.s32 %s20, 1
        %s270 = sand.u32 %s33, 1
        %s271 = scalar_lea.sflag [#allocation3], %s270
        %s272 = sand.u32 %s33, 1
        %s273 = smul.addr %s272, 64
        %s274 = scalar_lea.vmem [#allocation2], %s273
        // Predicated region
        $region45: #{tpu_custom_call.1} parent=43 // pred_check
          %p275 = pneg %p46
        $region46: #{tpu_custom_call.1} parent=43 // pred_check_branch
          %277 = sbr.rel (%p275) target = $region48
        $region47: #{tpu_custom_call.1} parent=43 // pred_region
          %278 = dma.done %s271, 1024
        $region48: #{tpu_custom_call.1} parent=43 // pred_fallthru
          _
        // Predicated region
        $region49: #{tpu_custom_call.1} parent=43 // pred_check
          %p279 = pneg %p67
        $region50: #{tpu_custom_call.1} parent=43 // pred_check_branch
          %281 = sbr.rel (%p279) target = $region52
        $region51: #{tpu_custom_call.1} parent=43 // pred_region
          %282 = dma.done [#allocation6], 256
        $region52: #{tpu_custom_call.1} parent=43 // pred_fallthru
          _
        // Predicated region
        $region53: #{tpu_custom_call.1} parent=43 // pred_check
          %p283 = pneg %p88
        $region54: #{tpu_custom_call.1} parent=43 // pred_check_branch
          %285 = sbr.rel (%p283) target = $region56
        $region55: #{tpu_custom_call.1} parent=43 // pred_region
          %286 = dma.done [#allocation6], 512
        $region56: #{tpu_custom_call.1} parent=43 // pred_fallthru
          _
        // Predicated region
        $region57: #{tpu_custom_call.1} parent=43 // pred_check
          %p287 = pneg %p130
        $region58: #{tpu_custom_call.1} parent=43 // pred_check_branch
          %289 = sbr.rel (%p287) target = $region60
        $region59: #{tpu_custom_call.1} parent=43 // pred_region
          %290 = dma.done [#allocation9], 512
        $region60: #{tpu_custom_call.1} parent=43 // pred_fallthru
          _
        %s291 = sand.u32 %s33, 1
        %s292 = scalar_lea.sflag [#allocation3], %s291
        %s293 = sand.u32 %s33, 1
        %s294 = smul.addr %s293, 64
        %s295 = scalar_lea.vmem [#allocation2], %s294
        %p296 = pneg %p46
        %p297 = pneg %p43
        %p298 = pneg %p67
        %p299 = pneg %p64
        %p300 = pneg %p88
        %p301 = pneg %p85
        %p302 = pneg %p109
        %p303 = pneg %p106
        %p304 = pneg %p130
        %p305 = pneg %p127
        %p306 = pneg %p151
        %p307 = pneg %p148
        %p308 = pneg %p177
        %p309 = pneg %p174
        %s310 = sand.u32 %s164, 1
        %s311 = scalar_lea.sflag [#allocation4], %s310
        %s312 = sand.u32 %s164, 1
        %s313 = smul.addr %s312, 64
        %s314 = scalar_lea.vmem [#allocation10], %s313
        %s315 = smul.u32 4, %s25
        %s316 = smul.u32 4, %s25
        %v317 = vld [vmem:[%s274] sm:$0xff]
        %v318 = vld [vmem:[%s274 + $0x8] sm:$0xff]
        %v319 = vld [vmem:[%s274 + $0x10] sm:$0xff]
        %v320 = vld [vmem:[%s274 + $0x18] sm:$0xff]
        %v321 = vld [vmem:[%s274 + $0x20] sm:$0xff]
        %v322 = vld [vmem:[%s274 + $0x28] sm:$0xff]
        %v323 = vld [vmem:[%s274 + $0x30] sm:$0xff]
        %v324 = vld [vmem:[%s274 + $0x38] sm:$0xff]
        %v325 = vld [vmem:[#allocation5] sm:$0xff]
        %v326 = vld [vmem:[#allocation5 + $0x8] sm:$0xff]
        %v327 = vadd.f32 %v317, %v325
        %v328 = vadd.f32 %v318, %v326
        %v329 = vadd.f32 %v319, %v325
        %v330 = vadd.f32 %v320, %v326
        %v331 = vadd.f32 %v321, %v325
        %v332 = vadd.f32 %v322, %v326
        %v333 = vadd.f32 %v323, %v325
        %v334 = vadd.f32 %v324, %v326
        %v335 = vld [vmem:[#allocation7] sm:$0xff]
        %v336 = vld [vmem:[#allocation7 + $0x8] sm:$0xff]
        %v337 = vld [vmem:[#allocation7 + $0x10] sm:$0xff]
        %v338 = vld [vmem:[#allocation7 + $0x18] sm:$0xff]
        %v339 = vld [vmem:[%s3] sm:$0x1]
        %v341 = vlaneseq
        %v342 = vshrl.u32 %v341, 7
        %v343 = vsub.s32 0, %v342
        %v344 = vrot.slane %v339, %v343
        %vm346 = vcmask 261120
        %v348 = vsel %vm346, %v327, 0
        %v351 = vsel %vm346, %v328, 0
        %v354 = vsel %vm346, %v329, 0
        %v357 = vsel %vm346, %v330, 0
        %v360 = vsel %vm346, %v331, 0
        %v363 = vsel %vm346, %v332, 0
        %v366 = vsel %vm346, %v333, 0
        %v369 = vsel %vm346, %v334, 0
        %371 = vmatprep.subr.mxu0 0.0
        %372 = vmatpush1.msra.mxu0 %v335
        %373 = vmatprep.subr.mxu0 0.0
        %374 = vmatpush1.msra.mxu0 %v336
        %375 = vmatprep.subr.mxu0 0.0
        %376 = vmatpush1.msra.mxu0 %v337
        %377 = vmatprep.subr.mxu0 0.0
        %378 = vmatpush1.msra.mxu0 %v338
        %379 = vmatprep.subr.mxu0 0.0
        %380 = vmatpush1.msra.mxu0 0.0
        %381 = vmatprep.subr.mxu0 0.0
        %382 = vmatpush1.msra.mxu0 0.0
        %383 = vmatprep.subr.mxu0 0.0
        %384 = vmatpush1.msra.mxu0 0.0
        %385 = vmatprep.subr.mxu0 0.0
        %386 = vmatpush1.msra.mxu0 0.0
        %387 = vmatprep.subr.mxu0 0.0
        %388 = vmatpush1.msra.mxu0 0.0
        %389 = vmatprep.subr.mxu0 0.0
        %390 = vmatpush1.msra.mxu0 0.0
        %391 = vmatprep.subr.mxu0 0.0
        %392 = vmatpush1.msra.mxu0 0.0
        %393 = vmatprep.subr.mxu0 0.0
        %394 = vmatpush1.msra.mxu0 0.0
        %395 = vmatprep.subr.mxu0 0.0
        %396 = vmatpush1.msra.mxu0 0.0
        %397 = vmatprep.subr.mxu0 0.0
        %398 = vmatpush1.msra.mxu0 0.0
        %399 = vmatprep.subr.mxu0 0.0
        %400 = vmatpush1.msra.mxu0 0.0
        %401 = vmatprep.subr.mxu0 0.0
        %402 = vmatpush1.msra.mxu0 0.0
        %403 = vmatprep.subr.mxu0 0.0
        %404 = vmatpush1.msra.mxu0 0.0
        %405 = vmatprep.subr.mxu0 0.0
        %406 = vmatpush1.msra.mxu0 0.0
        %407 = vmatprep.subr.mxu0 0.0
        %408 = vmatpush1.msra.mxu0 0.0
        %409 = vmatprep.subr.mxu0 0.0
        %410 = vmatpush1.msra.mxu0 0.0
        %411 = vmatprep.subr.mxu0 0.0
        %412 = vmatpush1.msra.mxu0 0.0
        %413 = vmatprep.subr.mxu0 0.0
        %414 = vmatpush1.msra.mxu0 0.0
        %415 = vmatprep.subr.mxu0 0.0
        %416 = vmatpush1.msra.mxu0 0.0
        %417 = vmatprep.subr.mxu0 0.0
        %418 = vmatpush1.msra.mxu0 0.0
        %419 = vmatprep.subr.mxu0 0.0
        %420 = vmatpush1.msra.mxu0 0.0
        %421 = vmatprep.subr.mxu0 0.0
        %422 = vmatpush1.msra.mxu0 0.0
        %423 = vmatprep.subr.mxu0 0.0
        %424 = vmatpush1.msra.mxu0 0.0
        %425 = vmatprep.subr.mxu0 0.0
        %426 = vmatpush1.msra.mxu0 0.0
        %427 = vmatprep.subr.mxu0 0.0
        %428 = vmatpush1.msra.mxu0 0.0
        %429 = vmatprep.subr.mxu0 0.0
        %430 = vmatpush1.msra.mxu0 0.0
        %431 = vmatprep.subr.mxu0 0.0
        %432 = vmatpush1.msra.mxu0 0.0
        %433 = vmatprep.subr.mxu0 0.0
        %434 = vmatpush1.msra.mxu0 0.0
        %435 = vmatprep.mubr.f32.mxu0 0.0
        %436 = vmatmul.mubr.f32.gmra.mrb[0].mxu0 %v348
        %v437 = vpop.f32.mrb[0].mxu0
        %v438 = vadd.f32 %v344, %v437
        %v439 = vpop.f32.mrb[0].mxu0
        %440 = vmatprep.mubr.f32.mxu0 0.0
        %441 = vmatmul.mubr.f32.gmra.mrb[0].mxu0 %v351
        %v442 = vpop.f32.mrb[0].mxu0
        %v443 = vadd.f32 %v344, %v442
        %v444 = vpop.f32.mrb[0].mxu0
        %445 = vmatprep.mubr.f32.mxu0 0.0
        %446 = vmatmul.mubr.f32.gmra.mrb[0].mxu0 %v354
        %v447 = vpop.f32.mrb[0].mxu0
        %v448 = vadd.f32 %v344, %v447
        %v449 = vpop.f32.mrb[0].mxu0
        %450 = vmatprep.mubr.f32.mxu0 0.0
        %451 = vmatmul.mubr.f32.gmra.mrb[0].mxu0 %v357
        %v452 = vpop.f32.mrb[0].mxu0
        %v453 = vadd.f32 %v344, %v452
        %v454 = vpop.f32.mrb[0].mxu0
        %455 = vmatprep.mubr.f32.mxu0 0.0
        %456 = vmatmul.mubr.f32.gmra.mrb[0].mxu0 %v360
        %v457 = vpop.f32.mrb[0].mxu0
        %v458 = vadd.f32 %v344, %v457
        %v459 = vpop.f32.mrb[0].mxu0
        %460 = vmatprep.mubr.f32.mxu0 0.0
        %461 = vmatmul.mubr.f32.gmra.mrb[0].mxu0 %v363
        %v462 = vpop.f32.mrb[0].mxu0
        %v463 = vadd.f32 %v344, %v462
        %v464 = vpop.f32.mrb[0].mxu0
        %465 = vmatprep.mubr.f32.mxu0 0.0
        %466 = vmatmul.mubr.f32.gmra.mrb[0].mxu0 %v366
        %v467 = vpop.f32.mrb[0].mxu0
        %v468 = vadd.f32 %v344, %v467
        %v469 = vpop.f32.mrb[0].mxu0
        %470 = vmatprep.mubr.f32.mxu0 0.0
        %471 = vmatmul.mubr.f32.gmra.mrb[0].mxu0 %v369
        %v472 = vpop.f32.mrb[0].mxu0
        %v473 = vadd.f32 %v344, %v472
        %v474 = vpop.f32.mrb[0].mxu0
        %475 = vdwg.mxu0
        %478 = vrot.lane.b32.xlu0 %v438, 96
        %v479 = vpop.permute.xlu0 %478
        %480 = vrot.lane.b32.xlu0 %v443, 96
        %v481 = vpop.permute.xlu0 %480
        %vm482 = vcmask 64512
        %v483 = vsel %vm482, %v438, 0
        %v485 = vsel %vm482, %v443, 0
        %v487 = vsel %vm482, %v479, 0
        %v489 = vsel %vm482, %v481, 0
        %491 = vmatprep.subr.mxu0 0.0
        %492 = vmatpush1.xpose.msra.mxu0 %v487
        %493 = vmatprep.subr.mxu0 0.0
        %494 = vmatpush1.xpose.msra.mxu0 %v489
        %495 = vmatprep.subr.mxu0 0.0
        %496 = vmatpush1.xpose.msra.mxu0 0.0
        %497 = vmatprep.subr.mxu0 0.0
        %498 = vmatpush1.xpose.msra.mxu0 0.0
        %499 = vmatprep.subr.mxu0 0.0
        %500 = vmatpush1.xpose.msra.mxu0 0.0
        %501 = vmatprep.subr.mxu0 0.0
        %502 = vmatpush1.xpose.msra.mxu0 0.0
        %503 = vmatprep.subr.mxu0 0.0
        %504 = vmatpush1.xpose.msra.mxu0 0.0
        %505 = vmatprep.subr.mxu0 0.0
        %506 = vmatpush1.xpose.msra.mxu0 0.0
        %507 = vmatprep.subr.mxu0 0.0
        %508 = vmatpush1.xpose.msra.mxu0 0.0
        %509 = vmatprep.subr.mxu0 0.0
        %510 = vmatpush1.xpose.msra.mxu0 0.0
        %511 = vmatprep.subr.mxu0 0.0
        %512 = vmatpush1.xpose.msra.mxu0 0.0
        %513 = vmatprep.subr.mxu0 0.0
        %514 = vmatpush1.xpose.msra.mxu0 0.0
        %515 = vmatprep.subr.mxu0 0.0
        %516 = vmatpush1.xpose.msra.mxu0 0.0
        %517 = vmatprep.subr.mxu0 0.0
        %518 = vmatpush1.xpose.msra.mxu0 0.0
        %519 = vmatprep.subr.mxu0 0.0
        %520 = vmatpush1.xpose.msra.mxu0 0.0
        %521 = vmatprep.subr.mxu0 0.0
        %522 = vmatpush1.xpose.msra.mxu0 0.0
        %523 = vmatprep.subr.mxu0 0.0
        %524 = vmatpush1.xpose.msra.mxu0 0.0
        %525 = vmatprep.subr.mxu0 0.0
        %526 = vmatpush1.xpose.msra.mxu0 0.0
        %527 = vmatprep.subr.mxu0 0.0
        %528 = vmatpush1.xpose.msra.mxu0 0.0
        %529 = vmatprep.subr.mxu0 0.0
        %530 = vmatpush1.xpose.msra.mxu0 0.0
        %531 = vmatprep.subr.mxu0 0.0
        %532 = vmatpush1.xpose.msra.mxu0 0.0
        %533 = vmatprep.subr.mxu0 0.0
        %534 = vmatpush1.xpose.msra.mxu0 0.0
        %535 = vmatprep.subr.mxu0 0.0
        %536 = vmatpush1.xpose.msra.mxu0 0.0
        %537 = vmatprep.subr.mxu0 0.0
        %538 = vmatpush1.xpose.msra.mxu0 0.0
        %539 = vmatprep.subr.mxu0 0.0
        %540 = vmatpush1.xpose.msra.mxu0 0.0
        %541 = vmatprep.subr.mxu0 0.0
        %542 = vmatpush1.xpose.msra.mxu0 0.0
        %543 = vmatprep.subr.mxu0 0.0
        %544 = vmatpush1.xpose.msra.mxu0 0.0
        %545 = vmatprep.subr.mxu0 0.0
        %546 = vmatpush1.xpose.msra.mxu0 0.0
        %547 = vmatprep.subr.mxu0 0.0
        %548 = vmatpush1.xpose.msra.mxu0 0.0
        %549 = vmatprep.subr.mxu0 0.0
        %550 = vmatpush1.xpose.msra.mxu0 0.0
        %551 = vmatprep.subr.mxu0 0.0
        %552 = vmatpush1.xpose.msra.mxu0 0.0
        %553 = vmatprep.subr.mxu0 0.0
        %554 = vmatpush1.xpose.msra.mxu0 0.0
        %555 = vmatprep.mubr.f32.mxu0 0.0
        %556 = vmatmul.mubr.f32.gmra.mrb[0].mxu0 %v483
        %v557 = vpop.f32.mrb[0].mxu0
        %v558 = vadd.f32 0.0, %v557
        %v559 = vpop.f32.mrb[0].mxu0
        %560 = vmatprep.mubr.f32.mxu0 0.0
        %561 = vmatmul.mubr.f32.gmra.mrb[0].mxu0 %v485
        %v562 = vpop.f32.mrb[0].mxu0
        %v563 = vadd.f32 0.0, %v562
        %v564 = vpop.f32.mrb[0].mxu0
        %565 = vdwg.mxu0
        %568 = vrot.lane.b32.xlu0 %v448, 96
        %v569 = vpop.permute.xlu0 %568
        %570 = vrot.lane.b32.xlu0 %v453, 96
        %v571 = vpop.permute.xlu0 %570
        %v572 = vsel %vm482, %v448, 0
        %v574 = vsel %vm482, %v453, 0
        %v576 = vsel %vm482, %v569, 0
        %v578 = vsel %vm482, %v571, 0
        %580 = vmatprep.subr.mxu0 0.0
        %581 = vmatpush1.xpose.msra.mxu0 %v576
        %582 = vmatprep.subr.mxu0 0.0
        %583 = vmatpush1.xpose.msra.mxu0 %v578
        %584 = vmatprep.subr.mxu0 0.0
        %585 = vmatpush1.xpose.msra.mxu0 0.0
        %586 = vmatprep.subr.mxu0 0.0
        %587 = vmatpush1.xpose.msra.mxu0 0.0
        %588 = vmatprep.subr.mxu0 0.0
        %589 = vmatpush1.xpose.msra.mxu0 0.0
        %590 = vmatprep.subr.mxu0 0.0
        %591 = vmatpush1.xpose.msra.mxu0 0.0
        %592 = vmatprep.subr.mxu0 0.0
        %593 = vmatpush1.xpose.msra.mxu0 0.0
        %594 = vmatprep.subr.mxu0 0.0
        %595 = vmatpush1.xpose.msra.mxu0 0.0
        %596 = vmatprep.subr.mxu0 0.0
        %597 = vmatpush1.xpose.msra.mxu0 0.0
        %598 = vmatprep.subr.mxu0 0.0
        %599 = vmatpush1.xpose.msra.mxu0 0.0
        %600 = vmatprep.subr.mxu0 0.0
        %601 = vmatpush1.xpose.msra.mxu0 0.0
        %602 = vmatprep.subr.mxu0 0.0
        %603 = vmatpush1.xpose.msra.mxu0 0.0
        %604 = vmatprep.subr.mxu0 0.0
        %605 = vmatpush1.xpose.msra.mxu0 0.0
        %606 = vmatprep.subr.mxu0 0.0
        %607 = vmatpush1.xpose.msra.mxu0 0.0
        %608 = vmatprep.subr.mxu0 0.0
        %609 = vmatpush1.xpose.msra.mxu0 0.0
        %610 = vmatprep.subr.mxu0 0.0
        %611 = vmatpush1.xpose.msra.mxu0 0.0
        %612 = vmatprep.subr.mxu0 0.0
        %613 = vmatpush1.xpose.msra.mxu0 0.0
        %614 = vmatprep.subr.mxu0 0.0
        %615 = vmatpush1.xpose.msra.mxu0 0.0
        %616 = vmatprep.subr.mxu0 0.0
        %617 = vmatpush1.xpose.msra.mxu0 0.0
        %618 = vmatprep.subr.mxu0 0.0
        %619 = vmatpush1.xpose.msra.mxu0 0.0
        %620 = vmatprep.subr.mxu0 0.0
        %621 = vmatpush1.xpose.msra.mxu0 0.0
        %622 = vmatprep.subr.mxu0 0.0
        %623 = vmatpush1.xpose.msra.mxu0 0.0
        %624 = vmatprep.subr.mxu0 0.0
        %625 = vmatpush1.xpose.msra.mxu0 0.0
        %626 = vmatprep.subr.mxu0 0.0
        %627 = vmatpush1.xpose.msra.mxu0 0.0
        %628 = vmatprep.subr.mxu0 0.0
        %629 = vmatpush1.xpose.msra.mxu0 0.0
        %630 = vmatprep.subr.mxu0 0.0
        %631 = vmatpush1.xpose.msra.mxu0 0.0
        %632 = vmatprep.subr.mxu0 0.0
        %633 = vmatpush1.xpose.msra.mxu0 0.0
        %634 = vmatprep.subr.mxu0 0.0
        %635 = vmatpush1.xpose.msra.mxu0 0.0
        %636 = vmatprep.subr.mxu0 0.0
        %637 = vmatpush1.xpose.msra.mxu0 0.0
        %638 = vmatprep.subr.mxu0 0.0
        %639 = vmatpush1.xpose.msra.mxu0 0.0
        %640 = vmatprep.subr.mxu0 0.0
        %641 = vmatpush1.xpose.msra.mxu0 0.0
        %642 = vmatprep.subr.mxu0 0.0
        %643 = vmatpush1.xpose.msra.mxu0 0.0
        %644 = vmatprep.mubr.f32.mxu0 0.0
        %645 = vmatmul.mubr.f32.gmra.mrb[0].mxu0 %v572
        %v646 = vpop.f32.mrb[0].mxu0
        %v647 = vadd.f32 0.0, %v646
        %v648 = vpop.f32.mrb[0].mxu0
        %649 = vmatprep.mubr.f32.mxu0 0.0
        %650 = vmatmul.mubr.f32.gmra.mrb[0].mxu0 %v574
        %v651 = vpop.f32.mrb[0].mxu0
        %v652 = vadd.f32 0.0, %v651
        %v653 = vpop.f32.mrb[0].mxu0
        %654 = vdwg.mxu0
        %657 = vrot.lane.b32.xlu0 %v458, 96
        %v658 = vpop.permute.xlu0 %657
        %659 = vrot.lane.b32.xlu0 %v463, 96
        %v660 = vpop.permute.xlu0 %659
        %v661 = vsel %vm482, %v458, 0
        %v663 = vsel %vm482, %v463, 0
        %v665 = vsel %vm482, %v658, 0
        %v667 = vsel %vm482, %v660, 0
        %669 = vmatprep.subr.mxu0 0.0
        %670 = vmatpush1.xpose.msra.mxu0 %v665
        %671 = vmatprep.subr.mxu0 0.0
        %672 = vmatpush1.xpose.msra.mxu0 %v667
        %673 = vmatprep.subr.mxu0 0.0
        %674 = vmatpush1.xpose.msra.mxu0 0.0
        %675 = vmatprep.subr.mxu0 0.0
        %676 = vmatpush1.xpose.msra.mxu0 0.0
        %677 = vmatprep.subr.mxu0 0.0
        %678 = vmatpush1.xpose.msra.mxu0 0.0
        %679 = vmatprep.subr.mxu0 0.0
        %680 = vmatpush1.xpose.msra.mxu0 0.0
        %681 = vmatprep.subr.mxu0 0.0
        %682 = vmatpush1.xpose.msra.mxu0 0.0
        %683 = vmatprep.subr.mxu0 0.0
        %684 = vmatpush1.xpose.msra.mxu0 0.0
        %685 = vmatprep.subr.mxu0 0.0
        %686 = vmatpush1.xpose.msra.mxu0 0.0
        %687 = vmatprep.subr.mxu0 0.0
        %688 = vmatpush1.xpose.msra.mxu0 0.0
        %689 = vmatprep.subr.mxu0 0.0
        %690 = vmatpush1.xpose.msra.mxu0 0.0
        %691 = vmatprep.subr.mxu0 0.0
        %692 = vmatpush1.xpose.msra.mxu0 0.0
        %693 = vmatprep.subr.mxu0 0.0
        %694 = vmatpush1.xpose.msra.mxu0 0.0
        %695 = vmatprep.subr.mxu0 0.0
        %696 = vmatpush1.xpose.msra.mxu0 0.0
        %697 = vmatprep.subr.mxu0 0.0
        %698 = vmatpush1.xpose.msra.mxu0 0.0
        %699 = vmatprep.subr.mxu0 0.0
        %700 = vmatpush1.xpose.msra.mxu0 0.0
        %701 = vmatprep.subr.mxu0 0.0
        %702 = vmatpush1.xpose.msra.mxu0 0.0
        %703 = vmatprep.subr.mxu0 0.0
        %704 = vmatpush1.xpose.msra.mxu0 0.0
        %705 = vmatprep.subr.mxu0 0.0
        %706 = vmatpush1.xpose.msra.mxu0 0.0
        %707 = vmatprep.subr.mxu0 0.0
        %708 = vmatpush1.xpose.msra.mxu0 0.0
        %709 = vmatprep.subr.mxu0 0.0
        %710 = vmatpush1.xpose.msra.mxu0 0.0
        %711 = vmatprep.subr.mxu0 0.0
        %712 = vmatpush1.xpose.msra.mxu0 0.0
        %713 = vmatprep.subr.mxu0 0.0
        %714 = vmatpush1.xpose.msra.mxu0 0.0
        %715 = vmatprep.subr.mxu0 0.0
        %716 = vmatpush1.xpose.msra.mxu0 0.0
        %717 = vmatprep.subr.mxu0 0.0
        %718 = vmatpush1.xpose.msra.mxu0 0.0
        %719 = vmatprep.subr.mxu0 0.0
        %720 = vmatpush1.xpose.msra.mxu0 0.0
        %721 = vmatprep.subr.mxu0 0.0
        %722 = vmatpush1.xpose.msra.mxu0 0.0
        %723 = vmatprep.subr.mxu0 0.0
        %724 = vmatpush1.xpose.msra.mxu0 0.0
        %725 = vmatprep.subr.mxu0 0.0
        %726 = vmatpush1.xpose.msra.mxu0 0.0
        %727 = vmatprep.subr.mxu0 0.0
        %728 = vmatpush1.xpose.msra.mxu0 0.0
        %729 = vmatprep.subr.mxu0 0.0
        %730 = vmatpush1.xpose.msra.mxu0 0.0
        %731 = vmatprep.subr.mxu0 0.0
        %732 = vmatpush1.xpose.msra.mxu0 0.0
        %733 = vmatprep.mubr.f32.mxu0 0.0
        %734 = vmatmul.mubr.f32.gmra.mrb[0].mxu0 %v661
        %v735 = vpop.f32.mrb[0].mxu0
        %v736 = vadd.f32 0.0, %v735
        %v737 = vpop.f32.mrb[0].mxu0
        %738 = vmatprep.mubr.f32.mxu0 0.0
        %739 = vmatmul.mubr.f32.gmra.mrb[0].mxu0 %v663
        %v740 = vpop.f32.mrb[0].mxu0
        %v741 = vadd.f32 0.0, %v740
        %v742 = vpop.f32.mrb[0].mxu0
        %743 = vdwg.mxu0
        %746 = vrot.lane.b32.xlu0 %v468, 96
        %v747 = vpop.permute.xlu0 %746
        %748 = vrot.lane.b32.xlu0 %v473, 96
        %v749 = vpop.permute.xlu0 %748
        %v750 = vsel %vm482, %v468, 0
        %v752 = vsel %vm482, %v473, 0
        %v754 = vsel %vm482, %v747, 0
        %v756 = vsel %vm482, %v749, 0
        %758 = vmatprep.subr.mxu0 0.0
        %759 = vmatpush1.xpose.msra.mxu0 %v754
        %760 = vmatprep.subr.mxu0 0.0
        %761 = vmatpush1.xpose.msra.mxu0 %v756
        %762 = vmatprep.subr.mxu0 0.0
        %763 = vmatpush1.xpose.msra.mxu0 0.0
        %764 = vmatprep.subr.mxu0 0.0
        %765 = vmatpush1.xpose.msra.mxu0 0.0
        %766 = vmatprep.subr.mxu0 0.0
        %767 = vmatpush1.xpose.msra.mxu0 0.0
        %768 = vmatprep.subr.mxu0 0.0
        %769 = vmatpush1.xpose.msra.mxu0 0.0
        %770 = vmatprep.subr.mxu0 0.0
        %771 = vmatpush1.xpose.msra.mxu0 0.0
        %772 = vmatprep.subr.mxu0 0.0
        %773 = vmatpush1.xpose.msra.mxu0 0.0
        %774 = vmatprep.subr.mxu0 0.0
        %775 = vmatpush1.xpose.msra.mxu0 0.0
        %776 = vmatprep.subr.mxu0 0.0
        %777 = vmatpush1.xpose.msra.mxu0 0.0
        %778 = vmatprep.subr.mxu0 0.0
        %779 = vmatpush1.xpose.msra.mxu0 0.0
        %780 = vmatprep.subr.mxu0 0.0
        %781 = vmatpush1.xpose.msra.mxu0 0.0
        %782 = vmatprep.subr.mxu0 0.0
        %783 = vmatpush1.xpose.msra.mxu0 0.0
        %784 = vmatprep.subr.mxu0 0.0
        %785 = vmatpush1.xpose.msra.mxu0 0.0
        %786 = vmatprep.subr.mxu0 0.0
        %787 = vmatpush1.xpose.msra.mxu0 0.0
        %788 = vmatprep.subr.mxu0 0.0
        %789 = vmatpush1.xpose.msra.mxu0 0.0
        %790 = vmatprep.subr.mxu0 0.0
        %791 = vmatpush1.xpose.msra.mxu0 0.0
        %792 = vmatprep.subr.mxu0 0.0
        %793 = vmatpush1.xpose.msra.mxu0 0.0
        %794 = vmatprep.subr.mxu0 0.0
        %795 = vmatpush1.xpose.msra.mxu0 0.0
        %796 = vmatprep.subr.mxu0 0.0
        %797 = vmatpush1.xpose.msra.mxu0 0.0
        %798 = vmatprep.subr.mxu0 0.0
        %799 = vmatpush1.xpose.msra.mxu0 0.0
        %800 = vmatprep.subr.mxu0 0.0
        %801 = vmatpush1.xpose.msra.mxu0 0.0
        %802 = vmatprep.subr.mxu0 0.0
        %803 = vmatpush1.xpose.msra.mxu0 0.0
        %804 = vmatprep.subr.mxu0 0.0
        %805 = vmatpush1.xpose.msra.mxu0 0.0
        %806 = vmatprep.subr.mxu0 0.0
        %807 = vmatpush1.xpose.msra.mxu0 0.0
        %808 = vmatprep.subr.mxu0 0.0
        %809 = vmatpush1.xpose.msra.mxu0 0.0
        %810 = vmatprep.subr.mxu0 0.0
        %811 = vmatpush1.xpose.msra.mxu0 0.0
        %812 = vmatprep.subr.mxu0 0.0
        %813 = vmatpush1.xpose.msra.mxu0 0.0
        %814 = vmatprep.subr.mxu0 0.0
        %815 = vmatpush1.xpose.msra.mxu0 0.0
        %816 = vmatprep.subr.mxu0 0.0
        %817 = vmatpush1.xpose.msra.mxu0 0.0
        %818 = vmatprep.subr.mxu0 0.0
        %819 = vmatpush1.xpose.msra.mxu0 0.0
        %820 = vmatprep.subr.mxu0 0.0
        %821 = vmatpush1.xpose.msra.mxu0 0.0
        %822 = vmatprep.mubr.f32.mxu0 0.0
        %823 = vmatmul.mubr.f32.gmra.mrb[0].mxu0 %v750
        %v824 = vpop.f32.mrb[0].mxu0
        %v825 = vadd.f32 0.0, %v824
        %v826 = vpop.f32.mrb[0].mxu0
        %827 = vmatprep.mubr.f32.mxu0 0.0
        %828 = vmatmul.mubr.f32.gmra.mrb[0].mxu0 %v752
        %v829 = vpop.f32.mrb[0].mxu0
        %v830 = vadd.f32 0.0, %v829
        %v831 = vpop.f32.mrb[0].mxu0
        %832 = vdwg.mxu0
        %vm833 = vcmask 130048
        %v834 = vsel %vm833, %v558, -inf
        %835 = vmax.xlane.f32.xlu0 %v834
        %v836 = vpop.xlane.xlu0 %835
        %v837 = vsel %vm833, %v563, -inf
        %838 = vmax.xlane.f32.xlu0 %v837
        %v839 = vpop.xlane.xlu0 %838
        %v840 = vsel %vm833, %v647, -inf
        %841 = vmax.xlane.f32.xlu0 %v840
        %v842 = vpop.xlane.xlu0 %841
        %v843 = vsel %vm833, %v652, -inf
        %844 = vmax.xlane.f32.xlu0 %v843
        %v845 = vpop.xlane.xlu0 %844
        %v846 = vsel %vm833, %v736, -inf
        %847 = vmax.xlane.f32.xlu0 %v846
        %v848 = vpop.xlane.xlu0 %847
        %v849 = vsel %vm833, %v741, -inf
        %850 = vmax.xlane.f32.xlu0 %v849
        %v851 = vpop.xlane.xlu0 %850
        %v852 = vsel %vm833, %v825, -inf
        %853 = vmax.xlane.f32.xlu0 %v852
        %v854 = vpop.xlane.xlu0 %853
        %v855 = vsel %vm833, %v830, -inf
        %856 = vmax.xlane.f32.xlu0 %v855
        %v857 = vpop.xlane.xlu0 %856
        %v858 = vsub.f32 %v558, %v836
        %v859 = vsub.f32 %v563, %v839
        %v860 = vsub.f32 %v647, %v842
        %v861 = vsub.f32 %v652, %v845
        %v862 = vsub.f32 %v736, %v848
        %v863 = vsub.f32 %v741, %v851
        %v864 = vsub.f32 %v825, %v854
        %v865 = vsub.f32 %v830, %v857
        %v866 = vmul.f32 %v858, 1.442695
        %v867 = vpow.pop %v866
        %v868 = vmul.f32 %v859, 1.442695
        %v869 = vpow.pop %v868
        %v870 = vmul.f32 %v860, 1.442695
        %v871 = vpow.pop %v870
        %v872 = vmul.f32 %v861, 1.442695
        %v873 = vpow.pop %v872
        %v874 = vmul.f32 %v862, 1.442695
        %v875 = vpow.pop %v874
        %v876 = vmul.f32 %v863, 1.442695
        %v877 = vpow.pop %v876
        %v878 = vmul.f32 %v864, 1.442695
        %v879 = vpow.pop %v878
        %v880 = vmul.f32 %v865, 1.442695
        %v881 = vpow.pop %v880
        %v882 = vsel %vm833, %v867, 0.0
        %883 = vadd.xlane.f32.xlu0 %v882
        %v884 = vpop.xlane.xlu0 %883
        %v885 = vsel %vm833, %v869, 0.0
        %886 = vadd.xlane.f32.xlu0 %v885
        %v887 = vpop.xlane.xlu0 %886
        %v888 = vsel %vm833, %v871, 0.0
        %889 = vadd.xlane.f32.xlu0 %v888
        %v890 = vpop.xlane.xlu0 %889
        %v891 = vsel %vm833, %v873, 0.0
        %892 = vadd.xlane.f32.xlu0 %v891
        %v893 = vpop.xlane.xlu0 %892
        %v894 = vsel %vm833, %v875, 0.0
        %895 = vadd.xlane.f32.xlu0 %v894
        %v896 = vpop.xlane.xlu0 %895
        %v897 = vsel %vm833, %v877, 0.0
        %898 = vadd.xlane.f32.xlu0 %v897
        %v899 = vpop.xlane.xlu0 %898
        %v900 = vsel %vm833, %v879, 0.0
        %901 = vadd.xlane.f32.xlu0 %v900
        %v902 = vpop.xlane.xlu0 %901
        %v903 = vsel %vm833, %v881, 0.0
        %904 = vadd.xlane.f32.xlu0 %v903
        %v905 = vpop.xlane.xlu0 %904
        %v906 = vrcp.pop %v884
        %v907 = vrcp.pop %v887
        %v908 = vrcp.pop %v890
        %v909 = vrcp.pop %v893
        %v910 = vrcp.pop %v896
        %v911 = vrcp.pop %v899
        %v912 = vrcp.pop %v902
        %v913 = vrcp.pop %v905
        %v914 = vmul.f32 %v867, %v906
        %v915 = vmul.f32 %v869, %v907
        %v916 = vmul.f32 %v871, %v908
        %v917 = vmul.f32 %v873, %v909
        %v918 = vmul.f32 %v875, %v910
        %v919 = vmul.f32 %v877, %v911
        %v920 = vmul.f32 %v879, %v912
        %v921 = vmul.f32 %v881, %v913
        %922 = vrot.lane.b32.xlu0 %v438, 64
        %v923 = vpop.permute.xlu0 %922
        %924 = vrot.lane.b32.xlu0 %v443, 64
        %v925 = vpop.permute.xlu0 %924
        %v929 = vsel %vm833, %v914, 0
        %v932 = vsel %vm833, %v915, 0
        %934 = vmatprep.subr.mxu0 0.0
        %935 = vmatpush1.msra.mxu0 %v923
        %936 = vmatprep.subr.mxu0 0.0
        %937 = vmatpush1.msra.mxu0 %v925
        %938 = vmatprep.subr.mxu0 0.0
        %939 = vmatpush1.msra.mxu0 0.0
        %940 = vmatprep.subr.mxu0 0.0
        %941 = vmatpush1.msra.mxu0 0.0
        %942 = vmatprep.subr.mxu0 0.0
        %943 = vmatpush1.msra.mxu0 0.0
        %944 = vmatprep.subr.mxu0 0.0
        %945 = vmatpush1.msra.mxu0 0.0
        %946 = vmatprep.subr.mxu0 0.0
        %947 = vmatpush1.msra.mxu0 0.0
        %948 = vmatprep.subr.mxu0 0.0
        %949 = vmatpush1.msra.mxu0 0.0
        %950 = vmatprep.subr.mxu0 0.0
        %951 = vmatpush1.msra.mxu0 0.0
        %952 = vmatprep.subr.mxu0 0.0
        %953 = vmatpush1.msra.mxu0 0.0
        %954 = vmatprep.subr.mxu0 0.0
        %955 = vmatpush1.msra.mxu0 0.0
        %956 = vmatprep.subr.mxu0 0.0
        %957 = vmatpush1.msra.mxu0 0.0
        %958 = vmatprep.subr.mxu0 0.0
        %959 = vmatpush1.msra.mxu0 0.0
        %960 = vmatprep.subr.mxu0 0.0
        %961 = vmatpush1.msra.mxu0 0.0
        %962 = vmatprep.subr.mxu0 0.0
        %963 = vmatpush1.msra.mxu0 0.0
        %964 = vmatprep.subr.mxu0 0.0
        %965 = vmatpush1.msra.mxu0 0.0
        %966 = vmatprep.subr.mxu0 0.0
        %967 = vmatpush1.msra.mxu0 0.0
        %968 = vmatprep.subr.mxu0 0.0
        %969 = vmatpush1.msra.mxu0 0.0
        %970 = vmatprep.subr.mxu0 0.0
        %971 = vmatpush1.msra.mxu0 0.0
        %972 = vmatprep.subr.mxu0 0.0
        %973 = vmatpush1.msra.mxu0 0.0
        %974 = vmatprep.subr.mxu0 0.0
        %975 = vmatpush1.msra.mxu0 0.0
        %976 = vmatprep.subr.mxu0 0.0
        %977 = vmatpush1.msra.mxu0 0.0
        %978 = vmatprep.subr.mxu0 0.0
        %979 = vmatpush1.msra.mxu0 0.0
        %980 = vmatprep.subr.mxu0 0.0
        %981 = vmatpush1.msra.mxu0 0.0
        %982 = vmatprep.subr.mxu0 0.0
        %983 = vmatpush1.msra.mxu0 0.0
        %984 = vmatprep.subr.mxu0 0.0
        %985 = vmatpush1.msra.mxu0 0.0
        %986 = vmatprep.subr.mxu0 0.0
        %987 = vmatpush1.msra.mxu0 0.0
        %988 = vmatprep.subr.mxu0 0.0
        %989 = vmatpush1.msra.mxu0 0.0
        %990 = vmatprep.subr.mxu0 0.0
        %991 = vmatpush1.msra.mxu0 0.0
        %992 = vmatprep.subr.mxu0 0.0
        %993 = vmatpush1.msra.mxu0 0.0
        %994 = vmatprep.subr.mxu0 0.0
        %995 = vmatpush1.msra.mxu0 0.0
        %996 = vmatprep.subr.mxu0 0.0
        %997 = vmatpush1.msra.mxu0 0.0
        %998 = vmatprep.mubr.f32.mxu0 0.0
        %999 = vmatmul.mubr.f32.gmra.mrb[0].mxu0 %v929
        %v1000 = vpop.f32.mrb[0].mxu0
        %v1001 = vadd.f32 0.0, %v1000
        %v1002 = vpop.f32.mrb[0].mxu0
        %1003 = vmatprep.mubr.f32.mxu0 0.0
        %1004 = vmatmul.mubr.f32.gmra.mrb[0].mxu0 %v932
        %v1005 = vpop.f32.mrb[0].mxu0
        %v1006 = vadd.f32 0.0, %v1005
        %v1007 = vpop.f32.mrb[0].mxu0
        %1008 = vdwg.mxu0
        %1009 = vrot.lane.b32.xlu0 %v448, 64
        %v1010 = vpop.permute.xlu0 %1009
        %1011 = vrot.lane.b32.xlu0 %v453, 64
        %v1012 = vpop.permute.xlu0 %1011
        %v1016 = vsel %vm833, %v916, 0
        %v1019 = vsel %vm833, %v917, 0
        %1021 = vmatprep.subr.mxu0 0.0
        %1022 = vmatpush1.msra.mxu0 %v1010
        %1023 = vmatprep.subr.mxu0 0.0
        %1024 = vmatpush1.msra.mxu0 %v1012
        %1025 = vmatprep.subr.mxu0 0.0
        %1026 = vmatpush1.msra.mxu0 0.0
        %1027 = vmatprep.subr.mxu0 0.0
        %1028 = vmatpush1.msra.mxu0 0.0
        %1029 = vmatprep.subr.mxu0 0.0
        %1030 = vmatpush1.msra.mxu0 0.0
        %1031 = vmatprep.subr.mxu0 0.0
        %1032 = vmatpush1.msra.mxu0 0.0
        %1033 = vmatprep.subr.mxu0 0.0
        %1034 = vmatpush1.msra.mxu0 0.0
        %1035 = vmatprep.subr.mxu0 0.0
        %1036 = vmatpush1.msra.mxu0 0.0
        %1037 = vmatprep.subr.mxu0 0.0
        %1038 = vmatpush1.msra.mxu0 0.0
        %1039 = vmatprep.subr.mxu0 0.0
        %1040 = vmatpush1.msra.mxu0 0.0
        %1041 = vmatprep.subr.mxu0 0.0
        %1042 = vmatpush1.msra.mxu0 0.0
        %1043 = vmatprep.subr.mxu0 0.0
        %1044 = vmatpush1.msra.mxu0 0.0
        %1045 = vmatprep.subr.mxu0 0.0
        %1046 = vmatpush1.msra.mxu0 0.0
        %1047 = vmatprep.subr.mxu0 0.0
        %1048 = vmatpush1.msra.mxu0 0.0
        %1049 = vmatprep.subr.mxu0 0.0
        %1050 = vmatpush1.msra.mxu0 0.0
        %1051 = vmatprep.subr.mxu0 0.0
        %1052 = vmatpush1.msra.mxu0 0.0
        %1053 = vmatprep.subr.mxu0 0.0
        %1054 = vmatpush1.msra.mxu0 0.0
        %1055 = vmatprep.subr.mxu0 0.0
        %1056 = vmatpush1.msra.mxu0 0.0
        %1057 = vmatprep.subr.mxu0 0.0
        %1058 = vmatpush1.msra.mxu0 0.0
        %1059 = vmatprep.subr.mxu0 0.0
        %1060 = vmatpush1.msra.mxu0 0.0
        %1061 = vmatprep.subr.mxu0 0.0
        %1062 = vmatpush1.msra.mxu0 0.0
        %1063 = vmatprep.subr.mxu0 0.0
        %1064 = vmatpush1.msra.mxu0 0.0
        %1065 = vmatprep.subr.mxu0 0.0
        %1066 = vmatpush1.msra.mxu0 0.0
        %1067 = vmatprep.subr.mxu0 0.0
        %1068 = vmatpush1.msra.mxu0 0.0
        %1069 = vmatprep.subr.mxu0 0.0
        %1070 = vmatpush1.msra.mxu0 0.0
        %1071 = vmatprep.subr.mxu0 0.0
        %1072 = vmatpush1.msra.mxu0 0.0
        %1073 = vmatprep.subr.mxu0 0.0
        %1074 = vmatpush1.msra.mxu0 0.0
        %1075 = vmatprep.subr.mxu0 0.0
        %1076 = vmatpush1.msra.mxu0 0.0
        %1077 = vmatprep.subr.mxu0 0.0
        %1078 = vmatpush1.msra.mxu0 0.0
        %1079 = vmatprep.subr.mxu0 0.0
        %1080 = vmatpush1.msra.mxu0 0.0
        %1081 = vmatprep.subr.mxu0 0.0
        %1082 = vmatpush1.msra.mxu0 0.0
        %1083 = vmatprep.subr.mxu0 0.0
        %1084 = vmatpush1.msra.mxu0 0.0
        %1085 = vmatprep.mubr.f32.mxu0 0.0
        %1086 = vmatmul.mubr.f32.gmra.mrb[0].mxu0 %v1016
        %v1087 = vpop.f32.mrb[0].mxu0
        %v1088 = vadd.f32 0.0, %v1087
        %v1089 = vpop.f32.mrb[0].mxu0
        %1090 = vmatprep.mubr.f32.mxu0 0.0
        %1091 = vmatmul.mubr.f32.gmra.mrb[0].mxu0 %v1019
        %v1092 = vpop.f32.mrb[0].mxu0
        %v1093 = vadd.f32 0.0, %v1092
        %v1094 = vpop.f32.mrb[0].mxu0
        %1095 = vdwg.mxu0
        %1096 = vrot.lane.b32.xlu0 %v458, 64
        %v1097 = vpop.permute.xlu0 %1096
        %1098 = vrot.lane.b32.xlu0 %v463, 64
        %v1099 = vpop.permute.xlu0 %1098
        %v1103 = vsel %vm833, %v918, 0
        %v1106 = vsel %vm833, %v919, 0
        %1108 = vmatprep.subr.mxu0 0.0
        %1109 = vmatpush1.msra.mxu0 %v1097
        %1110 = vmatprep.subr.mxu0 0.0
        %1111 = vmatpush1.msra.mxu0 %v1099
        %1112 = vmatprep.subr.mxu0 0.0
        %1113 = vmatpush1.msra.mxu0 0.0
        %1114 = vmatprep.subr.mxu0 0.0
        %1115 = vmatpush1.msra.mxu0 0.0
        %1116 = vmatprep.subr.mxu0 0.0
        %1117 = vmatpush1.msra.mxu0 0.0
        %1118 = vmatprep.subr.mxu0 0.0
        %1119 = vmatpush1.msra.mxu0 0.0
        %1120 = vmatprep.subr.mxu0 0.0
        %1121 = vmatpush1.msra.mxu0 0.0
        %1122 = vmatprep.subr.mxu0 0.0
        %1123 = vmatpush1.msra.mxu0 0.0
        %1124 = vmatprep.subr.mxu0 0.0
        %1125 = vmatpush1.msra.mxu0 0.0
        %1126 = vmatprep.subr.mxu0 0.0
        %1127 = vmatpush1.msra.mxu0 0.0
        %1128 = vmatprep.subr.mxu0 0.0
        %1129 = vmatpush1.msra.mxu0 0.0
        %1130 = vmatprep.subr.mxu0 0.0
        %1131 = vmatpush1.msra.mxu0 0.0
        %1132 = vmatprep.subr.mxu0 0.0
        %1133 = vmatpush1.msra.mxu0 0.0
        %1134 = vmatprep.subr.mxu0 0.0
        %1135 = vmatpush1.msra.mxu0 0.0
        %1136 = vmatprep.subr.mxu0 0.0
        %1137 = vmatpush1.msra.mxu0 0.0
        %1138 = vmatprep.subr.mxu0 0.0
        %1139 = vmatpush1.msra.mxu0 0.0
        %1140 = vmatprep.subr.mxu0 0.0
        %1141 = vmatpush1.msra.mxu0 0.0
        %1142 = vmatprep.subr.mxu0 0.0
        %1143 = vmatpush1.msra.mxu0 0.0
        %1144 = vmatprep.subr.mxu0 0.0
        %1145 = vmatpush1.msra.mxu0 0.0
        %1146 = vmatprep.subr.mxu0 0.0
        %1147 = vmatpush1.msra.mxu0 0.0
        %1148 = vmatprep.subr.mxu0 0.0
        %1149 = vmatpush1.msra.mxu0 0.0
        %1150 = vmatprep.subr.mxu0 0.0
        %1151 = vmatpush1.msra.mxu0 0.0
        %1152 = vmatprep.subr.mxu0 0.0
        %1153 = vmatpush1.msra.mxu0 0.0
        %1154 = vmatprep.subr.mxu0 0.0
        %1155 = vmatpush1.msra.mxu0 0.0
        %1156 = vmatprep.subr.mxu0 0.0
        %1157 = vmatpush1.msra.mxu0 0.0
        %1158 = vmatprep.subr.mxu0 0.0
        %1159 = vmatpush1.msra.mxu0 0.0
        %1160 = vmatprep.subr.mxu0 0.0
        %1161 = vmatpush1.msra.mxu0 0.0
        %1162 = vmatprep.subr.mxu0 0.0
        %1163 = vmatpush1.msra.mxu0 0.0
        %1164 = vmatprep.subr.mxu0 0.0
        %1165 = vmatpush1.msra.mxu0 0.0
        %1166 = vmatprep.subr.mxu0 0.0
        %1167 = vmatpush1.msra.mxu0 0.0
        %1168 = vmatprep.subr.mxu0 0.0
        %1169 = vmatpush1.msra.mxu0 0.0
        %1170 = vmatprep.subr.mxu0 0.0
        %1171 = vmatpush1.msra.mxu0 0.0
        %1172 = vmatprep.mubr.f32.mxu0 0.0
        %1173 = vmatmul.mubr.f32.gmra.mrb[0].mxu0 %v1103
        %v1174 = vpop.f32.mrb[0].mxu0
        %v1175 = vadd.f32 0.0, %v1174
        %v1176 = vpop.f32.mrb[0].mxu0
        %1177 = vmatprep.mubr.f32.mxu0 0.0
        %1178 = vmatmul.mubr.f32.gmra.mrb[0].mxu0 %v1106
        %v1179 = vpop.f32.mrb[0].mxu0
        %v1180 = vadd.f32 0.0, %v1179
        %v1181 = vpop.f32.mrb[0].mxu0
        %1182 = vdwg.mxu0
        %1183 = vrot.lane.b32.xlu0 %v468, 64
        %v1184 = vpop.permute.xlu0 %1183
        %1185 = vrot.lane.b32.xlu0 %v473, 64
        %v1186 = vpop.permute.xlu0 %1185
        %v1190 = vsel %vm833, %v920, 0
        %v1193 = vsel %vm833, %v921, 0
        %1195 = vmatprep.subr.mxu0 0.0
        %1196 = vmatpush1.msra.mxu0 %v1184
        %1197 = vmatprep.subr.mxu0 0.0
        %1198 = vmatpush1.msra.mxu0 %v1186
        %1199 = vmatprep.subr.mxu0 0.0
        %1200 = vmatpush1.msra.mxu0 0.0
        %1201 = vmatprep.subr.mxu0 0.0
        %1202 = vmatpush1.msra.mxu0 0.0
        %1203 = vmatprep.subr.mxu0 0.0
        %1204 = vmatpush1.msra.mxu0 0.0
        %1205 = vmatprep.subr.mxu0 0.0
        %1206 = vmatpush1.msra.mxu0 0.0
        %1207 = vmatprep.subr.mxu0 0.0
        %1208 = vmatpush1.msra.mxu0 0.0
        %1209 = vmatprep.subr.mxu0 0.0
        %1210 = vmatpush1.msra.mxu0 0.0
        %1211 = vmatprep.subr.mxu0 0.0
        %1212 = vmatpush1.msra.mxu0 0.0
        %1213 = vmatprep.subr.mxu0 0.0
        %1214 = vmatpush1.msra.mxu0 0.0
        %1215 = vmatprep.subr.mxu0 0.0
        %1216 = vmatpush1.msra.mxu0 0.0
        %1217 = vmatprep.subr.mxu0 0.0
        %1218 = vmatpush1.msra.mxu0 0.0
        %1219 = vmatprep.subr.mxu0 0.0
        %1220 = vmatpush1.msra.mxu0 0.0
        %1221 = vmatprep.subr.mxu0 0.0
        %1222 = vmatpush1.msra.mxu0 0.0
        %1223 = vmatprep.subr.mxu0 0.0
        %1224 = vmatpush1.msra.mxu0 0.0
        %1225 = vmatprep.subr.mxu0 0.0
        %1226 = vmatpush1.msra.mxu0 0.0
        %1227 = vmatprep.subr.mxu0 0.0
        %1228 = vmatpush1.msra.mxu0 0.0
        %1229 = vmatprep.subr.mxu0 0.0
        %1230 = vmatpush1.msra.mxu0 0.0
        %1231 = vmatprep.subr.mxu0 0.0
        %1232 = vmatpush1.msra.mxu0 0.0
        %1233 = vmatprep.subr.mxu0 0.0
        %1234 = vmatpush1.msra.mxu0 0.0
        %1235 = vmatprep.subr.mxu0 0.0
        %1236 = vmatpush1.msra.mxu0 0.0
        %1237 = vmatprep.subr.mxu0 0.0
        %1238 = vmatpush1.msra.mxu0 0.0
        %1239 = vmatprep.subr.mxu0 0.0
        %1240 = vmatpush1.msra.mxu0 0.0
        %1241 = vmatprep.subr.mxu0 0.0
        %1242 = vmatpush1.msra.mxu0 0.0
        %1243 = vmatprep.subr.mxu0 0.0
        %1244 = vmatpush1.msra.mxu0 0.0
        %1245 = vmatprep.subr.mxu0 0.0
        %1246 = vmatpush1.msra.mxu0 0.0
        %1247 = vmatprep.subr.mxu0 0.0
        %1248 = vmatpush1.msra.mxu0 0.0
        %1249 = vmatprep.subr.mxu0 0.0
        %1250 = vmatpush1.msra.mxu0 0.0
        %1251 = vmatprep.subr.mxu0 0.0
        %1252 = vmatpush1.msra.mxu0 0.0
        %1253 = vmatprep.subr.mxu0 0.0
        %1254 = vmatpush1.msra.mxu0 0.0
        %1255 = vmatprep.subr.mxu0 0.0
        %1256 = vmatpush1.msra.mxu0 0.0
        %1257 = vmatprep.subr.mxu0 0.0
        %1258 = vmatpush1.msra.mxu0 0.0
        %1259 = vmatprep.mubr.f32.mxu0 0.0
        %1260 = vmatmul.mubr.f32.gmra.mrb[0].mxu0 %v1190
        %v1261 = vpop.f32.mrb[0].mxu0
        %v1262 = vadd.f32 0.0, %v1261
        %v1263 = vpop.f32.mrb[0].mxu0
        %1264 = vmatprep.mubr.f32.mxu0 0.0
        %1265 = vmatmul.mubr.f32.gmra.mrb[0].mxu0 %v1193
        %v1266 = vpop.f32.mrb[0].mxu0
        %v1267 = vadd.f32 0.0, %v1266
        %v1268 = vpop.f32.mrb[0].mxu0
        %1269 = vdwg.mxu0
        %v1270 = vld [vmem:[#allocation8] sm:$0xff]
        %1271 = vrot.lane.b32.xlu0 %v438, 120
        %v1272 = vpop.permute.xlu0 %1271
        %1273 = vrot.lane.b32.xlu0 %v443, 120
        %v1274 = vpop.permute.xlu0 %1273
        %1275 = vrot.lane.b32.xlu0 %v438, 88
        %v1276 = vpop.permute.xlu0 %1275
        %1277 = vrot.lane.b32.xlu0 %v443, 88
        %v1278 = vpop.permute.xlu0 %1277
        %v1279 = vsel %vm482, %v1272, 0
        %v1281 = vsel %vm482, %v1274, 0
        %v1283 = vsel %vm482, %v1276, 0
        %v1285 = vsel %vm482, %v1278, 0
        %1287 = vmatprep.subr.mxu0 0.0
        %1288 = vmatpush1.xpose.msra.mxu0 %v1283
        %1289 = vmatprep.subr.mxu0 0.0
        %1290 = vmatpush1.xpose.msra.mxu0 %v1285
        %1291 = vmatprep.subr.mxu0 0.0
        %1292 = vmatpush1.xpose.msra.mxu0 0.0
        %1293 = vmatprep.subr.mxu0 0.0
        %1294 = vmatpush1.xpose.msra.mxu0 0.0
        %1295 = vmatprep.subr.mxu0 0.0
        %1296 = vmatpush1.xpose.msra.mxu0 0.0
        %1297 = vmatprep.subr.mxu0 0.0
        %1298 = vmatpush1.xpose.msra.mxu0 0.0
        %1299 = vmatprep.subr.mxu0 0.0
        %1300 = vmatpush1.xpose.msra.mxu0 0.0
        %1301 = vmatprep.subr.mxu0 0.0
        %1302 = vmatpush1.xpose.msra.mxu0 0.0
        %1303 = vmatprep.subr.mxu0 0.0
        %1304 = vmatpush1.xpose.msra.mxu0 0.0
        %1305 = vmatprep.subr.mxu0 0.0
        %1306 = vmatpush1.xpose.msra.mxu0 0.0
        %1307 = vmatprep.subr.mxu0 0.0
        %1308 = vmatpush1.xpose.msra.mxu0 0.0
        %1309 = vmatprep.subr.mxu0 0.0
        %1310 = vmatpush1.xpose.msra.mxu0 0.0
        %1311 = vmatprep.subr.mxu0 0.0
        %1312 = vmatpush1.xpose.msra.mxu0 0.0
        %1313 = vmatprep.subr.mxu0 0.0
        %1314 = vmatpush1.xpose.msra.mxu0 0.0
        %1315 = vmatprep.subr.mxu0 0.0
        %1316 = vmatpush1.xpose.msra.mxu0 0.0
        %1317 = vmatprep.subr.mxu0 0.0
        %1318 = vmatpush1.xpose.msra.mxu0 0.0
        %1319 = vmatprep.subr.mxu0 0.0
        %1320 = vmatpush1.xpose.msra.mxu0 0.0
        %1321 = vmatprep.subr.mxu0 0.0
        %1322 = vmatpush1.xpose.msra.mxu0 0.0
        %1323 = vmatprep.subr.mxu0 0.0
        %1324 = vmatpush1.xpose.msra.mxu0 0.0
        %1325 = vmatprep.subr.mxu0 0.0
        %1326 = vmatpush1.xpose.msra.mxu0 0.0
        %1327 = vmatprep.subr.mxu0 0.0
        %1328 = vmatpush1.xpose.msra.mxu0 0.0
        %1329 = vmatprep.subr.mxu0 0.0
        %1330 = vmatpush1.xpose.msra.mxu0 0.0
        %1331 = vmatprep.subr.mxu0 0.0
        %1332 = vmatpush1.xpose.msra.mxu0 0.0
        %1333 = vmatprep.subr.mxu0 0.0
        %1334 = vmatpush1.xpose.msra.mxu0 0.0
        %1335 = vmatprep.subr.mxu0 0.0
        %1336 = vmatpush1.xpose.msra.mxu0 0.0
        %1337 = vmatprep.subr.mxu0 0.0
        %1338 = vmatpush1.xpose.msra.mxu0 0.0
        %1339 = vmatprep.subr.mxu0 0.0
        %1340 = vmatpush1.xpose.msra.mxu0 0.0
        %1341 = vmatprep.subr.mxu0 0.0
        %1342 = vmatpush1.xpose.msra.mxu0 0.0
        %1343 = vmatprep.subr.mxu0 0.0
        %1344 = vmatpush1.xpose.msra.mxu0 0.0
        %1345 = vmatprep.subr.mxu0 0.0
        %1346 = vmatpush1.xpose.msra.mxu0 0.0
        %1347 = vmatprep.subr.mxu0 0.0
        %1348 = vmatpush1.xpose.msra.mxu0 0.0
        %1349 = vmatprep.subr.mxu0 0.0
        %1350 = vmatpush1.xpose.msra.mxu0 0.0
        %1351 = vmatprep.mubr.f32.mxu0 0.0
        %1352 = vmatmul.mubr.f32.gmra.mrb[0].mxu0 %v1279
        %v1353 = vpop.f32.mrb[0].mxu0
        %v1354 = vadd.f32 0.0, %v1353
        %v1355 = vpop.f32.mrb[0].mxu0
        %1356 = vmatprep.mubr.f32.mxu0 0.0
        %1357 = vmatmul.mubr.f32.gmra.mrb[0].mxu0 %v1281
        %v1358 = vpop.f32.mrb[0].mxu0
        %v1359 = vadd.f32 0.0, %v1358
        %v1360 = vpop.f32.mrb[0].mxu0
        %1361 = vdwg.mxu0
        %1362 = vrot.lane.b32.xlu0 %v448, 120
        %v1363 = vpop.permute.xlu0 %1362
        %1364 = vrot.lane.b32.xlu0 %v453, 120
        %v1365 = vpop.permute.xlu0 %1364
        %1366 = vrot.lane.b32.xlu0 %v448, 88
        %v1367 = vpop.permute.xlu0 %1366
        %1368 = vrot.lane.b32.xlu0 %v453, 88
        %v1369 = vpop.permute.xlu0 %1368
        %v1370 = vsel %vm482, %v1363, 0
        %v1372 = vsel %vm482, %v1365, 0
        %v1374 = vsel %vm482, %v1367, 0
        %v1376 = vsel %vm482, %v1369, 0
        %1378 = vmatprep.subr.mxu0 0.0
        %1379 = vmatpush1.xpose.msra.mxu0 %v1374
        %1380 = vmatprep.subr.mxu0 0.0
        %1381 = vmatpush1.xpose.msra.mxu0 %v1376
        %1382 = vmatprep.subr.mxu0 0.0
        %1383 = vmatpush1.xpose.msra.mxu0 0.0
        %1384 = vmatprep.subr.mxu0 0.0
        %1385 = vmatpush1.xpose.msra.mxu0 0.0
        %1386 = vmatprep.subr.mxu0 0.0
        %1387 = vmatpush1.xpose.msra.mxu0 0.0
        %1388 = vmatprep.subr.mxu0 0.0
        %1389 = vmatpush1.xpose.msra.mxu0 0.0
        %1390 = vmatprep.subr.mxu0 0.0
        %1391 = vmatpush1.xpose.msra.mxu0 0.0
        %1392 = vmatprep.subr.mxu0 0.0
        %1393 = vmatpush1.xpose.msra.mxu0 0.0
        %1394 = vmatprep.subr.mxu0 0.0
        %1395 = vmatpush1.xpose.msra.mxu0 0.0
        %1396 = vmatprep.subr.mxu0 0.0
        %1397 = vmatpush1.xpose.msra.mxu0 0.0
        %1398 = vmatprep.subr.mxu0 0.0
        %1399 = vmatpush1.xpose.msra.mxu0 0.0
        %1400 = vmatprep.subr.mxu0 0.0
        %1401 = vmatpush1.xpose.msra.mxu0 0.0
        %1402 = vmatprep.subr.mxu0 0.0
        %1403 = vmatpush1.xpose.msra.mxu0 0.0
        %1404 = vmatprep.subr.mxu0 0.0
        %1405 = vmatpush1.xpose.msra.mxu0 0.0
        %1406 = vmatprep.subr.mxu0 0.0
        %1407 = vmatpush1.xpose.msra.mxu0 0.0
        %1408 = vmatprep.subr.mxu0 0.0
        %1409 = vmatpush1.xpose.msra.mxu0 0.0
        %1410 = vmatprep.subr.mxu0 0.0
        %1411 = vmatpush1.xpose.msra.mxu0 0.0
        %1412 = vmatprep.subr.mxu0 0.0
        %1413 = vmatpush1.xpose.msra.mxu0 0.0
        %1414 = vmatprep.subr.mxu0 0.0
        %1415 = vmatpush1.xpose.msra.mxu0 0.0
        %1416 = vmatprep.subr.mxu0 0.0
        %1417 = vmatpush1.xpose.msra.mxu0 0.0
        %1418 = vmatprep.subr.mxu0 0.0
        %1419 = vmatpush1.xpose.msra.mxu0 0.0
        %1420 = vmatprep.subr.mxu0 0.0
        %1421 = vmatpush1.xpose.msra.mxu0 0.0
        %1422 = vmatprep.subr.mxu0 0.0
        %1423 = vmatpush1.xpose.msra.mxu0 0.0
        %1424 = vmatprep.subr.mxu0 0.0
        %1425 = vmatpush1.xpose.msra.mxu0 0.0
        %1426 = vmatprep.subr.mxu0 0.0
        %1427 = vmatpush1.xpose.msra.mxu0 0.0
        %1428 = vmatprep.subr.mxu0 0.0
        %1429 = vmatpush1.xpose.msra.mxu0 0.0
        %1430 = vmatprep.subr.mxu0 0.0
        %1431 = vmatpush1.xpose.msra.mxu0 0.0
        %1432 = vmatprep.subr.mxu0 0.0
        %1433 = vmatpush1.xpose.msra.mxu0 0.0
        %1434 = vmatprep.subr.mxu0 0.0
        %1435 = vmatpush1.xpose.msra.mxu0 0.0
        %1436 = vmatprep.subr.mxu0 0.0
        %1437 = vmatpush1.xpose.msra.mxu0 0.0
        %1438 = vmatprep.subr.mxu0 0.0
        %1439 = vmatpush1.xpose.msra.mxu0 0.0
        %1440 = vmatprep.subr.mxu0 0.0
        %1441 = vmatpush1.xpose.msra.mxu0 0.0
        %1442 = vmatprep.mubr.f32.mxu0 0.0
        %1443 = vmatmul.mubr.f32.gmra.mrb[0].mxu0 %v1370
        %v1444 = vpop.f32.mrb[0].mxu0
        %v1445 = vadd.f32 0.0, %v1444
        %v1446 = vpop.f32.mrb[0].mxu0
        %1447 = vmatprep.mubr.f32.mxu0 0.0
        %1448 = vmatmul.mubr.f32.gmra.mrb[0].mxu0 %v1372
        %v1449 = vpop.f32.mrb[0].mxu0
        %v1450 = vadd.f32 0.0, %v1449
        %v1451 = vpop.f32.mrb[0].mxu0
        %1452 = vdwg.mxu0
        %1453 = vrot.lane.b32.xlu0 %v458, 120
        %v1454 = vpop.permute.xlu0 %1453
        %1455 = vrot.lane.b32.xlu0 %v463, 120
        %v1456 = vpop.permute.xlu0 %1455
        %1457 = vrot.lane.b32.xlu0 %v458, 88
        %v1458 = vpop.permute.xlu0 %1457
        %1459 = vrot.lane.b32.xlu0 %v463, 88
        %v1460 = vpop.permute.xlu0 %1459
        %v1461 = vsel %vm482, %v1454, 0
        %v1463 = vsel %vm482, %v1456, 0
        %v1465 = vsel %vm482, %v1458, 0
        %v1467 = vsel %vm482, %v1460, 0
        %1469 = vmatprep.subr.mxu0 0.0
        %1470 = vmatpush1.xpose.msra.mxu0 %v1465
        %1471 = vmatprep.subr.mxu0 0.0
        %1472 = vmatpush1.xpose.msra.mxu0 %v1467
        %1473 = vmatprep.subr.mxu0 0.0
        %1474 = vmatpush1.xpose.msra.mxu0 0.0
        %1475 = vmatprep.subr.mxu0 0.0
        %1476 = vmatpush1.xpose.msra.mxu0 0.0
        %1477 = vmatprep.subr.mxu0 0.0
        %1478 = vmatpush1.xpose.msra.mxu0 0.0
        %1479 = vmatprep.subr.mxu0 0.0
        %1480 = vmatpush1.xpose.msra.mxu0 0.0
        %1481 = vmatprep.subr.mxu0 0.0
        %1482 = vmatpush1.xpose.msra.mxu0 0.0
        %1483 = vmatprep.subr.mxu0 0.0
        %1484 = vmatpush1.xpose.msra.mxu0 0.0
        %1485 = vmatprep.subr.mxu0 0.0
        %1486 = vmatpush1.xpose.msra.mxu0 0.0
        %1487 = vmatprep.subr.mxu0 0.0
        %1488 = vmatpush1.xpose.msra.mxu0 0.0
        %1489 = vmatprep.subr.mxu0 0.0
        %1490 = vmatpush1.xpose.msra.mxu0 0.0
        %1491 = vmatprep.subr.mxu0 0.0
        %1492 = vmatpush1.xpose.msra.mxu0 0.0
        %1493 = vmatprep.subr.mxu0 0.0
        %1494 = vmatpush1.xpose.msra.mxu0 0.0
        %1495 = vmatprep.subr.mxu0 0.0
        %1496 = vmatpush1.xpose.msra.mxu0 0.0
        %1497 = vmatprep.subr.mxu0 0.0
        %1498 = vmatpush1.xpose.msra.mxu0 0.0
        %1499 = vmatprep.subr.mxu0 0.0
        %1500 = vmatpush1.xpose.msra.mxu0 0.0
        %1501 = vmatprep.subr.mxu0 0.0
        %1502 = vmatpush1.xpose.msra.mxu0 0.0
        %1503 = vmatprep.subr.mxu0 0.0
        %1504 = vmatpush1.xpose.msra.mxu0 0.0
        %1505 = vmatprep.subr.mxu0 0.0
        %1506 = vmatpush1.xpose.msra.mxu0 0.0
        %1507 = vmatprep.subr.mxu0 0.0
        %1508 = vmatpush1.xpose.msra.mxu0 0.0
        %1509 = vmatprep.subr.mxu0 0.0
        %1510 = vmatpush1.xpose.msra.mxu0 0.0
        %1511 = vmatprep.subr.mxu0 0.0
        %1512 = vmatpush1.xpose.msra.mxu0 0.0
        %1513 = vmatprep.subr.mxu0 0.0
        %1514 = vmatpush1.xpose.msra.mxu0 0.0
        %1515 = vmatprep.subr.mxu0 0.0
        %1516 = vmatpush1.xpose.msra.mxu0 0.0
        %1517 = vmatprep.subr.mxu0 0.0
        %1518 = vmatpush1.xpose.msra.mxu0 0.0
        %1519 = vmatprep.subr.mxu0 0.0
        %1520 = vmatpush1.xpose.msra.mxu0 0.0
        %1521 = vmatprep.subr.mxu0 0.0
        %1522 = vmatpush1.xpose.msra.mxu0 0.0
        %1523 = vmatprep.subr.mxu0 0.0
        %1524 = vmatpush1.xpose.msra.mxu0 0.0
        %1525 = vmatprep.subr.mxu0 0.0
        %1526 = vmatpush1.xpose.msra.mxu0 0.0
        %1527 = vmatprep.subr.mxu0 0.0
        %1528 = vmatpush1.xpose.msra.mxu0 0.0
        %1529 = vmatprep.subr.mxu0 0.0
        %1530 = vmatpush1.xpose.msra.mxu0 0.0
        %1531 = vmatprep.subr.mxu0 0.0
        %1532 = vmatpush1.xpose.msra.mxu0 0.0
        %1533 = vmatprep.mubr.f32.mxu0 0.0
        %1534 = vmatmul.mubr.f32.gmra.mrb[0].mxu0 %v1461
        %v1535 = vpop.f32.mrb[0].mxu0
        %v1536 = vadd.f32 0.0, %v1535
        %v1537 = vpop.f32.mrb[0].mxu0
        %1538 = vmatprep.mubr.f32.mxu0 0.0
        %1539 = vmatmul.mubr.f32.gmra.mrb[0].mxu0 %v1463
        %v1540 = vpop.f32.mrb[0].mxu0
        %v1541 = vadd.f32 0.0, %v1540
        %v1542 = vpop.f32.mrb[0].mxu0
        %1543 = vdwg.mxu0
        %1544 = vrot.lane.b32.xlu0 %v468, 120
        %v1545 = vpop.permute.xlu0 %1544
        %1546 = vrot.lane.b32.xlu0 %v473, 120
        %v1547 = vpop.permute.xlu0 %1546
        %1548 = vrot.lane.b32.xlu0 %v468, 88
        %v1549 = vpop.permute.xlu0 %1548
        %1550 = vrot.lane.b32.xlu0 %v473, 88
        %v1551 = vpop.permute.xlu0 %1550
        %v1552 = vsel %vm482, %v1545, 0
        %v1554 = vsel %vm482, %v1547, 0
        %v1556 = vsel %vm482, %v1549, 0
        %v1558 = vsel %vm482, %v1551, 0
        %1560 = vmatprep.subr.mxu0 0.0
        %1561 = vmatpush1.xpose.msra.mxu0 %v1556
        %1562 = vmatprep.subr.mxu0 0.0
        %1563 = vmatpush1.xpose.msra.mxu0 %v1558
        %1564 = vmatprep.subr.mxu0 0.0
        %1565 = vmatpush1.xpose.msra.mxu0 0.0
        %1566 = vmatprep.subr.mxu0 0.0
        %1567 = vmatpush1.xpose.msra.mxu0 0.0
        %1568 = vmatprep.subr.mxu0 0.0
        %1569 = vmatpush1.xpose.msra.mxu0 0.0
        %1570 = vmatprep.subr.mxu0 0.0
        %1571 = vmatpush1.xpose.msra.mxu0 0.0
        %1572 = vmatprep.subr.mxu0 0.0
        %1573 = vmatpush1.xpose.msra.mxu0 0.0
        %1574 = vmatprep.subr.mxu0 0.0
        %1575 = vmatpush1.xpose.msra.mxu0 0.0
        %1576 = vmatprep.subr.mxu0 0.0
        %1577 = vmatpush1.xpose.msra.mxu0 0.0
        %1578 = vmatprep.subr.mxu0 0.0
        %1579 = vmatpush1.xpose.msra.mxu0 0.0
        %1580 = vmatprep.subr.mxu0 0.0
        %1581 = vmatpush1.xpose.msra.mxu0 0.0
        %1582 = vmatprep.subr.mxu0 0.0
        %1583 = vmatpush1.xpose.msra.mxu0 0.0
        %1584 = vmatprep.subr.mxu0 0.0
        %1585 = vmatpush1.xpose.msra.mxu0 0.0
        %1586 = vmatprep.subr.mxu0 0.0
        %1587 = vmatpush1.xpose.msra.mxu0 0.0
        %1588 = vmatprep.subr.mxu0 0.0
        %1589 = vmatpush1.xpose.msra.mxu0 0.0
        %1590 = vmatprep.subr.mxu0 0.0
        %1591 = vmatpush1.xpose.msra.mxu0 0.0
        %1592 = vmatprep.subr.mxu0 0.0
        %1593 = vmatpush1.xpose.msra.mxu0 0.0
        %1594 = vmatprep.subr.mxu0 0.0
        %1595 = vmatpush1.xpose.msra.mxu0 0.0
        %1596 = vmatprep.subr.mxu0 0.0
        %1597 = vmatpush1.xpose.msra.mxu0 0.0
        %1598 = vmatprep.subr.mxu0 0.0
        %1599 = vmatpush1.xpose.msra.mxu0 0.0
        %1600 = vmatprep.subr.mxu0 0.0
        %1601 = vmatpush1.xpose.msra.mxu0 0.0
        %1602 = vmatprep.subr.mxu0 0.0
        %1603 = vmatpush1.xpose.msra.mxu0 0.0
        %1604 = vmatprep.subr.mxu0 0.0
        %1605 = vmatpush1.xpose.msra.mxu0 0.0
        %1606 = vmatprep.subr.mxu0 0.0
        %1607 = vmatpush1.xpose.msra.mxu0 0.0
        %1608 = vmatprep.subr.mxu0 0.0
        %1609 = vmatpush1.xpose.msra.mxu0 0.0
        %1610 = vmatprep.subr.mxu0 0.0
        %1611 = vmatpush1.xpose.msra.mxu0 0.0
        %1612 = vmatprep.subr.mxu0 0.0
        %1613 = vmatpush1.xpose.msra.mxu0 0.0
        %1614 = vmatprep.subr.mxu0 0.0
        %1615 = vmatpush1.xpose.msra.mxu0 0.0
        %1616 = vmatprep.subr.mxu0 0.0
        %1617 = vmatpush1.xpose.msra.mxu0 0.0
        %1618 = vmatprep.subr.mxu0 0.0
        %1619 = vmatpush1.xpose.msra.mxu0 0.0
        %1620 = vmatprep.subr.mxu0 0.0
        %1621 = vmatpush1.xpose.msra.mxu0 0.0
        %1622 = vmatprep.subr.mxu0 0.0
        %1623 = vmatpush1.xpose.msra.mxu0 0.0
        %1624 = vmatprep.mubr.f32.mxu0 0.0
        %1625 = vmatmul.mubr.f32.gmra.mrb[0].mxu0 %v1552
        %v1626 = vpop.f32.mrb[0].mxu0
        %v1627 = vadd.f32 0.0, %v1626
        %v1628 = vpop.f32.mrb[0].mxu0
        %1629 = vmatprep.mubr.f32.mxu0 0.0
        %1630 = vmatmul.mubr.f32.gmra.mrb[0].mxu0 %v1554
        %v1631 = vpop.f32.mrb[0].mxu0
        %v1632 = vadd.f32 0.0, %v1631
        %v1633 = vpop.f32.mrb[0].mxu0
        %1634 = vdwg.mxu0
        %v1635 = vsel %vm833, %v1354, -inf
        %1636 = vmax.xlane.f32.xlu0 %v1635
        %v1637 = vpop.xlane.xlu0 %1636
        %v1638 = vsel %vm833, %v1359, -inf
        %1639 = vmax.xlane.f32.xlu0 %v1638
        %v1640 = vpop.xlane.xlu0 %1639
        %v1641 = vsel %vm833, %v1445, -inf
        %1642 = vmax.xlane.f32.xlu0 %v1641
        %v1643 = vpop.xlane.xlu0 %1642
        %v1644 = vsel %vm833, %v1450, -inf
        %1645 = vmax.xlane.f32.xlu0 %v1644
        %v1646 = vpop.xlane.xlu0 %1645
        %v1647 = vsel %vm833, %v1536, -inf
        %1648 = vmax.xlane.f32.xlu0 %v1647
        %v1649 = vpop.xlane.xlu0 %1648
        %v1650 = vsel %vm833, %v1541, -inf
        %1651 = vmax.xlane.f32.xlu0 %v1650
        %v1652 = vpop.xlane.xlu0 %1651
        %v1653 = vsel %vm833, %v1627, -inf
        %1654 = vmax.xlane.f32.xlu0 %v1653
        %v1655 = vpop.xlane.xlu0 %1654
        %v1656 = vsel %vm833, %v1632, -inf
        %1657 = vmax.xlane.f32.xlu0 %v1656
        %v1658 = vpop.xlane.xlu0 %1657
        %v1659 = vsub.f32 %v1354, %v1637
        %v1660 = vsub.f32 %v1359, %v1640
        %v1661 = vsub.f32 %v1445, %v1643
        %v1662 = vsub.f32 %v1450, %v1646
        %v1663 = vsub.f32 %v1536, %v1649
        %v1664 = vsub.f32 %v1541, %v1652
        %v1665 = vsub.f32 %v1627, %v1655
        %v1666 = vsub.f32 %v1632, %v1658
        %v1667 = vmul.f32 %v1659, 1.442695
        %v1668 = vpow.pop %v1667
        %v1669 = vmul.f32 %v1660, 1.442695
        %v1670 = vpow.pop %v1669
        %v1671 = vmul.f32 %v1661, 1.442695
        %v1672 = vpow.pop %v1671
        %v1673 = vmul.f32 %v1662, 1.442695
        %v1674 = vpow.pop %v1673
        %v1675 = vmul.f32 %v1663, 1.442695
        %v1676 = vpow.pop %v1675
        %v1677 = vmul.f32 %v1664, 1.442695
        %v1678 = vpow.pop %v1677
        %v1679 = vmul.f32 %v1665, 1.442695
        %v1680 = vpow.pop %v1679
        %v1681 = vmul.f32 %v1666, 1.442695
        %v1682 = vpow.pop %v1681
        %v1683 = vsel %vm833, %v1668, 0.0
        %1684 = vadd.xlane.f32.xlu0 %v1683
        %v1685 = vpop.xlane.xlu0 %1684
        %v1686 = vsel %vm833, %v1670, 0.0
        %1687 = vadd.xlane.f32.xlu0 %v1686
        %v1688 = vpop.xlane.xlu0 %1687
        %v1689 = vsel %vm833, %v1672, 0.0
        %1690 = vadd.xlane.f32.xlu0 %v1689
        %v1691 = vpop.xlane.xlu0 %1690
        %v1692 = vsel %vm833, %v1674, 0.0
        %1693 = vadd.xlane.f32.xlu0 %v1692
        %v1694 = vpop.xlane.xlu0 %1693
        %v1695 = vsel %vm833, %v1676, 0.0
        %1696 = vadd.xlane.f32.xlu0 %v1695
        %v1697 = vpop.xlane.xlu0 %1696
        %v1698 = vsel %vm833, %v1678, 0.0
        %1699 = vadd.xlane.f32.xlu0 %v1698
        %v1700 = vpop.xlane.xlu0 %1699
        %v1701 = vsel %vm833, %v1680, 0.0
        %1702 = vadd.xlane.f32.xlu0 %v1701
        %v1703 = vpop.xlane.xlu0 %1702
        %v1704 = vsel %vm833, %v1682, 0.0
        %1705 = vadd.xlane.f32.xlu0 %v1704
        %v1706 = vpop.xlane.xlu0 %1705
        %v1707 = vrcp.pop %v1685
        %v1708 = vrcp.pop %v1688
        %v1709 = vrcp.pop %v1691
        %v1710 = vrcp.pop %v1694
        %v1711 = vrcp.pop %v1697
        %v1712 = vrcp.pop %v1700
        %v1713 = vrcp.pop %v1703
        %v1714 = vrcp.pop %v1706
        %v1715 = vmul.f32 %v1668, %v1707
        %v1716 = vmul.f32 %v1670, %v1708
        %v1717 = vmul.f32 %v1672, %v1709
        %v1718 = vmul.f32 %v1674, %v1710
        %v1719 = vmul.f32 %v1676, %v1711
        %v1720 = vmul.f32 %v1678, %v1712
        %v1721 = vmul.f32 %v1680, %v1713
        %v1722 = vmul.f32 %v1682, %v1714
        %1723 = vrot.lane.b32.xlu0 %v438, 56
        %v1724 = vpop.permute.xlu0 %1723
        %1725 = vrot.lane.b32.xlu0 %v443, 56
        %v1726 = vpop.permute.xlu0 %1725
        %v1730 = vsel %vm833, %v1715, 0
        %v1733 = vsel %vm833, %v1716, 0
        %1735 = vmatprep.subr.mxu0 0.0
        %1736 = vmatpush1.msra.mxu0 %v1724
        %1737 = vmatprep.subr.mxu0 0.0
        %1738 = vmatpush1.msra.mxu0 %v1726
        %1739 = vmatprep.subr.mxu0 0.0
        %1740 = vmatpush1.msra.mxu0 0.0
        %1741 = vmatprep.subr.mxu0 0.0
        %1742 = vmatpush1.msra.mxu0 0.0
        %1743 = vmatprep.subr.mxu0 0.0
        %1744 = vmatpush1.msra.mxu0 0.0
        %1745 = vmatprep.subr.mxu0 0.0
        %1746 = vmatpush1.msra.mxu0 0.0
        %1747 = vmatprep.subr.mxu0 0.0
        %1748 = vmatpush1.msra.mxu0 0.0
        %1749 = vmatprep.subr.mxu0 0.0
        %1750 = vmatpush1.msra.mxu0 0.0
        %1751 = vmatprep.subr.mxu0 0.0
        %1752 = vmatpush1.msra.mxu0 0.0
        %1753 = vmatprep.subr.mxu0 0.0
        %1754 = vmatpush1.msra.mxu0 0.0
        %1755 = vmatprep.subr.mxu0 0.0
        %1756 = vmatpush1.msra.mxu0 0.0
        %1757 = vmatprep.subr.mxu0 0.0
        %1758 = vmatpush1.msra.mxu0 0.0
        %1759 = vmatprep.subr.mxu0 0.0
        %1760 = vmatpush1.msra.mxu0 0.0
        %1761 = vmatprep.subr.mxu0 0.0
        %1762 = vmatpush1.msra.mxu0 0.0
        %1763 = vmatprep.subr.mxu0 0.0
        %1764 = vmatpush1.msra.mxu0 0.0
        %1765 = vmatprep.subr.mxu0 0.0
        %1766 = vmatpush1.msra.mxu0 0.0
        %1767 = vmatprep.subr.mxu0 0.0
        %1768 = vmatpush1.msra.mxu0 0.0
        %1769 = vmatprep.subr.mxu0 0.0
        %1770 = vmatpush1.msra.mxu0 0.0
        %1771 = vmatprep.subr.mxu0 0.0
        %1772 = vmatpush1.msra.mxu0 0.0
        %1773 = vmatprep.subr.mxu0 0.0
        %1774 = vmatpush1.msra.mxu0 0.0
        %1775 = vmatprep.subr.mxu0 0.0
        %1776 = vmatpush1.msra.mxu0 0.0
        %1777 = vmatprep.subr.mxu0 0.0
        %1778 = vmatpush1.msra.mxu0 0.0
        %1779 = vmatprep.subr.mxu0 0.0
        %1780 = vmatpush1.msra.mxu0 0.0
        %1781 = vmatprep.subr.mxu0 0.0
        %1782 = vmatpush1.msra.mxu0 0.0
        %1783 = vmatprep.subr.mxu0 0.0
        %1784 = vmatpush1.msra.mxu0 0.0
        %1785 = vmatprep.subr.mxu0 0.0
        %1786 = vmatpush1.msra.mxu0 0.0
        %1787 = vmatprep.subr.mxu0 0.0
        %1788 = vmatpush1.msra.mxu0 0.0
        %1789 = vmatprep.subr.mxu0 0.0
        %1790 = vmatpush1.msra.mxu0 0.0
        %1791 = vmatprep.subr.mxu0 0.0
        %1792 = vmatpush1.msra.mxu0 0.0
        %1793 = vmatprep.subr.mxu0 0.0
        %1794 = vmatpush1.msra.mxu0 0.0
        %1795 = vmatprep.subr.mxu0 0.0
        %1796 = vmatpush1.msra.mxu0 0.0
        %1797 = vmatprep.subr.mxu0 0.0
        %1798 = vmatpush1.msra.mxu0 0.0
        %1799 = vmatprep.mubr.f32.mxu0 0.0
        %1800 = vmatmul.mubr.f32.gmra.mrb[0].mxu0 %v1730
        %v1801 = vpop.f32.mrb[0].mxu0
        %v1802 = vadd.f32 0.0, %v1801
        %v1803 = vpop.f32.mrb[0].mxu0
        %1804 = vmatprep.mubr.f32.mxu0 0.0
        %1805 = vmatmul.mubr.f32.gmra.mrb[0].mxu0 %v1733
        %v1806 = vpop.f32.mrb[0].mxu0
        %v1807 = vadd.f32 0.0, %v1806
        %v1808 = vpop.f32.mrb[0].mxu0
        %1809 = vdwg.mxu0
        %1810 = vrot.lane.b32.xlu0 %v448, 56
        %v1811 = vpop.permute.xlu0 %1810
        %1812 = vrot.lane.b32.xlu0 %v453, 56
        %v1813 = vpop.permute.xlu0 %1812
        %v1817 = vsel %vm833, %v1717, 0
        %v1820 = vsel %vm833, %v1718, 0
        %1822 = vmatprep.subr.mxu0 0.0
        %1823 = vmatpush1.msra.mxu0 %v1811
        %1824 = vmatprep.subr.mxu0 0.0
        %1825 = vmatpush1.msra.mxu0 %v1813
        %1826 = vmatprep.subr.mxu0 0.0
        %1827 = vmatpush1.msra.mxu0 0.0
        %1828 = vmatprep.subr.mxu0 0.0
        %1829 = vmatpush1.msra.mxu0 0.0
        %1830 = vmatprep.subr.mxu0 0.0
        %1831 = vmatpush1.msra.mxu0 0.0
        %1832 = vmatprep.subr.mxu0 0.0
        %1833 = vmatpush1.msra.mxu0 0.0
        %1834 = vmatprep.subr.mxu0 0.0
        %1835 = vmatpush1.msra.mxu0 0.0
        %1836 = vmatprep.subr.mxu0 0.0
        %1837 = vmatpush1.msra.mxu0 0.0
        %1838 = vmatprep.subr.mxu0 0.0
        %1839 = vmatpush1.msra.mxu0 0.0
        %1840 = vmatprep.subr.mxu0 0.0
        %1841 = vmatpush1.msra.mxu0 0.0
        %1842 = vmatprep.subr.mxu0 0.0
        %1843 = vmatpush1.msra.mxu0 0.0
        %1844 = vmatprep.subr.mxu0 0.0
        %1845 = vmatpush1.msra.mxu0 0.0
        %1846 = vmatprep.subr.mxu0 0.0
        %1847 = vmatpush1.msra.mxu0 0.0
        %1848 = vmatprep.subr.mxu0 0.0
        %1849 = vmatpush1.msra.mxu0 0.0
        %1850 = vmatprep.subr.mxu0 0.0
        %1851 = vmatpush1.msra.mxu0 0.0
        %1852 = vmatprep.subr.mxu0 0.0
        %1853 = vmatpush1.msra.mxu0 0.0
        %1854 = vmatprep.subr.mxu0 0.0
        %1855 = vmatpush1.msra.mxu0 0.0
        %1856 = vmatprep.subr.mxu0 0.0
        %1857 = vmatpush1.msra.mxu0 0.0
        %1858 = vmatprep.subr.mxu0 0.0
        %1859 = vmatpush1.msra.mxu0 0.0
        %1860 = vmatprep.subr.mxu0 0.0
        %1861 = vmatpush1.msra.mxu0 0.0
        %1862 = vmatprep.subr.mxu0 0.0
        %1863 = vmatpush1.msra.mxu0 0.0
        %1864 = vmatprep.subr.mxu0 0.0
        %1865 = vmatpush1.msra.mxu0 0.0
        %1866 = vmatprep.subr.mxu0 0.0
        %1867 = vmatpush1.msra.mxu0 0.0
        %1868 = vmatprep.subr.mxu0 0.0
        %1869 = vmatpush1.msra.mxu0 0.0
        %1870 = vmatprep.subr.mxu0 0.0
        %1871 = vmatpush1.msra.mxu0 0.0
        %1872 = vmatprep.subr.mxu0 0.0
        %1873 = vmatpush1.msra.mxu0 0.0
        %1874 = vmatprep.subr.mxu0 0.0
        %1875 = vmatpush1.msra.mxu0 0.0
        %1876 = vmatprep.subr.mxu0 0.0
        %1877 = vmatpush1.msra.mxu0 0.0
        %1878 = vmatprep.subr.mxu0 0.0
        %1879 = vmatpush1.msra.mxu0 0.0
        %1880 = vmatprep.subr.mxu0 0.0
        %1881 = vmatpush1.msra.mxu0 0.0
        %1882 = vmatprep.subr.mxu0 0.0
        %1883 = vmatpush1.msra.mxu0 0.0
        %1884 = vmatprep.subr.mxu0 0.0
        %1885 = vmatpush1.msra.mxu0 0.0
        %1886 = vmatprep.mubr.f32.mxu0 0.0
        %1887 = vmatmul.mubr.f32.gmra.mrb[0].mxu0 %v1817
        %v1888 = vpop.f32.mrb[0].mxu0
        %v1889 = vadd.f32 0.0, %v1888
        %v1890 = vpop.f32.mrb[0].mxu0
        %1891 = vmatprep.mubr.f32.mxu0 0.0
        %1892 = vmatmul.mubr.f32.gmra.mrb[0].mxu0 %v1820
        %v1893 = vpop.f32.mrb[0].mxu0
        %v1894 = vadd.f32 0.0, %v1893
        %v1895 = vpop.f32.mrb[0].mxu0
        %1896 = vdwg.mxu0
        %1897 = vrot.lane.b32.xlu0 %v458, 56
        %v1898 = vpop.permute.xlu0 %1897
        %1899 = vrot.lane.b32.xlu0 %v463, 56
        %v1900 = vpop.permute.xlu0 %1899
        %v1904 = vsel %vm833, %v1719, 0
        %v1907 = vsel %vm833, %v1720, 0
        %1909 = vmatprep.subr.mxu0 0.0
        %1910 = vmatpush1.msra.mxu0 %v1898
        %1911 = vmatprep.subr.mxu0 0.0
        %1912 = vmatpush1.msra.mxu0 %v1900
        %1913 = vmatprep.subr.mxu0 0.0
        %1914 = vmatpush1.msra.mxu0 0.0
        %1915 = vmatprep.subr.mxu0 0.0
        %1916 = vmatpush1.msra.mxu0 0.0
        %1917 = vmatprep.subr.mxu0 0.0
        %1918 = vmatpush1.msra.mxu0 0.0
        %1919 = vmatprep.subr.mxu0 0.0
        %1920 = vmatpush1.msra.mxu0 0.0
        %1921 = vmatprep.subr.mxu0 0.0
        %1922 = vmatpush1.msra.mxu0 0.0
        %1923 = vmatprep.subr.mxu0 0.0
        %1924 = vmatpush1.msra.mxu0 0.0
        %1925 = vmatprep.subr.mxu0 0.0
        %1926 = vmatpush1.msra.mxu0 0.0
        %1927 = vmatprep.subr.mxu0 0.0
        %1928 = vmatpush1.msra.mxu0 0.0
        %1929 = vmatprep.subr.mxu0 0.0
        %1930 = vmatpush1.msra.mxu0 0.0
        %1931 = vmatprep.subr.mxu0 0.0
        %1932 = vmatpush1.msra.mxu0 0.0
        %1933 = vmatprep.subr.mxu0 0.0
        %1934 = vmatpush1.msra.mxu0 0.0
        %1935 = vmatprep.subr.mxu0 0.0
        %1936 = vmatpush1.msra.mxu0 0.0
        %1937 = vmatprep.subr.mxu0 0.0
        %1938 = vmatpush1.msra.mxu0 0.0
        %1939 = vmatprep.subr.mxu0 0.0
        %1940 = vmatpush1.msra.mxu0 0.0
        %1941 = vmatprep.subr.mxu0 0.0
        %1942 = vmatpush1.msra.mxu0 0.0
        %1943 = vmatprep.subr.mxu0 0.0
        %1944 = vmatpush1.msra.mxu0 0.0
        %1945 = vmatprep.subr.mxu0 0.0
        %1946 = vmatpush1.msra.mxu0 0.0
        %1947 = vmatprep.subr.mxu0 0.0
        %1948 = vmatpush1.msra.mxu0 0.0
        %1949 = vmatprep.subr.mxu0 0.0
        %1950 = vmatpush1.msra.mxu0 0.0
        %1951 = vmatprep.subr.mxu0 0.0
        %1952 = vmatpush1.msra.mxu0 0.0
        %1953 = vmatprep.subr.mxu0 0.0
        %1954 = vmatpush1.msra.mxu0 0.0
        %1955 = vmatprep.subr.mxu0 0.0
        %1956 = vmatpush1.msra.mxu0 0.0
        %1957 = vmatprep.subr.mxu0 0.0
        %1958 = vmatpush1.msra.mxu0 0.0
        %1959 = vmatprep.subr.mxu0 0.0
        %1960 = vmatpush1.msra.mxu0 0.0
        %1961 = vmatprep.subr.mxu0 0.0
        %1962 = vmatpush1.msra.mxu0 0.0
        %1963 = vmatprep.subr.mxu0 0.0
        %1964 = vmatpush1.msra.mxu0 0.0
        %1965 = vmatprep.subr.mxu0 0.0
        %1966 = vmatpush1.msra.mxu0 0.0
        %1967 = vmatprep.subr.mxu0 0.0
        %1968 = vmatpush1.msra.mxu0 0.0
        %1969 = vmatprep.subr.mxu0 0.0
        %1970 = vmatpush1.msra.mxu0 0.0
        %1971 = vmatprep.subr.mxu0 0.0
        %1972 = vmatpush1.msra.mxu0 0.0
        %1973 = vmatprep.mubr.f32.mxu0 0.0
        %1974 = vmatmul.mubr.f32.gmra.mrb[0].mxu0 %v1904
        %v1975 = vpop.f32.mrb[0].mxu0
        %v1976 = vadd.f32 0.0, %v1975
        %v1977 = vpop.f32.mrb[0].mxu0
        %1978 = vmatprep.mubr.f32.mxu0 0.0
        %1979 = vmatmul.mubr.f32.gmra.mrb[0].mxu0 %v1907
        %v1980 = vpop.f32.mrb[0].mxu0
        %v1981 = vadd.f32 0.0, %v1980
        %v1982 = vpop.f32.mrb[0].mxu0
        %1983 = vdwg.mxu0
        %1984 = vrot.lane.b32.xlu0 %v468, 56
        %v1985 = vpop.permute.xlu0 %1984
        %1986 = vrot.lane.b32.xlu0 %v473, 56
        %v1987 = vpop.permute.xlu0 %1986
        %v1991 = vsel %vm833, %v1721, 0
        %v1994 = vsel %vm833, %v1722, 0
        %1996 = vmatprep.subr.mxu0 0.0
        %1997 = vmatpush1.msra.mxu0 %v1985
        %1998 = vmatprep.subr.mxu0 0.0
        %1999 = vmatpush1.msra.mxu0 %v1987
        %2000 = vmatprep.subr.mxu0 0.0
        %2001 = vmatpush1.msra.mxu0 0.0
        %2002 = vmatprep.subr.mxu0 0.0
        %2003 = vmatpush1.msra.mxu0 0.0
        %2004 = vmatprep.subr.mxu0 0.0
        %2005 = vmatpush1.msra.mxu0 0.0
        %2006 = vmatprep.subr.mxu0 0.0
        %2007 = vmatpush1.msra.mxu0 0.0
        %2008 = vmatprep.subr.mxu0 0.0
        %2009 = vmatpush1.msra.mxu0 0.0
        %2010 = vmatprep.subr.mxu0 0.0
        %2011 = vmatpush1.msra.mxu0 0.0
        %2012 = vmatprep.subr.mxu0 0.0
        %2013 = vmatpush1.msra.mxu0 0.0
        %2014 = vmatprep.subr.mxu0 0.0
        %2015 = vmatpush1.msra.mxu0 0.0
        %2016 = vmatprep.subr.mxu0 0.0
        %2017 = vmatpush1.msra.mxu0 0.0
        %2018 = vmatprep.subr.mxu0 0.0
        %2019 = vmatpush1.msra.mxu0 0.0
        %2020 = vmatprep.subr.mxu0 0.0
        %2021 = vmatpush1.msra.mxu0 0.0
        %2022 = vmatprep.subr.mxu0 0.0
        %2023 = vmatpush1.msra.mxu0 0.0
        %2024 = vmatprep.subr.mxu0 0.0
        %2025 = vmatpush1.msra.mxu0 0.0
        %2026 = vmatprep.subr.mxu0 0.0
        %2027 = vmatpush1.msra.mxu0 0.0
        %2028 = vmatprep.subr.mxu0 0.0
        %2029 = vmatpush1.msra.mxu0 0.0
        %2030 = vmatprep.subr.mxu0 0.0
        %2031 = vmatpush1.msra.mxu0 0.0
        %2032 = vmatprep.subr.mxu0 0.0
        %2033 = vmatpush1.msra.mxu0 0.0
        %2034 = vmatprep.subr.mxu0 0.0
        %2035 = vmatpush1.msra.mxu0 0.0
        %2036 = vmatprep.subr.mxu0 0.0
        %2037 = vmatpush1.msra.mxu0 0.0
        %2038 = vmatprep.subr.mxu0 0.0
        %2039 = vmatpush1.msra.mxu0 0.0
        %2040 = vmatprep.subr.mxu0 0.0
        %2041 = vmatpush1.msra.mxu0 0.0
        %2042 = vmatprep.subr.mxu0 0.0
        %2043 = vmatpush1.msra.mxu0 0.0
        %2044 = vmatprep.subr.mxu0 0.0
        %2045 = vmatpush1.msra.mxu0 0.0
        %2046 = vmatprep.subr.mxu0 0.0
        %2047 = vmatpush1.msra.mxu0 0.0
        %2048 = vmatprep.subr.mxu0 0.0
        %2049 = vmatpush1.msra.mxu0 0.0
        %2050 = vmatprep.subr.mxu0 0.0
        %2051 = vmatpush1.msra.mxu0 0.0
        %2052 = vmatprep.subr.mxu0 0.0
        %2053 = vmatpush1.msra.mxu0 0.0
        %2054 = vmatprep.subr.mxu0 0.0
        %2055 = vmatpush1.msra.mxu0 0.0
        %2056 = vmatprep.subr.mxu0 0.0
        %2057 = vmatpush1.msra.mxu0 0.0
        %2058 = vmatprep.subr.mxu0 0.0
        %2059 = vmatpush1.msra.mxu0 0.0
        %2060 = vmatprep.mubr.f32.mxu0 0.0
        %2061 = vmatmul.mubr.f32.gmra.mrb[0].mxu0 %v1991
        %v2062 = vpop.f32.mrb[0].mxu0
        %v2063 = vadd.f32 0.0, %v2062
        %v2064 = vpop.f32.mrb[0].mxu0
        %2065 = vmatprep.mubr.f32.mxu0 0.0
        %2066 = vmatmul.mubr.f32.gmra.mrb[0].mxu0 %v1994
        %v2067 = vpop.f32.mrb[0].mxu0
        %v2068 = vadd.f32 0.0, %v2067
        %v2069 = vpop.f32.mrb[0].mxu0
        %2070 = vdwg.mxu0
        %v2071 = vld [vmem:[#allocation8 + $0x8] sm:$0xff]
        %v2073 = vsel %vm482, %v1802, 0
        %v2076 = vsel %vm482, %v1807, 0
        %v2079 = vsel %vm482, %v1889, 0
        %v2082 = vsel %vm482, %v1894, 0
        %v2085 = vsel %vm482, %v1976, 0
        %v2088 = vsel %vm482, %v1981, 0
        %v2091 = vsel %vm482, %v2063, 0
        %v2094 = vsel %vm482, %v2068, 0
        %2096 = vmatprep.subr.mxu0 0.0
        %2097 = vmatpush1.msra.mxu0 %v2071
        %2098 = vmatprep.subr.mxu0 0.0
        %2099 = vmatpush1.msra.mxu0 0.0
        %2100 = vmatprep.subr.mxu0 0.0
        %2101 = vmatpush1.msra.mxu0 0.0
        %2102 = vmatprep.subr.mxu0 0.0
        %2103 = vmatpush1.msra.mxu0 0.0
        %2104 = vmatprep.subr.mxu0 0.0
        %2105 = vmatpush1.msra.mxu0 0.0
        %2106 = vmatprep.subr.mxu0 0.0
        %2107 = vmatpush1.msra.mxu0 0.0
        %2108 = vmatprep.subr.mxu0 0.0
        %2109 = vmatpush1.msra.mxu0 0.0
        %2110 = vmatprep.subr.mxu0 0.0
        %2111 = vmatpush1.msra.mxu0 0.0
        %2112 = vmatprep.subr.mxu0 0.0
        %2113 = vmatpush1.msra.mxu0 0.0
        %2114 = vmatprep.subr.mxu0 0.0
        %2115 = vmatpush1.msra.mxu0 0.0
        %2116 = vmatprep.subr.mxu0 0.0
        %2117 = vmatpush1.msra.mxu0 0.0
        %2118 = vmatprep.subr.mxu0 0.0
        %2119 = vmatpush1.msra.mxu0 0.0
        %2120 = vmatprep.subr.mxu0 0.0
        %2121 = vmatpush1.msra.mxu0 0.0
        %2122 = vmatprep.subr.mxu0 0.0
        %2123 = vmatpush1.msra.mxu0 0.0
        %2124 = vmatprep.subr.mxu0 0.0
        %2125 = vmatpush1.msra.mxu0 0.0
        %2126 = vmatprep.subr.mxu0 0.0
        %2127 = vmatpush1.msra.mxu0 0.0
        %2128 = vmatprep.subr.mxu0 0.0
        %2129 = vmatpush1.msra.mxu0 0.0
        %2130 = vmatprep.subr.mxu0 0.0
        %2131 = vmatpush1.msra.mxu0 0.0
        %2132 = vmatprep.subr.mxu0 0.0
        %2133 = vmatpush1.msra.mxu0 0.0
        %2134 = vmatprep.subr.mxu0 0.0
        %2135 = vmatpush1.msra.mxu0 0.0
        %2136 = vmatprep.subr.mxu0 0.0
        %2137 = vmatpush1.msra.mxu0 0.0
        %2138 = vmatprep.subr.mxu0 0.0
        %2139 = vmatpush1.msra.mxu0 0.0
        %2140 = vmatprep.subr.mxu0 0.0
        %2141 = vmatpush1.msra.mxu0 0.0
        %2142 = vmatprep.subr.mxu0 0.0
        %2143 = vmatpush1.msra.mxu0 0.0
        %2144 = vmatprep.subr.mxu0 0.0
        %2145 = vmatpush1.msra.mxu0 0.0
        %2146 = vmatprep.subr.mxu0 0.0
        %2147 = vmatpush1.msra.mxu0 0.0
        %2148 = vmatprep.subr.mxu0 0.0
        %2149 = vmatpush1.msra.mxu0 0.0
        %2150 = vmatprep.subr.mxu0 0.0
        %2151 = vmatpush1.msra.mxu0 0.0
        %2152 = vmatprep.subr.mxu0 0.0
        %2153 = vmatpush1.msra.mxu0 0.0
        %2154 = vmatprep.subr.mxu0 0.0
        %2155 = vmatpush1.msra.mxu0 0.0
        %2156 = vmatprep.subr.mxu0 0.0
        %2157 = vmatpush1.msra.mxu0 0.0
        %2158 = vmatprep.subr.mxu0 0.0
        %2159 = vmatpush1.msra.mxu0 0.0
        %2160 = vmatprep.mubr.f32.mxu0 0.0
        %2161 = vmatmul.mubr.f32.gmra.mrb[0].mxu0 %v2073
        %v2162 = vpop.f32.mrb[0].mxu0
        %v2163 = vadd.f32 0.0, %v2162
        %v2164 = vpop.f32.mrb[0].mxu0
        %2165 = vmatprep.mubr.f32.mxu0 0.0
        %2166 = vmatmul.mubr.f32.gmra.mrb[0].mxu0 %v2076
        %v2167 = vpop.f32.mrb[0].mxu0
        %v2168 = vadd.f32 0.0, %v2167
        %v2169 = vpop.f32.mrb[0].mxu0
        %2170 = vmatprep.mubr.f32.mxu0 0.0
        %2171 = vmatmul.mubr.f32.gmra.mrb[0].mxu0 %v2079
        %v2172 = vpop.f32.mrb[0].mxu0
        %v2173 = vadd.f32 0.0, %v2172
        %v2174 = vpop.f32.mrb[0].mxu0
        %2175 = vmatprep.mubr.f32.mxu0 0.0
        %2176 = vmatmul.mubr.f32.gmra.mrb[0].mxu0 %v2082
        %v2177 = vpop.f32.mrb[0].mxu0
        %v2178 = vadd.f32 0.0, %v2177
        %v2179 = vpop.f32.mrb[0].mxu0
        %2180 = vmatprep.mubr.f32.mxu0 0.0
        %2181 = vmatmul.mubr.f32.gmra.mrb[0].mxu0 %v2085
        %v2182 = vpop.f32.mrb[0].mxu0
        %v2183 = vadd.f32 0.0, %v2182
        %v2184 = vpop.f32.mrb[0].mxu0
        %2185 = vmatprep.mubr.f32.mxu0 0.0
        %2186 = vmatmul.mubr.f32.gmra.mrb[0].mxu0 %v2088
        %v2187 = vpop.f32.mrb[0].mxu0
        %v2188 = vadd.f32 0.0, %v2187
        %v2189 = vpop.f32.mrb[0].mxu0
        %2190 = vmatprep.mubr.f32.mxu0 0.0
        %2191 = vmatmul.mubr.f32.gmra.mrb[0].mxu0 %v2091
        %v2192 = vpop.f32.mrb[0].mxu0
        %v2193 = vadd.f32 0.0, %v2192
        %v2194 = vpop.f32.mrb[0].mxu0
        %2195 = vmatprep.mubr.f32.mxu0 0.0
        %2196 = vmatmul.mubr.f32.gmra.mrb[0].mxu0 %v2094
        %v2197 = vpop.f32.mrb[0].mxu0
        %v2198 = vadd.f32 0.0, %v2197
        %v2199 = vpop.f32.mrb[0].mxu0
        %2200 = vdwg.mxu0
        %v2202 = vsel %vm482, %v1001, 0
        %v2205 = vsel %vm482, %v1006, 0
        %v2208 = vsel %vm482, %v1088, 0
        %v2211 = vsel %vm482, %v1093, 0
        %v2214 = vsel %vm482, %v1175, 0
        %v2217 = vsel %vm482, %v1180, 0
        %v2220 = vsel %vm482, %v1262, 0
        %v2223 = vsel %vm482, %v1267, 0
        %2225 = vmatprep.subr.mxu0 0.0
        %2226 = vmatpush1.msra.mxu0 %v1270
        %2227 = vmatprep.subr.mxu0 0.0
        %2228 = vmatpush1.msra.mxu0 0.0
        %2229 = vmatprep.subr.mxu0 0.0
        %2230 = vmatpush1.msra.mxu0 0.0
        %2231 = vmatprep.subr.mxu0 0.0
        %2232 = vmatpush1.msra.mxu0 0.0
        %2233 = vmatprep.subr.mxu0 0.0
        %2234 = vmatpush1.msra.mxu0 0.0
        %2235 = vmatprep.subr.mxu0 0.0
        %2236 = vmatpush1.msra.mxu0 0.0
        %2237 = vmatprep.subr.mxu0 0.0
        %2238 = vmatpush1.msra.mxu0 0.0
        %2239 = vmatprep.subr.mxu0 0.0
        %2240 = vmatpush1.msra.mxu0 0.0
        %2241 = vmatprep.subr.mxu0 0.0
        %2242 = vmatpush1.msra.mxu0 0.0
        %2243 = vmatprep.subr.mxu0 0.0
        %2244 = vmatpush1.msra.mxu0 0.0
        %2245 = vmatprep.subr.mxu0 0.0
        %2246 = vmatpush1.msra.mxu0 0.0
        %2247 = vmatprep.subr.mxu0 0.0
        %2248 = vmatpush1.msra.mxu0 0.0
        %2249 = vmatprep.subr.mxu0 0.0
        %2250 = vmatpush1.msra.mxu0 0.0
        %2251 = vmatprep.subr.mxu0 0.0
        %2252 = vmatpush1.msra.mxu0 0.0
        %2253 = vmatprep.subr.mxu0 0.0
        %2254 = vmatpush1.msra.mxu0 0.0
        %2255 = vmatprep.subr.mxu0 0.0
        %2256 = vmatpush1.msra.mxu0 0.0
        %2257 = vmatprep.subr.mxu0 0.0
        %2258 = vmatpush1.msra.mxu0 0.0
        %2259 = vmatprep.subr.mxu0 0.0
        %2260 = vmatpush1.msra.mxu0 0.0
        %2261 = vmatprep.subr.mxu0 0.0
        %2262 = vmatpush1.msra.mxu0 0.0
        %2263 = vmatprep.subr.mxu0 0.0
        %2264 = vmatpush1.msra.mxu0 0.0
        %2265 = vmatprep.subr.mxu0 0.0
        %2266 = vmatpush1.msra.mxu0 0.0
        %2267 = vmatprep.subr.mxu0 0.0
        %2268 = vmatpush1.msra.mxu0 0.0
        %2269 = vmatprep.subr.mxu0 0.0
        %2270 = vmatpush1.msra.mxu0 0.0
        %2271 = vmatprep.subr.mxu0 0.0
        %2272 = vmatpush1.msra.mxu0 0.0
        %2273 = vmatprep.subr.mxu0 0.0
        %2274 = vmatpush1.msra.mxu0 0.0
        %2275 = vmatprep.subr.mxu0 0.0
        %2276 = vmatpush1.msra.mxu0 0.0
        %2277 = vmatprep.subr.mxu0 0.0
        %2278 = vmatpush1.msra.mxu0 0.0
        %2279 = vmatprep.subr.mxu0 0.0
        %2280 = vmatpush1.msra.mxu0 0.0
        %2281 = vmatprep.subr.mxu0 0.0
        %2282 = vmatpush1.msra.mxu0 0.0
        %2283 = vmatprep.subr.mxu0 0.0
        %2284 = vmatpush1.msra.mxu0 0.0
        %2285 = vmatprep.subr.mxu0 0.0
        %2286 = vmatpush1.msra.mxu0 0.0
        %2287 = vmatprep.subr.mxu0 0.0
        %2288 = vmatpush1.msra.mxu0 0.0
        %2289 = vmatprep.mubr.f32.mxu0 0.0
        %2290 = vmatmul.mubr.f32.gmra.mrb[0].mxu0 %v2202
        %v2291 = vpop.f32.mrb[0].mxu0
        %v2292 = vadd.f32 %v2163, %v2291
        %v2293 = vpop.f32.mrb[0].mxu0
        %2294 = vmatprep.mubr.f32.mxu0 0.0
        %2295 = vmatmul.mubr.f32.gmra.mrb[0].mxu0 %v2205
        %v2296 = vpop.f32.mrb[0].mxu0
        %v2297 = vadd.f32 %v2168, %v2296
        %v2298 = vpop.f32.mrb[0].mxu0
        %2299 = vmatprep.mubr.f32.mxu0 0.0
        %2300 = vmatmul.mubr.f32.gmra.mrb[0].mxu0 %v2208
        %v2301 = vpop.f32.mrb[0].mxu0
        %v2302 = vadd.f32 %v2173, %v2301
        %v2303 = vpop.f32.mrb[0].mxu0
        %2304 = vmatprep.mubr.f32.mxu0 0.0
        %2305 = vmatmul.mubr.f32.gmra.mrb[0].mxu0 %v2211
        %v2306 = vpop.f32.mrb[0].mxu0
        %v2307 = vadd.f32 %v2178, %v2306
        %v2308 = vpop.f32.mrb[0].mxu0
        %2309 = vmatprep.mubr.f32.mxu0 0.0
        %2310 = vmatmul.mubr.f32.gmra.mrb[0].mxu0 %v2214
        %v2311 = vpop.f32.mrb[0].mxu0
        %v2312 = vadd.f32 %v2183, %v2311
        %v2313 = vpop.f32.mrb[0].mxu0
        %2314 = vmatprep.mubr.f32.mxu0 0.0
        %2315 = vmatmul.mubr.f32.gmra.mrb[0].mxu0 %v2217
        %v2316 = vpop.f32.mrb[0].mxu0
        %v2317 = vadd.f32 %v2188, %v2316
        %v2318 = vpop.f32.mrb[0].mxu0
        %2319 = vmatprep.mubr.f32.mxu0 0.0
        %2320 = vmatmul.mubr.f32.gmra.mrb[0].mxu0 %v2220
        %v2321 = vpop.f32.mrb[0].mxu0
        %v2322 = vadd.f32 %v2193, %v2321
        %v2323 = vpop.f32.mrb[0].mxu0
        %2324 = vmatprep.mubr.f32.mxu0 0.0
        %2325 = vmatmul.mubr.f32.gmra.mrb[0].mxu0 %v2223
        %v2326 = vpop.f32.mrb[0].mxu0
        %v2327 = vadd.f32 %v2198, %v2326
        %v2328 = vpop.f32.mrb[0].mxu0
        %2329 = vdwg.mxu0
        %2330 = vrot.lane.b32.xlu0 %v438, 112
        %v2331 = vpop.permute.xlu0 %2330
        %2332 = vrot.lane.b32.xlu0 %v443, 112
        %v2333 = vpop.permute.xlu0 %2332
        %2334 = vrot.lane.b32.xlu0 %v438, 80
        %v2335 = vpop.permute.xlu0 %2334
        %2336 = vrot.lane.b32.xlu0 %v443, 80
        %v2337 = vpop.permute.xlu0 %2336
        %v2338 = vsel %vm482, %v2331, 0
        %v2340 = vsel %vm482, %v2333, 0
        %v2342 = vsel %vm482, %v2335, 0
        %v2344 = vsel %vm482, %v2337, 0
        %2346 = vmatprep.subr.mxu0 0.0
        %2347 = vmatpush1.xpose.msra.mxu0 %v2342
        %2348 = vmatprep.subr.mxu0 0.0
        %2349 = vmatpush1.xpose.msra.mxu0 %v2344
        %2350 = vmatprep.subr.mxu0 0.0
        %2351 = vmatpush1.xpose.msra.mxu0 0.0
        %2352 = vmatprep.subr.mxu0 0.0
        %2353 = vmatpush1.xpose.msra.mxu0 0.0
        %2354 = vmatprep.subr.mxu0 0.0
        %2355 = vmatpush1.xpose.msra.mxu0 0.0
        %2356 = vmatprep.subr.mxu0 0.0
        %2357 = vmatpush1.xpose.msra.mxu0 0.0
        %2358 = vmatprep.subr.mxu0 0.0
        %2359 = vmatpush1.xpose.msra.mxu0 0.0
        %2360 = vmatprep.subr.mxu0 0.0
        %2361 = vmatpush1.xpose.msra.mxu0 0.0
        %2362 = vmatprep.subr.mxu0 0.0
        %2363 = vmatpush1.xpose.msra.mxu0 0.0
        %2364 = vmatprep.subr.mxu0 0.0
        %2365 = vmatpush1.xpose.msra.mxu0 0.0
        %2366 = vmatprep.subr.mxu0 0.0
        %2367 = vmatpush1.xpose.msra.mxu0 0.0
        %2368 = vmatprep.subr.mxu0 0.0
        %2369 = vmatpush1.xpose.msra.mxu0 0.0
        %2370 = vmatprep.subr.mxu0 0.0
        %2371 = vmatpush1.xpose.msra.mxu0 0.0
        %2372 = vmatprep.subr.mxu0 0.0
        %2373 = vmatpush1.xpose.msra.mxu0 0.0
        %2374 = vmatprep.subr.mxu0 0.0
        %2375 = vmatpush1.xpose.msra.mxu0 0.0
        %2376 = vmatprep.subr.mxu0 0.0
        %2377 = vmatpush1.xpose.msra.mxu0 0.0
        %2378 = vmatprep.subr.mxu0 0.0
        %2379 = vmatpush1.xpose.msra.mxu0 0.0
        %2380 = vmatprep.subr.mxu0 0.0
        %2381 = vmatpush1.xpose.msra.mxu0 0.0
        %2382 = vmatprep.subr.mxu0 0.0
        %2383 = vmatpush1.xpose.msra.mxu0 0.0
        %2384 = vmatprep.subr.mxu0 0.0
        %2385 = vmatpush1.xpose.msra.mxu0 0.0
        %2386 = vmatprep.subr.mxu0 0.0
        %2387 = vmatpush1.xpose.msra.mxu0 0.0
        %2388 = vmatprep.subr.mxu0 0.0
        %2389 = vmatpush1.xpose.msra.mxu0 0.0
        %2390 = vmatprep.subr.mxu0 0.0
        %2391 = vmatpush1.xpose.msra.mxu0 0.0
        %2392 = vmatprep.subr.mxu0 0.0
        %2393 = vmatpush1.xpose.msra.mxu0 0.0
        %2394 = vmatprep.subr.mxu0 0.0
        %2395 = vmatpush1.xpose.msra.mxu0 0.0
        %2396 = vmatprep.subr.mxu0 0.0
        %2397 = vmatpush1.xpose.msra.mxu0 0.0
        %2398 = vmatprep.subr.mxu0 0.0
        %2399 = vmatpush1.xpose.msra.mxu0 0.0
        %2400 = vmatprep.subr.mxu0 0.0
        %2401 = vmatpush1.xpose.msra.mxu0 0.0
        %2402 = vmatprep.subr.mxu0 0.0
        %2403 = vmatpush1.xpose.msra.mxu0 0.0
        %2404 = vmatprep.subr.mxu0 0.0
        %2405 = vmatpush1.xpose.msra.mxu0 0.0
        %2406 = vmatprep.subr.mxu0 0.0
        %2407 = vmatpush1.xpose.msra.mxu0 0.0
        %2408 = vmatprep.subr.mxu0 0.0
        %2409 = vmatpush1.xpose.msra.mxu0 0.0
        %2410 = vmatprep.mubr.f32.mxu0 0.0
        %2411 = vmatmul.mubr.f32.gmra.mrb[0].mxu0 %v2338
        %v2412 = vpop.f32.mrb[0].mxu0
        %v2413 = vadd.f32 0.0, %v2412
        %v2414 = vpop.f32.mrb[0].mxu0
        %2415 = vmatprep.mubr.f32.mxu0 0.0
        %2416 = vmatmul.mubr.f32.gmra.mrb[0].mxu0 %v2340
        %v2417 = vpop.f32.mrb[0].mxu0
        %v2418 = vadd.f32 0.0, %v2417
        %v2419 = vpop.f32.mrb[0].mxu0
        %2420 = vdwg.mxu0
        %2421 = vrot.lane.b32.xlu0 %v448, 112
        %v2422 = vpop.permute.xlu0 %2421
        %2423 = vrot.lane.b32.xlu0 %v453, 112
        %v2424 = vpop.permute.xlu0 %2423
        %2425 = vrot.lane.b32.xlu0 %v448, 80
        %v2426 = vpop.permute.xlu0 %2425
        %2427 = vrot.lane.b32.xlu0 %v453, 80
        %v2428 = vpop.permute.xlu0 %2427
        %v2429 = vsel %vm482, %v2422, 0
        %v2431 = vsel %vm482, %v2424, 0
        %v2433 = vsel %vm482, %v2426, 0
        %v2435 = vsel %vm482, %v2428, 0
        %2437 = vmatprep.subr.mxu0 0.0
        %2438 = vmatpush1.xpose.msra.mxu0 %v2433
        %2439 = vmatprep.subr.mxu0 0.0
        %2440 = vmatpush1.xpose.msra.mxu0 %v2435
        %2441 = vmatprep.subr.mxu0 0.0
        %2442 = vmatpush1.xpose.msra.mxu0 0.0
        %2443 = vmatprep.subr.mxu0 0.0
        %2444 = vmatpush1.xpose.msra.mxu0 0.0
        %2445 = vmatprep.subr.mxu0 0.0
        %2446 = vmatpush1.xpose.msra.mxu0 0.0
        %2447 = vmatprep.subr.mxu0 0.0
        %2448 = vmatpush1.xpose.msra.mxu0 0.0
        %2449 = vmatprep.subr.mxu0 0.0
        %2450 = vmatpush1.xpose.msra.mxu0 0.0
        %2451 = vmatprep.subr.mxu0 0.0
        %2452 = vmatpush1.xpose.msra.mxu0 0.0
        %2453 = vmatprep.subr.mxu0 0.0
        %2454 = vmatpush1.xpose.msra.mxu0 0.0
        %2455 = vmatprep.subr.mxu0 0.0
        %2456 = vmatpush1.xpose.msra.mxu0 0.0
        %2457 = vmatprep.subr.mxu0 0.0
        %2458 = vmatpush1.xpose.msra.mxu0 0.0
        %2459 = vmatprep.subr.mxu0 0.0
        %2460 = vmatpush1.xpose.msra.mxu0 0.0
        %2461 = vmatprep.subr.mxu0 0.0
        %2462 = vmatpush1.xpose.msra.mxu0 0.0
        %2463 = vmatprep.subr.mxu0 0.0
        %2464 = vmatpush1.xpose.msra.mxu0 0.0
        %2465 = vmatprep.subr.mxu0 0.0
        %2466 = vmatpush1.xpose.msra.mxu0 0.0
        %2467 = vmatprep.subr.mxu0 0.0
        %2468 = vmatpush1.xpose.msra.mxu0 0.0
        %2469 = vmatprep.subr.mxu0 0.0
        %2470 = vmatpush1.xpose.msra.mxu0 0.0
        %2471 = vmatprep.subr.mxu0 0.0
        %2472 = vmatpush1.xpose.msra.mxu0 0.0
        %2473 = vmatprep.subr.mxu0 0.0
        %2474 = vmatpush1.xpose.msra.mxu0 0.0
        %2475 = vmatprep.subr.mxu0 0.0
        %2476 = vmatpush1.xpose.msra.mxu0 0.0
        %2477 = vmatprep.subr.mxu0 0.0
        %2478 = vmatpush1.xpose.msra.mxu0 0.0
        %2479 = vmatprep.subr.mxu0 0.0
        %2480 = vmatpush1.xpose.msra.mxu0 0.0
        %2481 = vmatprep.subr.mxu0 0.0
        %2482 = vmatpush1.xpose.msra.mxu0 0.0
        %2483 = vmatprep.subr.mxu0 0.0
        %2484 = vmatpush1.xpose.msra.mxu0 0.0
        %2485 = vmatprep.subr.mxu0 0.0
        %2486 = vmatpush1.xpose.msra.mxu0 0.0
        %2487 = vmatprep.subr.mxu0 0.0
        %2488 = vmatpush1.xpose.msra.mxu0 0.0
        %2489 = vmatprep.subr.mxu0 0.0
        %2490 = vmatpush1.xpose.msra.mxu0 0.0
        %2491 = vmatprep.subr.mxu0 0.0
        %2492 = vmatpush1.xpose.msra.mxu0 0.0
        %2493 = vmatprep.subr.mxu0 0.0
        %2494 = vmatpush1.xpose.msra.mxu0 0.0
        %2495 = vmatprep.subr.mxu0 0.0
        %2496 = vmatpush1.xpose.msra.mxu0 0.0
        %2497 = vmatprep.subr.mxu0 0.0
        %2498 = vmatpush1.xpose.msra.mxu0 0.0
        %2499 = vmatprep.subr.mxu0 0.0
        %2500 = vmatpush1.xpose.msra.mxu0 0.0
        %2501 = vmatprep.mubr.f32.mxu0 0.0
        %2502 = vmatmul.mubr.f32.gmra.mrb[0].mxu0 %v2429
        %v2503 = vpop.f32.mrb[0].mxu0
        %v2504 = vadd.f32 0.0, %v2503
        %v2505 = vpop.f32.mrb[0].mxu0
        %2506 = vmatprep.mubr.f32.mxu0 0.0
        %2507 = vmatmul.mubr.f32.gmra.mrb[0].mxu0 %v2431
        %v2508 = vpop.f32.mrb[0].mxu0
        %v2509 = vadd.f32 0.0, %v2508
        %v2510 = vpop.f32.mrb[0].mxu0
        %2511 = vdwg.mxu0
        %2512 = vrot.lane.b32.xlu0 %v458, 112
        %v2513 = vpop.permute.xlu0 %2512
        %2514 = vrot.lane.b32.xlu0 %v463, 112
        %v2515 = vpop.permute.xlu0 %2514
        %2516 = vrot.lane.b32.xlu0 %v458, 80
        %v2517 = vpop.permute.xlu0 %2516
        %2518 = vrot.lane.b32.xlu0 %v463, 80
        %v2519 = vpop.permute.xlu0 %2518
        %v2520 = vsel %vm482, %v2513, 0
        %v2522 = vsel %vm482, %v2515, 0
        %v2524 = vsel %vm482, %v2517, 0
        %v2526 = vsel %vm482, %v2519, 0
        %2528 = vmatprep.subr.mxu0 0.0
        %2529 = vmatpush1.xpose.msra.mxu0 %v2524
        %2530 = vmatprep.subr.mxu0 0.0
        %2531 = vmatpush1.xpose.msra.mxu0 %v2526
        %2532 = vmatprep.subr.mxu0 0.0
        %2533 = vmatpush1.xpose.msra.mxu0 0.0
        %2534 = vmatprep.subr.mxu0 0.0
        %2535 = vmatpush1.xpose.msra.mxu0 0.0
        %2536 = vmatprep.subr.mxu0 0.0
        %2537 = vmatpush1.xpose.msra.mxu0 0.0
        %2538 = vmatprep.subr.mxu0 0.0
        %2539 = vmatpush1.xpose.msra.mxu0 0.0
        %2540 = vmatprep.subr.mxu0 0.0
        %2541 = vmatpush1.xpose.msra.mxu0 0.0
        %2542 = vmatprep.subr.mxu0 0.0
        %2543 = vmatpush1.xpose.msra.mxu0 0.0
        %2544 = vmatprep.subr.mxu0 0.0
        %2545 = vmatpush1.xpose.msra.mxu0 0.0
        %2546 = vmatprep.subr.mxu0 0.0
        %2547 = vmatpush1.xpose.msra.mxu0 0.0
        %2548 = vmatprep.subr.mxu0 0.0
        %2549 = vmatpush1.xpose.msra.mxu0 0.0
        %2550 = vmatprep.subr.mxu0 0.0
        %2551 = vmatpush1.xpose.msra.mxu0 0.0
        %2552 = vmatprep.subr.mxu0 0.0
        %2553 = vmatpush1.xpose.msra.mxu0 0.0
        %2554 = vmatprep.subr.mxu0 0.0
        %2555 = vmatpush1.xpose.msra.mxu0 0.0
        %2556 = vmatprep.subr.mxu0 0.0
        %2557 = vmatpush1.xpose.msra.mxu0 0.0
        %2558 = vmatprep.subr.mxu0 0.0
        %2559 = vmatpush1.xpose.msra.mxu0 0.0
        %2560 = vmatprep.subr.mxu0 0.0
        %2561 = vmatpush1.xpose.msra.mxu0 0.0
        %2562 = vmatprep.subr.mxu0 0.0
        %2563 = vmatpush1.xpose.msra.mxu0 0.0
        %2564 = vmatprep.subr.mxu0 0.0
        %2565 = vmatpush1.xpose.msra.mxu0 0.0
        %2566 = vmatprep.subr.mxu0 0.0
        %2567 = vmatpush1.xpose.msra.mxu0 0.0
        %2568 = vmatprep.subr.mxu0 0.0
        %2569 = vmatpush1.xpose.msra.mxu0 0.0
        %2570 = vmatprep.subr.mxu0 0.0
        %2571 = vmatpush1.xpose.msra.mxu0 0.0
        %2572 = vmatprep.subr.mxu0 0.0
        %2573 = vmatpush1.xpose.msra.mxu0 0.0
        %2574 = vmatprep.subr.mxu0 0.0
        %2575 = vmatpush1.xpose.msra.mxu0 0.0
        %2576 = vmatprep.subr.mxu0 0.0
        %2577 = vmatpush1.xpose.msra.mxu0 0.0
        %2578 = vmatprep.subr.mxu0 0.0
        %2579 = vmatpush1.xpose.msra.mxu0 0.0
        %2580 = vmatprep.subr.mxu0 0.0
        %2581 = vmatpush1.xpose.msra.mxu0 0.0
        %2582 = vmatprep.subr.mxu0 0.0
        %2583 = vmatpush1.xpose.msra.mxu0 0.0
        %2584 = vmatprep.subr.mxu0 0.0
        %2585 = vmatpush1.xpose.msra.mxu0 0.0
        %2586 = vmatprep.subr.mxu0 0.0
        %2587 = vmatpush1.xpose.msra.mxu0 0.0
        %2588 = vmatprep.subr.mxu0 0.0
        %2589 = vmatpush1.xpose.msra.mxu0 0.0
        %2590 = vmatprep.subr.mxu0 0.0
        %2591 = vmatpush1.xpose.msra.mxu0 0.0
        %2592 = vmatprep.mubr.f32.mxu0 0.0
        %2593 = vmatmul.mubr.f32.gmra.mrb[0].mxu0 %v2520
        %v2594 = vpop.f32.mrb[0].mxu0
        %v2595 = vadd.f32 0.0, %v2594
        %v2596 = vpop.f32.mrb[0].mxu0
        %2597 = vmatprep.mubr.f32.mxu0 0.0
        %2598 = vmatmul.mubr.f32.gmra.mrb[0].mxu0 %v2522
        %v2599 = vpop.f32.mrb[0].mxu0
        %v2600 = vadd.f32 0.0, %v2599
        %v2601 = vpop.f32.mrb[0].mxu0
        %2602 = vdwg.mxu0
        %2603 = vrot.lane.b32.xlu0 %v468, 112
        %v2604 = vpop.permute.xlu0 %2603
        %2605 = vrot.lane.b32.xlu0 %v473, 112
        %v2606 = vpop.permute.xlu0 %2605
        %2607 = vrot.lane.b32.xlu0 %v468, 80
        %v2608 = vpop.permute.xlu0 %2607
        %2609 = vrot.lane.b32.xlu0 %v473, 80
        %v2610 = vpop.permute.xlu0 %2609
        %v2611 = vsel %vm482, %v2604, 0
        %v2613 = vsel %vm482, %v2606, 0
        %v2615 = vsel %vm482, %v2608, 0
        %v2617 = vsel %vm482, %v2610, 0
        %2619 = vmatprep.subr.mxu0 0.0
        %2620 = vmatpush1.xpose.msra.mxu0 %v2615
        %2621 = vmatprep.subr.mxu0 0.0
        %2622 = vmatpush1.xpose.msra.mxu0 %v2617
        %2623 = vmatprep.subr.mxu0 0.0
        %2624 = vmatpush1.xpose.msra.mxu0 0.0
        %2625 = vmatprep.subr.mxu0 0.0
        %2626 = vmatpush1.xpose.msra.mxu0 0.0
        %2627 = vmatprep.subr.mxu0 0.0
        %2628 = vmatpush1.xpose.msra.mxu0 0.0
        %2629 = vmatprep.subr.mxu0 0.0
        %2630 = vmatpush1.xpose.msra.mxu0 0.0
        %2631 = vmatprep.subr.mxu0 0.0
        %2632 = vmatpush1.xpose.msra.mxu0 0.0
        %2633 = vmatprep.subr.mxu0 0.0
        %2634 = vmatpush1.xpose.msra.mxu0 0.0
        %2635 = vmatprep.subr.mxu0 0.0
        %2636 = vmatpush1.xpose.msra.mxu0 0.0
        %2637 = vmatprep.subr.mxu0 0.0
        %2638 = vmatpush1.xpose.msra.mxu0 0.0
        %2639 = vmatprep.subr.mxu0 0.0
        %2640 = vmatpush1.xpose.msra.mxu0 0.0
        %2641 = vmatprep.subr.mxu0 0.0
        %2642 = vmatpush1.xpose.msra.mxu0 0.0
        %2643 = vmatprep.subr.mxu0 0.0
        %2644 = vmatpush1.xpose.msra.mxu0 0.0
        %2645 = vmatprep.subr.mxu0 0.0
        %2646 = vmatpush1.xpose.msra.mxu0 0.0
        %2647 = vmatprep.subr.mxu0 0.0
        %2648 = vmatpush1.xpose.msra.mxu0 0.0
        %2649 = vmatprep.subr.mxu0 0.0
        %2650 = vmatpush1.xpose.msra.mxu0 0.0
        %2651 = vmatprep.subr.mxu0 0.0
        %2652 = vmatpush1.xpose.msra.mxu0 0.0
        %2653 = vmatprep.subr.mxu0 0.0
        %2654 = vmatpush1.xpose.msra.mxu0 0.0
        %2655 = vmatprep.subr.mxu0 0.0
        %2656 = vmatpush1.xpose.msra.mxu0 0.0
        %2657 = vmatprep.subr.mxu0 0.0
        %2658 = vmatpush1.xpose.msra.mxu0 0.0
        %2659 = vmatprep.subr.mxu0 0.0
        %2660 = vmatpush1.xpose.msra.mxu0 0.0
        %2661 = vmatprep.subr.mxu0 0.0
        %2662 = vmatpush1.xpose.msra.mxu0 0.0
        %2663 = vmatprep.subr.mxu0 0.0
        %2664 = vmatpush1.xpose.msra.mxu0 0.0
        %2665 = vmatprep.subr.mxu0 0.0
        %2666 = vmatpush1.xpose.msra.mxu0 0.0
        %2667 = vmatprep.subr.mxu0 0.0
        %2668 = vmatpush1.xpose.msra.mxu0 0.0
        %2669 = vmatprep.subr.mxu0 0.0
        %2670 = vmatpush1.xpose.msra.mxu0 0.0
        %2671 = vmatprep.subr.mxu0 0.0
        %2672 = vmatpush1.xpose.msra.mxu0 0.0
        %2673 = vmatprep.subr.mxu0 0.0
        %2674 = vmatpush1.xpose.msra.mxu0 0.0
        %2675 = vmatprep.subr.mxu0 0.0
        %2676 = vmatpush1.xpose.msra.mxu0 0.0
        %2677 = vmatprep.subr.mxu0 0.0
        %2678 = vmatpush1.xpose.msra.mxu0 0.0
        %2679 = vmatprep.subr.mxu0 0.0
        %2680 = vmatpush1.xpose.msra.mxu0 0.0
        %2681 = vmatprep.subr.mxu0 0.0
        %2682 = vmatpush1.xpose.msra.mxu0 0.0
        %2683 = vmatprep.mubr.f32.mxu0 0.0
        %2684 = vmatmul.mubr.f32.gmra.mrb[0].mxu0 %v2611
        %v2685 = vpop.f32.mrb[0].mxu0
        %v2686 = vadd.f32 0.0, %v2685
        %v2687 = vpop.f32.mrb[0].mxu0
        %2688 = vmatprep.mubr.f32.mxu0 0.0
        %2689 = vmatmul.mubr.f32.gmra.mrb[0].mxu0 %v2613
        %v2690 = vpop.f32.mrb[0].mxu0
        %v2691 = vadd.f32 0.0, %v2690
        %v2692 = vpop.f32.mrb[0].mxu0
        %2693 = vdwg.mxu0
        %v2694 = vsel %vm833, %v2413, -inf
        %2695 = vmax.xlane.f32.xlu0 %v2694
        %v2696 = vpop.xlane.xlu0 %2695
        %v2697 = vsel %vm833, %v2418, -inf
        %2698 = vmax.xlane.f32.xlu0 %v2697
        %v2699 = vpop.xlane.xlu0 %2698
        %v2700 = vsel %vm833, %v2504, -inf
        %2701 = vmax.xlane.f32.xlu0 %v2700
        %v2702 = vpop.xlane.xlu0 %2701
        %v2703 = vsel %vm833, %v2509, -inf
        %2704 = vmax.xlane.f32.xlu0 %v2703
        %v2705 = vpop.xlane.xlu0 %2704
        %v2706 = vsel %vm833, %v2595, -inf
        %2707 = vmax.xlane.f32.xlu0 %v2706
        %v2708 = vpop.xlane.xlu0 %2707
        %v2709 = vsel %vm833, %v2600, -inf
        %2710 = vmax.xlane.f32.xlu0 %v2709
        %v2711 = vpop.xlane.xlu0 %2710
        %v2712 = vsel %vm833, %v2686, -inf
        %2713 = vmax.xlane.f32.xlu0 %v2712
        %v2714 = vpop.xlane.xlu0 %2713
        %v2715 = vsel %vm833, %v2691, -inf
        %2716 = vmax.xlane.f32.xlu0 %v2715
        %v2717 = vpop.xlane.xlu0 %2716
        %v2718 = vsub.f32 %v2413, %v2696
        %v2719 = vsub.f32 %v2418, %v2699
        %v2720 = vsub.f32 %v2504, %v2702
        %v2721 = vsub.f32 %v2509, %v2705
        %v2722 = vsub.f32 %v2595, %v2708
        %v2723 = vsub.f32 %v2600, %v2711
        %v2724 = vsub.f32 %v2686, %v2714
        %v2725 = vsub.f32 %v2691, %v2717
        %v2726 = vmul.f32 %v2718, 1.442695
        %v2727 = vpow.pop %v2726
        %v2728 = vmul.f32 %v2719, 1.442695
        %v2729 = vpow.pop %v2728
        %v2730 = vmul.f32 %v2720, 1.442695
        %v2731 = vpow.pop %v2730
        %v2732 = vmul.f32 %v2721, 1.442695
        %v2733 = vpow.pop %v2732
        %v2734 = vmul.f32 %v2722, 1.442695
        %v2735 = vpow.pop %v2734
        %v2736 = vmul.f32 %v2723, 1.442695
        %v2737 = vpow.pop %v2736
        %v2738 = vmul.f32 %v2724, 1.442695
        %v2739 = vpow.pop %v2738
        %v2740 = vmul.f32 %v2725, 1.442695
        %v2741 = vpow.pop %v2740
        %v2742 = vsel %vm833, %v2727, 0.0
        %2743 = vadd.xlane.f32.xlu0 %v2742
        %v2744 = vpop.xlane.xlu0 %2743
        %v2745 = vsel %vm833, %v2729, 0.0
        %2746 = vadd.xlane.f32.xlu0 %v2745
        %v2747 = vpop.xlane.xlu0 %2746
        %v2748 = vsel %vm833, %v2731, 0.0
        %2749 = vadd.xlane.f32.xlu0 %v2748
        %v2750 = vpop.xlane.xlu0 %2749
        %v2751 = vsel %vm833, %v2733, 0.0
        %2752 = vadd.xlane.f32.xlu0 %v2751
        %v2753 = vpop.xlane.xlu0 %2752
        %v2754 = vsel %vm833, %v2735, 0.0
        %2755 = vadd.xlane.f32.xlu0 %v2754
        %v2756 = vpop.xlane.xlu0 %2755
        %v2757 = vsel %vm833, %v2737, 0.0
        %2758 = vadd.xlane.f32.xlu0 %v2757
        %v2759 = vpop.xlane.xlu0 %2758
        %v2760 = vsel %vm833, %v2739, 0.0
        %2761 = vadd.xlane.f32.xlu0 %v2760
        %v2762 = vpop.xlane.xlu0 %2761
        %v2763 = vsel %vm833, %v2741, 0.0
        %2764 = vadd.xlane.f32.xlu0 %v2763
        %v2765 = vpop.xlane.xlu0 %2764
        %v2766 = vrcp.pop %v2744
        %v2767 = vrcp.pop %v2747
        %v2768 = vrcp.pop %v2750
        %v2769 = vrcp.pop %v2753
        %v2770 = vrcp.pop %v2756
        %v2771 = vrcp.pop %v2759
        %v2772 = vrcp.pop %v2762
        %v2773 = vrcp.pop %v2765
        %v2774 = vmul.f32 %v2727, %v2766
        %v2775 = vmul.f32 %v2729, %v2767
        %v2776 = vmul.f32 %v2731, %v2768
        %v2777 = vmul.f32 %v2733, %v2769
        %v2778 = vmul.f32 %v2735, %v2770
        %v2779 = vmul.f32 %v2737, %v2771
        %v2780 = vmul.f32 %v2739, %v2772
        %v2781 = vmul.f32 %v2741, %v2773
        %2782 = vrot.lane.b32.xlu0 %v438, 48
        %v2783 = vpop.permute.xlu0 %2782
        %2784 = vrot.lane.b32.xlu0 %v443, 48
        %v2785 = vpop.permute.xlu0 %2784
        %v2789 = vsel %vm833, %v2774, 0
        %v2792 = vsel %vm833, %v2775, 0
        %2794 = vmatprep.subr.mxu0 0.0
        %2795 = vmatpush1.msra.mxu0 %v2783
        %2796 = vmatprep.subr.mxu0 0.0
        %2797 = vmatpush1.msra.mxu0 %v2785
        %2798 = vmatprep.subr.mxu0 0.0
        %2799 = vmatpush1.msra.mxu0 0.0
        %2800 = vmatprep.subr.mxu0 0.0
        %2801 = vmatpush1.msra.mxu0 0.0
        %2802 = vmatprep.subr.mxu0 0.0
        %2803 = vmatpush1.msra.mxu0 0.0
        %2804 = vmatprep.subr.mxu0 0.0
        %2805 = vmatpush1.msra.mxu0 0.0
        %2806 = vmatprep.subr.mxu0 0.0
        %2807 = vmatpush1.msra.mxu0 0.0
        %2808 = vmatprep.subr.mxu0 0.0
        %2809 = vmatpush1.msra.mxu0 0.0
        %2810 = vmatprep.subr.mxu0 0.0
        %2811 = vmatpush1.msra.mxu0 0.0
        %2812 = vmatprep.subr.mxu0 0.0
        %2813 = vmatpush1.msra.mxu0 0.0
        %2814 = vmatprep.subr.mxu0 0.0
        %2815 = vmatpush1.msra.mxu0 0.0
        %2816 = vmatprep.subr.mxu0 0.0
        %2817 = vmatpush1.msra.mxu0 0.0
        %2818 = vmatprep.subr.mxu0 0.0
        %2819 = vmatpush1.msra.mxu0 0.0
        %2820 = vmatprep.subr.mxu0 0.0
        %2821 = vmatpush1.msra.mxu0 0.0
        %2822 = vmatprep.subr.mxu0 0.0
        %2823 = vmatpush1.msra.mxu0 0.0
        %2824 = vmatprep.subr.mxu0 0.0
        %2825 = vmatpush1.msra.mxu0 0.0
        %2826 = vmatprep.subr.mxu0 0.0
        %2827 = vmatpush1.msra.mxu0 0.0
        %2828 = vmatprep.subr.mxu0 0.0
        %2829 = vmatpush1.msra.mxu0 0.0
        %2830 = vmatprep.subr.mxu0 0.0
        %2831 = vmatpush1.msra.mxu0 0.0
        %2832 = vmatprep.subr.mxu0 0.0
        %2833 = vmatpush1.msra.mxu0 0.0
        %2834 = vmatprep.subr.mxu0 0.0
        %2835 = vmatpush1.msra.mxu0 0.0
        %2836 = vmatprep.subr.mxu0 0.0
        %2837 = vmatpush1.msra.mxu0 0.0
        %2838 = vmatprep.subr.mxu0 0.0
        %2839 = vmatpush1.msra.mxu0 0.0
        %2840 = vmatprep.subr.mxu0 0.0
        %2841 = vmatpush1.msra.mxu0 0.0
        %2842 = vmatprep.subr.mxu0 0.0
        %2843 = vmatpush1.msra.mxu0 0.0
        %2844 = vmatprep.subr.mxu0 0.0
        %2845 = vmatpush1.msra.mxu0 0.0
        %2846 = vmatprep.subr.mxu0 0.0
        %2847 = vmatpush1.msra.mxu0 0.0
        %2848 = vmatprep.subr.mxu0 0.0
        %2849 = vmatpush1.msra.mxu0 0.0
        %2850 = vmatprep.subr.mxu0 0.0
        %2851 = vmatpush1.msra.mxu0 0.0
        %2852 = vmatprep.subr.mxu0 0.0
        %2853 = vmatpush1.msra.mxu0 0.0
        %2854 = vmatprep.subr.mxu0 0.0
        %2855 = vmatpush1.msra.mxu0 0.0
        %2856 = vmatprep.subr.mxu0 0.0
        %2857 = vmatpush1.msra.mxu0 0.0
        %2858 = vmatprep.mubr.f32.mxu0 0.0
        %2859 = vmatmul.mubr.f32.gmra.mrb[0].mxu0 %v2789
        %v2860 = vpop.f32.mrb[0].mxu0
        %v2861 = vadd.f32 0.0, %v2860
        %v2862 = vpop.f32.mrb[0].mxu0
        %2863 = vmatprep.mubr.f32.mxu0 0.0
        %2864 = vmatmul.mubr.f32.gmra.mrb[0].mxu0 %v2792
        %v2865 = vpop.f32.mrb[0].mxu0
        %v2866 = vadd.f32 0.0, %v2865
        %v2867 = vpop.f32.mrb[0].mxu0
        %2868 = vdwg.mxu0
        %2869 = vrot.lane.b32.xlu0 %v448, 48
        %v2870 = vpop.permute.xlu0 %2869
        %2871 = vrot.lane.b32.xlu0 %v453, 48
        %v2872 = vpop.permute.xlu0 %2871
        %v2876 = vsel %vm833, %v2776, 0
        %v2879 = vsel %vm833, %v2777, 0
        %2881 = vmatprep.subr.mxu0 0.0
        %2882 = vmatpush1.msra.mxu0 %v2870
        %2883 = vmatprep.subr.mxu0 0.0
        %2884 = vmatpush1.msra.mxu0 %v2872
        %2885 = vmatprep.subr.mxu0 0.0
        %2886 = vmatpush1.msra.mxu0 0.0
        %2887 = vmatprep.subr.mxu0 0.0
        %2888 = vmatpush1.msra.mxu0 0.0
        %2889 = vmatprep.subr.mxu0 0.0
        %2890 = vmatpush1.msra.mxu0 0.0
        %2891 = vmatprep.subr.mxu0 0.0
        %2892 = vmatpush1.msra.mxu0 0.0
        %2893 = vmatprep.subr.mxu0 0.0
        %2894 = vmatpush1.msra.mxu0 0.0
        %2895 = vmatprep.subr.mxu0 0.0
        %2896 = vmatpush1.msra.mxu0 0.0
        %2897 = vmatprep.subr.mxu0 0.0
        %2898 = vmatpush1.msra.mxu0 0.0
        %2899 = vmatprep.subr.mxu0 0.0
        %2900 = vmatpush1.msra.mxu0 0.0
        %2901 = vmatprep.subr.mxu0 0.0
        %2902 = vmatpush1.msra.mxu0 0.0
        %2903 = vmatprep.subr.mxu0 0.0
        %2904 = vmatpush1.msra.mxu0 0.0
        %2905 = vmatprep.subr.mxu0 0.0
        %2906 = vmatpush1.msra.mxu0 0.0
        %2907 = vmatprep.subr.mxu0 0.0
        %2908 = vmatpush1.msra.mxu0 0.0
        %2909 = vmatprep.subr.mxu0 0.0
        %2910 = vmatpush1.msra.mxu0 0.0
        %2911 = vmatprep.subr.mxu0 0.0
        %2912 = vmatpush1.msra.mxu0 0.0
        %2913 = vmatprep.subr.mxu0 0.0
        %2914 = vmatpush1.msra.mxu0 0.0
        %2915 = vmatprep.subr.mxu0 0.0
        %2916 = vmatpush1.msra.mxu0 0.0
        %2917 = vmatprep.subr.mxu0 0.0
        %2918 = vmatpush1.msra.mxu0 0.0
        %2919 = vmatprep.subr.mxu0 0.0
        %2920 = vmatpush1.msra.mxu0 0.0
        %2921 = vmatprep.subr.mxu0 0.0
        %2922 = vmatpush1.msra.mxu0 0.0
        %2923 = vmatprep.subr.mxu0 0.0
        %2924 = vmatpush1.msra.mxu0 0.0
        %2925 = vmatprep.subr.mxu0 0.0
        %2926 = vmatpush1.msra.mxu0 0.0
        %2927 = vmatprep.subr.mxu0 0.0
        %2928 = vmatpush1.msra.mxu0 0.0
        %2929 = vmatprep.subr.mxu0 0.0
        %2930 = vmatpush1.msra.mxu0 0.0
        %2931 = vmatprep.subr.mxu0 0.0
        %2932 = vmatpush1.msra.mxu0 0.0
        %2933 = vmatprep.subr.mxu0 0.0
        %2934 = vmatpush1.msra.mxu0 0.0
        %2935 = vmatprep.subr.mxu0 0.0
        %2936 = vmatpush1.msra.mxu0 0.0
        %2937 = vmatprep.subr.mxu0 0.0
        %2938 = vmatpush1.msra.mxu0 0.0
        %2939 = vmatprep.subr.mxu0 0.0
        %2940 = vmatpush1.msra.mxu0 0.0
        %2941 = vmatprep.subr.mxu0 0.0
        %2942 = vmatpush1.msra.mxu0 0.0
        %2943 = vmatprep.subr.mxu0 0.0
        %2944 = vmatpush1.msra.mxu0 0.0
        %2945 = vmatprep.mubr.f32.mxu0 0.0
        %2946 = vmatmul.mubr.f32.gmra.mrb[0].mxu0 %v2876
        %v2947 = vpop.f32.mrb[0].mxu0
        %v2948 = vadd.f32 0.0, %v2947
        %v2949 = vpop.f32.mrb[0].mxu0
        %2950 = vmatprep.mubr.f32.mxu0 0.0
        %2951 = vmatmul.mubr.f32.gmra.mrb[0].mxu0 %v2879
        %v2952 = vpop.f32.mrb[0].mxu0
        %v2953 = vadd.f32 0.0, %v2952
        %v2954 = vpop.f32.mrb[0].mxu0
        %2955 = vdwg.mxu0
        %2956 = vrot.lane.b32.xlu0 %v458, 48
        %v2957 = vpop.permute.xlu0 %2956
        %2958 = vrot.lane.b32.xlu0 %v463, 48
        %v2959 = vpop.permute.xlu0 %2958
        %v2963 = vsel %vm833, %v2778, 0
        %v2966 = vsel %vm833, %v2779, 0
        %2968 = vmatprep.subr.mxu0 0.0
        %2969 = vmatpush1.msra.mxu0 %v2957
        %2970 = vmatprep.subr.mxu0 0.0
        %2971 = vmatpush1.msra.mxu0 %v2959
        %2972 = vmatprep.subr.mxu0 0.0
        %2973 = vmatpush1.msra.mxu0 0.0
        %2974 = vmatprep.subr.mxu0 0.0
        %2975 = vmatpush1.msra.mxu0 0.0
        %2976 = vmatprep.subr.mxu0 0.0
        %2977 = vmatpush1.msra.mxu0 0.0
        %2978 = vmatprep.subr.mxu0 0.0
        %2979 = vmatpush1.msra.mxu0 0.0
        %2980 = vmatprep.subr.mxu0 0.0
        %2981 = vmatpush1.msra.mxu0 0.0
        %2982 = vmatprep.subr.mxu0 0.0
        %2983 = vmatpush1.msra.mxu0 0.0
        %2984 = vmatprep.subr.mxu0 0.0
        %2985 = vmatpush1.msra.mxu0 0.0
        %2986 = vmatprep.subr.mxu0 0.0
        %2987 = vmatpush1.msra.mxu0 0.0
        %2988 = vmatprep.subr.mxu0 0.0
        %2989 = vmatpush1.msra.mxu0 0.0
        %2990 = vmatprep.subr.mxu0 0.0
        %2991 = vmatpush1.msra.mxu0 0.0
        %2992 = vmatprep.subr.mxu0 0.0
        %2993 = vmatpush1.msra.mxu0 0.0
        %2994 = vmatprep.subr.mxu0 0.0
        %2995 = vmatpush1.msra.mxu0 0.0
        %2996 = vmatprep.subr.mxu0 0.0
        %2997 = vmatpush1.msra.mxu0 0.0
        %2998 = vmatprep.subr.mxu0 0.0
        %2999 = vmatpush1.msra.mxu0 0.0
        %3000 = vmatprep.subr.mxu0 0.0
        %3001 = vmatpush1.msra.mxu0 0.0
        %3002 = vmatprep.subr.mxu0 0.0
        %3003 = vmatpush1.msra.mxu0 0.0
        %3004 = vmatprep.subr.mxu0 0.0
        %3005 = vmatpush1.msra.mxu0 0.0
        %3006 = vmatprep.subr.mxu0 0.0
        %3007 = vmatpush1.msra.mxu0 0.0
        %3008 = vmatprep.subr.mxu0 0.0
        %3009 = vmatpush1.msra.mxu0 0.0
        %3010 = vmatprep.subr.mxu0 0.0
        %3011 = vmatpush1.msra.mxu0 0.0
        %3012 = vmatprep.subr.mxu0 0.0
        %3013 = vmatpush1.msra.mxu0 0.0
        %3014 = vmatprep.subr.mxu0 0.0
        %3015 = vmatpush1.msra.mxu0 0.0
        %3016 = vmatprep.subr.mxu0 0.0
        %3017 = vmatpush1.msra.mxu0 0.0
        %3018 = vmatprep.subr.mxu0 0.0
        %3019 = vmatpush1.msra.mxu0 0.0
        %3020 = vmatprep.subr.mxu0 0.0
        %3021 = vmatpush1.msra.mxu0 0.0
        %3022 = vmatprep.subr.mxu0 0.0
        %3023 = vmatpush1.msra.mxu0 0.0
        %3024 = vmatprep.subr.mxu0 0.0
        %3025 = vmatpush1.msra.mxu0 0.0
        %3026 = vmatprep.subr.mxu0 0.0
        %3027 = vmatpush1.msra.mxu0 0.0
        %3028 = vmatprep.subr.mxu0 0.0
        %3029 = vmatpush1.msra.mxu0 0.0
        %3030 = vmatprep.subr.mxu0 0.0
        %3031 = vmatpush1.msra.mxu0 0.0
        %3032 = vmatprep.mubr.f32.mxu0 0.0
        %3033 = vmatmul.mubr.f32.gmra.mrb[0].mxu0 %v2963
        %v3034 = vpop.f32.mrb[0].mxu0
        %v3035 = vadd.f32 0.0, %v3034
        %v3036 = vpop.f32.mrb[0].mxu0
        %3037 = vmatprep.mubr.f32.mxu0 0.0
        %3038 = vmatmul.mubr.f32.gmra.mrb[0].mxu0 %v2966
        %v3039 = vpop.f32.mrb[0].mxu0
        %v3040 = vadd.f32 0.0, %v3039
        %v3041 = vpop.f32.mrb[0].mxu0
        %3042 = vdwg.mxu0
        %3043 = vrot.lane.b32.xlu0 %v468, 48
        %v3044 = vpop.permute.xlu0 %3043
        %3045 = vrot.lane.b32.xlu0 %v473, 48
        %v3046 = vpop.permute.xlu0 %3045
        %v3050 = vsel %vm833, %v2780, 0
        %v3053 = vsel %vm833, %v2781, 0
        %3055 = vmatprep.subr.mxu0 0.0
        %3056 = vmatpush1.msra.mxu0 %v3044
        %3057 = vmatprep.subr.mxu0 0.0
        %3058 = vmatpush1.msra.mxu0 %v3046
        %3059 = vmatprep.subr.mxu0 0.0
        %3060 = vmatpush1.msra.mxu0 0.0
        %3061 = vmatprep.subr.mxu0 0.0
        %3062 = vmatpush1.msra.mxu0 0.0
        %3063 = vmatprep.subr.mxu0 0.0
        %3064 = vmatpush1.msra.mxu0 0.0
        %3065 = vmatprep.subr.mxu0 0.0
        %3066 = vmatpush1.msra.mxu0 0.0
        %3067 = vmatprep.subr.mxu0 0.0
        %3068 = vmatpush1.msra.mxu0 0.0
        %3069 = vmatprep.subr.mxu0 0.0
        %3070 = vmatpush1.msra.mxu0 0.0
        %3071 = vmatprep.subr.mxu0 0.0
        %3072 = vmatpush1.msra.mxu0 0.0
        %3073 = vmatprep.subr.mxu0 0.0
        %3074 = vmatpush1.msra.mxu0 0.0
        %3075 = vmatprep.subr.mxu0 0.0
        %3076 = vmatpush1.msra.mxu0 0.0
        %3077 = vmatprep.subr.mxu0 0.0
        %3078 = vmatpush1.msra.mxu0 0.0
        %3079 = vmatprep.subr.mxu0 0.0
        %3080 = vmatpush1.msra.mxu0 0.0
        %3081 = vmatprep.subr.mxu0 0.0
        %3082 = vmatpush1.msra.mxu0 0.0
        %3083 = vmatprep.subr.mxu0 0.0
        %3084 = vmatpush1.msra.mxu0 0.0
        %3085 = vmatprep.subr.mxu0 0.0
        %3086 = vmatpush1.msra.mxu0 0.0
        %3087 = vmatprep.subr.mxu0 0.0
        %3088 = vmatpush1.msra.mxu0 0.0
        %3089 = vmatprep.subr.mxu0 0.0
        %3090 = vmatpush1.msra.mxu0 0.0
        %3091 = vmatprep.subr.mxu0 0.0
        %3092 = vmatpush1.msra.mxu0 0.0
        %3093 = vmatprep.subr.mxu0 0.0
        %3094 = vmatpush1.msra.mxu0 0.0
        %3095 = vmatprep.subr.mxu0 0.0
        %3096 = vmatpush1.msra.mxu0 0.0
        %3097 = vmatprep.subr.mxu0 0.0
        %3098 = vmatpush1.msra.mxu0 0.0
        %3099 = vmatprep.subr.mxu0 0.0
        %3100 = vmatpush1.msra.mxu0 0.0
        %3101 = vmatprep.subr.mxu0 0.0
        %3102 = vmatpush1.msra.mxu0 0.0
        %3103 = vmatprep.subr.mxu0 0.0
        %3104 = vmatpush1.msra.mxu0 0.0
        %3105 = vmatprep.subr.mxu0 0.0
        %3106 = vmatpush1.msra.mxu0 0.0
        %3107 = vmatprep.subr.mxu0 0.0
        %3108 = vmatpush1.msra.mxu0 0.0
        %3109 = vmatprep.subr.mxu0 0.0
        %3110 = vmatpush1.msra.mxu0 0.0
        %3111 = vmatprep.subr.mxu0 0.0
        %3112 = vmatpush1.msra.mxu0 0.0
        %3113 = vmatprep.subr.mxu0 0.0
        %3114 = vmatpush1.msra.mxu0 0.0
        %3115 = vmatprep.subr.mxu0 0.0
        %3116 = vmatpush1.msra.mxu0 0.0
        %3117 = vmatprep.subr.mxu0 0.0
        %3118 = vmatpush1.msra.mxu0 0.0
        %3119 = vmatprep.mubr.f32.mxu0 0.0
        %3120 = vmatmul.mubr.f32.gmra.mrb[0].mxu0 %v3050
        %v3121 = vpop.f32.mrb[0].mxu0
        %v3122 = vadd.f32 0.0, %v3121
        %v3123 = vpop.f32.mrb[0].mxu0
        %3124 = vmatprep.mubr.f32.mxu0 0.0
        %3125 = vmatmul.mubr.f32.gmra.mrb[0].mxu0 %v3053
        %v3126 = vpop.f32.mrb[0].mxu0
        %v3127 = vadd.f32 0.0, %v3126
        %v3128 = vpop.f32.mrb[0].mxu0
        %3129 = vdwg.mxu0
        %v3130 = vld [vmem:[#allocation8 + $0x10] sm:$0xff]
        %v3132 = vsel %vm482, %v2861, 0
        %v3135 = vsel %vm482, %v2866, 0
        %v3138 = vsel %vm482, %v2948, 0
        %v3141 = vsel %vm482, %v2953, 0
        %v3144 = vsel %vm482, %v3035, 0
        %v3147 = vsel %vm482, %v3040, 0
        %v3150 = vsel %vm482, %v3122, 0
        %v3153 = vsel %vm482, %v3127, 0
        %3155 = vmatprep.subr.mxu0 0.0
        %3156 = vmatpush1.msra.mxu0 %v3130
        %3157 = vmatprep.subr.mxu0 0.0
        %3158 = vmatpush1.msra.mxu0 0.0
        %3159 = vmatprep.subr.mxu0 0.0
        %3160 = vmatpush1.msra.mxu0 0.0
        %3161 = vmatprep.subr.mxu0 0.0
        %3162 = vmatpush1.msra.mxu0 0.0
        %3163 = vmatprep.subr.mxu0 0.0
        %3164 = vmatpush1.msra.mxu0 0.0
        %3165 = vmatprep.subr.mxu0 0.0
        %3166 = vmatpush1.msra.mxu0 0.0
        %3167 = vmatprep.subr.mxu0 0.0
        %3168 = vmatpush1.msra.mxu0 0.0
        %3169 = vmatprep.subr.mxu0 0.0
        %3170 = vmatpush1.msra.mxu0 0.0
        %3171 = vmatprep.subr.mxu0 0.0
        %3172 = vmatpush1.msra.mxu0 0.0
        %3173 = vmatprep.subr.mxu0 0.0
        %3174 = vmatpush1.msra.mxu0 0.0
        %3175 = vmatprep.subr.mxu0 0.0
        %3176 = vmatpush1.msra.mxu0 0.0
        %3177 = vmatprep.subr.mxu0 0.0
        %3178 = vmatpush1.msra.mxu0 0.0
        %3179 = vmatprep.subr.mxu0 0.0
        %3180 = vmatpush1.msra.mxu0 0.0
        %3181 = vmatprep.subr.mxu0 0.0
        %3182 = vmatpush1.msra.mxu0 0.0
        %3183 = vmatprep.subr.mxu0 0.0
        %3184 = vmatpush1.msra.mxu0 0.0
        %3185 = vmatprep.subr.mxu0 0.0
        %3186 = vmatpush1.msra.mxu0 0.0
        %3187 = vmatprep.subr.mxu0 0.0
        %3188 = vmatpush1.msra.mxu0 0.0
        %3189 = vmatprep.subr.mxu0 0.0
        %3190 = vmatpush1.msra.mxu0 0.0
        %3191 = vmatprep.subr.mxu0 0.0
        %3192 = vmatpush1.msra.mxu0 0.0
        %3193 = vmatprep.subr.mxu0 0.0
        %3194 = vmatpush1.msra.mxu0 0.0
        %3195 = vmatprep.subr.mxu0 0.0
        %3196 = vmatpush1.msra.mxu0 0.0
        %3197 = vmatprep.subr.mxu0 0.0
        %3198 = vmatpush1.msra.mxu0 0.0
        %3199 = vmatprep.subr.mxu0 0.0
        %3200 = vmatpush1.msra.mxu0 0.0
        %3201 = vmatprep.subr.mxu0 0.0
        %3202 = vmatpush1.msra.mxu0 0.0
        %3203 = vmatprep.subr.mxu0 0.0
        %3204 = vmatpush1.msra.mxu0 0.0
        %3205 = vmatprep.subr.mxu0 0.0
        %3206 = vmatpush1.msra.mxu0 0.0
        %3207 = vmatprep.subr.mxu0 0.0
        %3208 = vmatpush1.msra.mxu0 0.0
        %3209 = vmatprep.subr.mxu0 0.0
        %3210 = vmatpush1.msra.mxu0 0.0
        %3211 = vmatprep.subr.mxu0 0.0
        %3212 = vmatpush1.msra.mxu0 0.0
        %3213 = vmatprep.subr.mxu0 0.0
        %3214 = vmatpush1.msra.mxu0 0.0
        %3215 = vmatprep.subr.mxu0 0.0
        %3216 = vmatpush1.msra.mxu0 0.0
        %3217 = vmatprep.subr.mxu0 0.0
        %3218 = vmatpush1.msra.mxu0 0.0
        %3219 = vmatprep.mubr.f32.mxu0 0.0
        %3220 = vmatmul.mubr.f32.gmra.mrb[0].mxu0 %v3132
        %v3221 = vpop.f32.mrb[0].mxu0
        %v3222 = vadd.f32 0.0, %v3221
        %v3223 = vpop.f32.mrb[0].mxu0
        %3224 = vmatprep.mubr.f32.mxu0 0.0
        %3225 = vmatmul.mubr.f32.gmra.mrb[0].mxu0 %v3135
        %v3226 = vpop.f32.mrb[0].mxu0
        %v3227 = vadd.f32 0.0, %v3226
        %v3228 = vpop.f32.mrb[0].mxu0
        %3229 = vmatprep.mubr.f32.mxu0 0.0
        %3230 = vmatmul.mubr.f32.gmra.mrb[0].mxu0 %v3138
        %v3231 = vpop.f32.mrb[0].mxu0
        %v3232 = vadd.f32 0.0, %v3231
        %v3233 = vpop.f32.mrb[0].mxu0
        %3234 = vmatprep.mubr.f32.mxu0 0.0
        %3235 = vmatmul.mubr.f32.gmra.mrb[0].mxu0 %v3141
        %v3236 = vpop.f32.mrb[0].mxu0
        %v3237 = vadd.f32 0.0, %v3236
        %v3238 = vpop.f32.mrb[0].mxu0
        %3239 = vmatprep.mubr.f32.mxu0 0.0
        %3240 = vmatmul.mubr.f32.gmra.mrb[0].mxu0 %v3144
        %v3241 = vpop.f32.mrb[0].mxu0
        %v3242 = vadd.f32 0.0, %v3241
        %v3243 = vpop.f32.mrb[0].mxu0
        %3244 = vmatprep.mubr.f32.mxu0 0.0
        %3245 = vmatmul.mubr.f32.gmra.mrb[0].mxu0 %v3147
        %v3246 = vpop.f32.mrb[0].mxu0
        %v3247 = vadd.f32 0.0, %v3246
        %v3248 = vpop.f32.mrb[0].mxu0
        %3249 = vmatprep.mubr.f32.mxu0 0.0
        %3250 = vmatmul.mubr.f32.gmra.mrb[0].mxu0 %v3150
        %v3251 = vpop.f32.mrb[0].mxu0
        %v3252 = vadd.f32 0.0, %v3251
        %v3253 = vpop.f32.mrb[0].mxu0
        %3254 = vmatprep.mubr.f32.mxu0 0.0
        %3255 = vmatmul.mubr.f32.gmra.mrb[0].mxu0 %v3153
        %v3256 = vpop.f32.mrb[0].mxu0
        %v3257 = vadd.f32 0.0, %v3256
        %v3258 = vpop.f32.mrb[0].mxu0
        %3259 = vdwg.mxu0
        %v3260 = vadd.f32 %v2292, %v3222
        %v3261 = vadd.f32 %v2297, %v3227
        %v3262 = vadd.f32 %v2302, %v3232
        %v3263 = vadd.f32 %v2307, %v3237
        %v3264 = vadd.f32 %v2312, %v3242
        %v3265 = vadd.f32 %v2317, %v3247
        %v3266 = vadd.f32 %v2322, %v3252
        %v3267 = vadd.f32 %v2327, %v3257
        %3268 = vrot.lane.b32.xlu0 %v438, 104
        %v3269 = vpop.permute.xlu0 %3268
        %3270 = vrot.lane.b32.xlu0 %v443, 104
        %v3271 = vpop.permute.xlu0 %3270
        %3272 = vrot.lane.b32.xlu0 %v438, 72
        %v3273 = vpop.permute.xlu0 %3272
        %3274 = vrot.lane.b32.xlu0 %v443, 72
        %v3275 = vpop.permute.xlu0 %3274
        %v3276 = vsel %vm482, %v3269, 0
        %v3278 = vsel %vm482, %v3271, 0
        %v3280 = vsel %vm482, %v3273, 0
        %v3282 = vsel %vm482, %v3275, 0
        %3284 = vmatprep.subr.mxu0 0.0
        %3285 = vmatpush1.xpose.msra.mxu0 %v3280
        %3286 = vmatprep.subr.mxu0 0.0
        %3287 = vmatpush1.xpose.msra.mxu0 %v3282
        %3288 = vmatprep.subr.mxu0 0.0
        %3289 = vmatpush1.xpose.msra.mxu0 0.0
        %3290 = vmatprep.subr.mxu0 0.0
        %3291 = vmatpush1.xpose.msra.mxu0 0.0
        %3292 = vmatprep.subr.mxu0 0.0
        %3293 = vmatpush1.xpose.msra.mxu0 0.0
        %3294 = vmatprep.subr.mxu0 0.0
        %3295 = vmatpush1.xpose.msra.mxu0 0.0
        %3296 = vmatprep.subr.mxu0 0.0
        %3297 = vmatpush1.xpose.msra.mxu0 0.0
        %3298 = vmatprep.subr.mxu0 0.0
        %3299 = vmatpush1.xpose.msra.mxu0 0.0
        %3300 = vmatprep.subr.mxu0 0.0
        %3301 = vmatpush1.xpose.msra.mxu0 0.0
        %3302 = vmatprep.subr.mxu0 0.0
        %3303 = vmatpush1.xpose.msra.mxu0 0.0
        %3304 = vmatprep.subr.mxu0 0.0
        %3305 = vmatpush1.xpose.msra.mxu0 0.0
        %3306 = vmatprep.subr.mxu0 0.0
        %3307 = vmatpush1.xpose.msra.mxu0 0.0
        %3308 = vmatprep.subr.mxu0 0.0
        %3309 = vmatpush1.xpose.msra.mxu0 0.0
        %3310 = vmatprep.subr.mxu0 0.0
        %3311 = vmatpush1.xpose.msra.mxu0 0.0
        %3312 = vmatprep.subr.mxu0 0.0
        %3313 = vmatpush1.xpose.msra.mxu0 0.0
        %3314 = vmatprep.subr.mxu0 0.0
        %3315 = vmatpush1.xpose.msra.mxu0 0.0
        %3316 = vmatprep.subr.mxu0 0.0
        %3317 = vmatpush1.xpose.msra.mxu0 0.0
        %3318 = vmatprep.subr.mxu0 0.0
        %3319 = vmatpush1.xpose.msra.mxu0 0.0
        %3320 = vmatprep.subr.mxu0 0.0
        %3321 = vmatpush1.xpose.msra.mxu0 0.0
        %3322 = vmatprep.subr.mxu0 0.0
        %3323 = vmatpush1.xpose.msra.mxu0 0.0
        %3324 = vmatprep.subr.mxu0 0.0
        %3325 = vmatpush1.xpose.msra.mxu0 0.0
        %3326 = vmatprep.subr.mxu0 0.0
        %3327 = vmatpush1.xpose.msra.mxu0 0.0
        %3328 = vmatprep.subr.mxu0 0.0
        %3329 = vmatpush1.xpose.msra.mxu0 0.0
        %3330 = vmatprep.subr.mxu0 0.0
        %3331 = vmatpush1.xpose.msra.mxu0 0.0
        %3332 = vmatprep.subr.mxu0 0.0
        %3333 = vmatpush1.xpose.msra.mxu0 0.0
        %3334 = vmatprep.subr.mxu0 0.0
        %3335 = vmatpush1.xpose.msra.mxu0 0.0
        %3336 = vmatprep.subr.mxu0 0.0
        %3337 = vmatpush1.xpose.msra.mxu0 0.0
        %3338 = vmatprep.subr.mxu0 0.0
        %3339 = vmatpush1.xpose.msra.mxu0 0.0
        %3340 = vmatprep.subr.mxu0 0.0
        %3341 = vmatpush1.xpose.msra.mxu0 0.0
        %3342 = vmatprep.subr.mxu0 0.0
        %3343 = vmatpush1.xpose.msra.mxu0 0.0
        %3344 = vmatprep.subr.mxu0 0.0
        %3345 = vmatpush1.xpose.msra.mxu0 0.0
        %3346 = vmatprep.subr.mxu0 0.0
        %3347 = vmatpush1.xpose.msra.mxu0 0.0
        %3348 = vmatprep.mubr.f32.mxu0 0.0
        %3349 = vmatmul.mubr.f32.gmra.mrb[0].mxu0 %v3276
        %v3350 = vpop.f32.mrb[0].mxu0
        %v3351 = vadd.f32 0.0, %v3350
        %v3352 = vpop.f32.mrb[0].mxu0
        %3353 = vmatprep.mubr.f32.mxu0 0.0
        %3354 = vmatmul.mubr.f32.gmra.mrb[0].mxu0 %v3278
        %v3355 = vpop.f32.mrb[0].mxu0
        %v3356 = vadd.f32 0.0, %v3355
        %v3357 = vpop.f32.mrb[0].mxu0
        %3358 = vdwg.mxu0
        %3359 = vrot.lane.b32.xlu0 %v448, 104
        %v3360 = vpop.permute.xlu0 %3359
        %3361 = vrot.lane.b32.xlu0 %v453, 104
        %v3362 = vpop.permute.xlu0 %3361
        %3363 = vrot.lane.b32.xlu0 %v448, 72
        %v3364 = vpop.permute.xlu0 %3363
        %3365 = vrot.lane.b32.xlu0 %v453, 72
        %v3366 = vpop.permute.xlu0 %3365
        %v3367 = vsel %vm482, %v3360, 0
        %v3369 = vsel %vm482, %v3362, 0
        %v3371 = vsel %vm482, %v3364, 0
        %v3373 = vsel %vm482, %v3366, 0
        %3375 = vmatprep.subr.mxu0 0.0
        %3376 = vmatpush1.xpose.msra.mxu0 %v3371
        %3377 = vmatprep.subr.mxu0 0.0
        %3378 = vmatpush1.xpose.msra.mxu0 %v3373
        %3379 = vmatprep.subr.mxu0 0.0
        %3380 = vmatpush1.xpose.msra.mxu0 0.0
        %3381 = vmatprep.subr.mxu0 0.0
        %3382 = vmatpush1.xpose.msra.mxu0 0.0
        %3383 = vmatprep.subr.mxu0 0.0
        %3384 = vmatpush1.xpose.msra.mxu0 0.0
        %3385 = vmatprep.subr.mxu0 0.0
        %3386 = vmatpush1.xpose.msra.mxu0 0.0
        %3387 = vmatprep.subr.mxu0 0.0
        %3388 = vmatpush1.xpose.msra.mxu0 0.0
        %3389 = vmatprep.subr.mxu0 0.0
        %3390 = vmatpush1.xpose.msra.mxu0 0.0
        %3391 = vmatprep.subr.mxu0 0.0
        %3392 = vmatpush1.xpose.msra.mxu0 0.0
        %3393 = vmatprep.subr.mxu0 0.0
        %3394 = vmatpush1.xpose.msra.mxu0 0.0
        %3395 = vmatprep.subr.mxu0 0.0
        %3396 = vmatpush1.xpose.msra.mxu0 0.0
        %3397 = vmatprep.subr.mxu0 0.0
        %3398 = vmatpush1.xpose.msra.mxu0 0.0
        %3399 = vmatprep.subr.mxu0 0.0
        %3400 = vmatpush1.xpose.msra.mxu0 0.0
        %3401 = vmatprep.subr.mxu0 0.0
        %3402 = vmatpush1.xpose.msra.mxu0 0.0
        %3403 = vmatprep.subr.mxu0 0.0
        %3404 = vmatpush1.xpose.msra.mxu0 0.0
        %3405 = vmatprep.subr.mxu0 0.0
        %3406 = vmatpush1.xpose.msra.mxu0 0.0
        %3407 = vmatprep.subr.mxu0 0.0
        %3408 = vmatpush1.xpose.msra.mxu0 0.0
        %3409 = vmatprep.subr.mxu0 0.0
        %3410 = vmatpush1.xpose.msra.mxu0 0.0
        %3411 = vmatprep.subr.mxu0 0.0
        %3412 = vmatpush1.xpose.msra.mxu0 0.0
        %3413 = vmatprep.subr.mxu0 0.0
        %3414 = vmatpush1.xpose.msra.mxu0 0.0
        %3415 = vmatprep.subr.mxu0 0.0
        %3416 = vmatpush1.xpose.msra.mxu0 0.0
        %3417 = vmatprep.subr.mxu0 0.0
        %3418 = vmatpush1.xpose.msra.mxu0 0.0
        %3419 = vmatprep.subr.mxu0 0.0
        %3420 = vmatpush1.xpose.msra.mxu0 0.0
        %3421 = vmatprep.subr.mxu0 0.0
        %3422 = vmatpush1.xpose.msra.mxu0 0.0
        %3423 = vmatprep.subr.mxu0 0.0
        %3424 = vmatpush1.xpose.msra.mxu0 0.0
        %3425 = vmatprep.subr.mxu0 0.0
        %3426 = vmatpush1.xpose.msra.mxu0 0.0
        %3427 = vmatprep.subr.mxu0 0.0
        %3428 = vmatpush1.xpose.msra.mxu0 0.0
        %3429 = vmatprep.subr.mxu0 0.0
        %3430 = vmatpush1.xpose.msra.mxu0 0.0
        %3431 = vmatprep.subr.mxu0 0.0
        %3432 = vmatpush1.xpose.msra.mxu0 0.0
        %3433 = vmatprep.subr.mxu0 0.0
        %3434 = vmatpush1.xpose.msra.mxu0 0.0
        %3435 = vmatprep.subr.mxu0 0.0
        %3436 = vmatpush1.xpose.msra.mxu0 0.0
        %3437 = vmatprep.subr.mxu0 0.0
        %3438 = vmatpush1.xpose.msra.mxu0 0.0
        %3439 = vmatprep.mubr.f32.mxu0 0.0
        %3440 = vmatmul.mubr.f32.gmra.mrb[0].mxu0 %v3367
        %v3441 = vpop.f32.mrb[0].mxu0
        %v3442 = vadd.f32 0.0, %v3441
        %v3443 = vpop.f32.mrb[0].mxu0
        %3444 = vmatprep.mubr.f32.mxu0 0.0
        %3445 = vmatmul.mubr.f32.gmra.mrb[0].mxu0 %v3369
        %v3446 = vpop.f32.mrb[0].mxu0
        %v3447 = vadd.f32 0.0, %v3446
        %v3448 = vpop.f32.mrb[0].mxu0
        %3449 = vdwg.mxu0
        %3450 = vrot.lane.b32.xlu0 %v458, 104
        %v3451 = vpop.permute.xlu0 %3450
        %3452 = vrot.lane.b32.xlu0 %v463, 104
        %v3453 = vpop.permute.xlu0 %3452
        %3454 = vrot.lane.b32.xlu0 %v458, 72
        %v3455 = vpop.permute.xlu0 %3454
        %3456 = vrot.lane.b32.xlu0 %v463, 72
        %v3457 = vpop.permute.xlu0 %3456
        %v3458 = vsel %vm482, %v3451, 0
        %v3460 = vsel %vm482, %v3453, 0
        %v3462 = vsel %vm482, %v3455, 0
        %v3464 = vsel %vm482, %v3457, 0
        %3466 = vmatprep.subr.mxu0 0.0
        %3467 = vmatpush1.xpose.msra.mxu0 %v3462
        %3468 = vmatprep.subr.mxu0 0.0
        %3469 = vmatpush1.xpose.msra.mxu0 %v3464
        %3470 = vmatprep.subr.mxu0 0.0
        %3471 = vmatpush1.xpose.msra.mxu0 0.0
        %3472 = vmatprep.subr.mxu0 0.0
        %3473 = vmatpush1.xpose.msra.mxu0 0.0
        %3474 = vmatprep.subr.mxu0 0.0
        %3475 = vmatpush1.xpose.msra.mxu0 0.0
        %3476 = vmatprep.subr.mxu0 0.0
        %3477 = vmatpush1.xpose.msra.mxu0 0.0
        %3478 = vmatprep.subr.mxu0 0.0
        %3479 = vmatpush1.xpose.msra.mxu0 0.0
        %3480 = vmatprep.subr.mxu0 0.0
        %3481 = vmatpush1.xpose.msra.mxu0 0.0
        %3482 = vmatprep.subr.mxu0 0.0
        %3483 = vmatpush1.xpose.msra.mxu0 0.0
        %3484 = vmatprep.subr.mxu0 0.0
        %3485 = vmatpush1.xpose.msra.mxu0 0.0
        %3486 = vmatprep.subr.mxu0 0.0
        %3487 = vmatpush1.xpose.msra.mxu0 0.0
        %3488 = vmatprep.subr.mxu0 0.0
        %3489 = vmatpush1.xpose.msra.mxu0 0.0
        %3490 = vmatprep.subr.mxu0 0.0
        %3491 = vmatpush1.xpose.msra.mxu0 0.0
        %3492 = vmatprep.subr.mxu0 0.0
        %3493 = vmatpush1.xpose.msra.mxu0 0.0
        %3494 = vmatprep.subr.mxu0 0.0
        %3495 = vmatpush1.xpose.msra.mxu0 0.0
        %3496 = vmatprep.subr.mxu0 0.0
        %3497 = vmatpush1.xpose.msra.mxu0 0.0
        %3498 = vmatprep.subr.mxu0 0.0
        %3499 = vmatpush1.xpose.msra.mxu0 0.0
        %3500 = vmatprep.subr.mxu0 0.0
        %3501 = vmatpush1.xpose.msra.mxu0 0.0
        %3502 = vmatprep.subr.mxu0 0.0
        %3503 = vmatpush1.xpose.msra.mxu0 0.0
        %3504 = vmatprep.subr.mxu0 0.0
        %3505 = vmatpush1.xpose.msra.mxu0 0.0
        %3506 = vmatprep.subr.mxu0 0.0
        %3507 = vmatpush1.xpose.msra.mxu0 0.0
        %3508 = vmatprep.subr.mxu0 0.0
        %3509 = vmatpush1.xpose.msra.mxu0 0.0
        %3510 = vmatprep.subr.mxu0 0.0
        %3511 = vmatpush1.xpose.msra.mxu0 0.0
        %3512 = vmatprep.subr.mxu0 0.0
        %3513 = vmatpush1.xpose.msra.mxu0 0.0
        %3514 = vmatprep.subr.mxu0 0.0
        %3515 = vmatpush1.xpose.msra.mxu0 0.0
        %3516 = vmatprep.subr.mxu0 0.0
        %3517 = vmatpush1.xpose.msra.mxu0 0.0
        %3518 = vmatprep.subr.mxu0 0.0
        %3519 = vmatpush1.xpose.msra.mxu0 0.0
        %3520 = vmatprep.subr.mxu0 0.0
        %3521 = vmatpush1.xpose.msra.mxu0 0.0
        %3522 = vmatprep.subr.mxu0 0.0
        %3523 = vmatpush1.xpose.msra.mxu0 0.0
        %3524 = vmatprep.subr.mxu0 0.0
        %3525 = vmatpush1.xpose.msra.mxu0 0.0
        %3526 = vmatprep.subr.mxu0 0.0
        %3527 = vmatpush1.xpose.msra.mxu0 0.0
        %3528 = vmatprep.subr.mxu0 0.0
        %3529 = vmatpush1.xpose.msra.mxu0 0.0
        %3530 = vmatprep.mubr.f32.mxu0 0.0
        %3531 = vmatmul.mubr.f32.gmra.mrb[0].mxu0 %v3458
        %v3532 = vpop.f32.mrb[0].mxu0
        %v3533 = vadd.f32 0.0, %v3532
        %v3534 = vpop.f32.mrb[0].mxu0
        %3535 = vmatprep.mubr.f32.mxu0 0.0
        %3536 = vmatmul.mubr.f32.gmra.mrb[0].mxu0 %v3460
        %v3537 = vpop.f32.mrb[0].mxu0
        %v3538 = vadd.f32 0.0, %v3537
        %v3539 = vpop.f32.mrb[0].mxu0
        %3540 = vdwg.mxu0
        %3541 = vrot.lane.b32.xlu0 %v468, 104
        %v3542 = vpop.permute.xlu0 %3541
        %3543 = vrot.lane.b32.xlu0 %v473, 104
        %v3544 = vpop.permute.xlu0 %3543
        %3545 = vrot.lane.b32.xlu0 %v468, 72
        %v3546 = vpop.permute.xlu0 %3545
        %3547 = vrot.lane.b32.xlu0 %v473, 72
        %v3548 = vpop.permute.xlu0 %3547
        %v3549 = vsel %vm482, %v3542, 0
        %v3551 = vsel %vm482, %v3544, 0
        %v3553 = vsel %vm482, %v3546, 0
        %v3555 = vsel %vm482, %v3548, 0
        %3557 = vmatprep.subr.mxu0 0.0
        %3558 = vmatpush1.xpose.msra.mxu0 %v3553
        %3559 = vmatprep.subr.mxu0 0.0
        %3560 = vmatpush1.xpose.msra.mxu0 %v3555
        %3561 = vmatprep.subr.mxu0 0.0
        %3562 = vmatpush1.xpose.msra.mxu0 0.0
        %3563 = vmatprep.subr.mxu0 0.0
        %3564 = vmatpush1.xpose.msra.mxu0 0.0
        %3565 = vmatprep.subr.mxu0 0.0
        %3566 = vmatpush1.xpose.msra.mxu0 0.0
        %3567 = vmatprep.subr.mxu0 0.0
        %3568 = vmatpush1.xpose.msra.mxu0 0.0
        %3569 = vmatprep.subr.mxu0 0.0
        %3570 = vmatpush1.xpose.msra.mxu0 0.0
        %3571 = vmatprep.subr.mxu0 0.0
        %3572 = vmatpush1.xpose.msra.mxu0 0.0
        %3573 = vmatprep.subr.mxu0 0.0
        %3574 = vmatpush1.xpose.msra.mxu0 0.0
        %3575 = vmatprep.subr.mxu0 0.0
        %3576 = vmatpush1.xpose.msra.mxu0 0.0
        %3577 = vmatprep.subr.mxu0 0.0
        %3578 = vmatpush1.xpose.msra.mxu0 0.0
        %3579 = vmatprep.subr.mxu0 0.0
        %3580 = vmatpush1.xpose.msra.mxu0 0.0
        %3581 = vmatprep.subr.mxu0 0.0
        %3582 = vmatpush1.xpose.msra.mxu0 0.0
        %3583 = vmatprep.subr.mxu0 0.0
        %3584 = vmatpush1.xpose.msra.mxu0 0.0
        %3585 = vmatprep.subr.mxu0 0.0
        %3586 = vmatpush1.xpose.msra.mxu0 0.0
        %3587 = vmatprep.subr.mxu0 0.0
        %3588 = vmatpush1.xpose.msra.mxu0 0.0
        %3589 = vmatprep.subr.mxu0 0.0
        %3590 = vmatpush1.xpose.msra.mxu0 0.0
        %3591 = vmatprep.subr.mxu0 0.0
        %3592 = vmatpush1.xpose.msra.mxu0 0.0
        %3593 = vmatprep.subr.mxu0 0.0
        %3594 = vmatpush1.xpose.msra.mxu0 0.0
        %3595 = vmatprep.subr.mxu0 0.0
        %3596 = vmatpush1.xpose.msra.mxu0 0.0
        %3597 = vmatprep.subr.mxu0 0.0
        %3598 = vmatpush1.xpose.msra.mxu0 0.0
        %3599 = vmatprep.subr.mxu0 0.0
        %3600 = vmatpush1.xpose.msra.mxu0 0.0
        %3601 = vmatprep.subr.mxu0 0.0
        %3602 = vmatpush1.xpose.msra.mxu0 0.0
        %3603 = vmatprep.subr.mxu0 0.0
        %3604 = vmatpush1.xpose.msra.mxu0 0.0
        %3605 = vmatprep.subr.mxu0 0.0
        %3606 = vmatpush1.xpose.msra.mxu0 0.0
        %3607 = vmatprep.subr.mxu0 0.0
        %3608 = vmatpush1.xpose.msra.mxu0 0.0
        %3609 = vmatprep.subr.mxu0 0.0
        %3610 = vmatpush1.xpose.msra.mxu0 0.0
        %3611 = vmatprep.subr.mxu0 0.0
        %3612 = vmatpush1.xpose.msra.mxu0 0.0
        %3613 = vmatprep.subr.mxu0 0.0
        %3614 = vmatpush1.xpose.msra.mxu0 0.0
        %3615 = vmatprep.subr.mxu0 0.0
        %3616 = vmatpush1.xpose.msra.mxu0 0.0
        %3617 = vmatprep.subr.mxu0 0.0
        %3618 = vmatpush1.xpose.msra.mxu0 0.0
        %3619 = vmatprep.subr.mxu0 0.0
        %3620 = vmatpush1.xpose.msra.mxu0 0.0
        %3621 = vmatprep.mubr.f32.mxu0 0.0
        %3622 = vmatmul.mubr.f32.gmra.mrb[0].mxu0 %v3549
        %v3623 = vpop.f32.mrb[0].mxu0
        %v3624 = vadd.f32 0.0, %v3623
        %v3625 = vpop.f32.mrb[0].mxu0
        %3626 = vmatprep.mubr.f32.mxu0 0.0
        %3627 = vmatmul.mubr.f32.gmra.mrb[0].mxu0 %v3551
        %v3628 = vpop.f32.mrb[0].mxu0
        %v3629 = vadd.f32 0.0, %v3628
        %v3630 = vpop.f32.mrb[0].mxu0
        %3631 = vdwg.mxu0
        %v3632 = vsel %vm833, %v3351, -inf
        %3633 = vmax.xlane.f32.xlu0 %v3632
        %v3634 = vpop.xlane.xlu0 %3633
        %v3635 = vsel %vm833, %v3356, -inf
        %3636 = vmax.xlane.f32.xlu0 %v3635
        %v3637 = vpop.xlane.xlu0 %3636
        %v3638 = vsel %vm833, %v3442, -inf
        %3639 = vmax.xlane.f32.xlu0 %v3638
        %v3640 = vpop.xlane.xlu0 %3639
        %v3641 = vsel %vm833, %v3447, -inf
        %3642 = vmax.xlane.f32.xlu0 %v3641
        %v3643 = vpop.xlane.xlu0 %3642
        %v3644 = vsel %vm833, %v3533, -inf
        %3645 = vmax.xlane.f32.xlu0 %v3644
        %v3646 = vpop.xlane.xlu0 %3645
        %v3647 = vsel %vm833, %v3538, -inf
        %3648 = vmax.xlane.f32.xlu0 %v3647
        %v3649 = vpop.xlane.xlu0 %3648
        %v3650 = vsel %vm833, %v3624, -inf
        %3651 = vmax.xlane.f32.xlu0 %v3650
        %v3652 = vpop.xlane.xlu0 %3651
        %v3653 = vsel %vm833, %v3629, -inf
        %3654 = vmax.xlane.f32.xlu0 %v3653
        %v3655 = vpop.xlane.xlu0 %3654
        %v3656 = vsub.f32 %v3351, %v3634
        %v3657 = vsub.f32 %v3356, %v3637
        %v3658 = vsub.f32 %v3442, %v3640
        %v3659 = vsub.f32 %v3447, %v3643
        %v3660 = vsub.f32 %v3533, %v3646
        %v3661 = vsub.f32 %v3538, %v3649
        %v3662 = vsub.f32 %v3624, %v3652
        %v3663 = vsub.f32 %v3629, %v3655
        %v3664 = vmul.f32 %v3656, 1.442695
        %v3665 = vpow.pop %v3664
        %v3666 = vmul.f32 %v3657, 1.442695
        %v3667 = vpow.pop %v3666
        %v3668 = vmul.f32 %v3658, 1.442695
        %v3669 = vpow.pop %v3668
        %v3670 = vmul.f32 %v3659, 1.442695
        %v3671 = vpow.pop %v3670
        %v3672 = vmul.f32 %v3660, 1.442695
        %v3673 = vpow.pop %v3672
        %v3674 = vmul.f32 %v3661, 1.442695
        %v3675 = vpow.pop %v3674
        %v3676 = vmul.f32 %v3662, 1.442695
        %v3677 = vpow.pop %v3676
        %v3678 = vmul.f32 %v3663, 1.442695
        %v3679 = vpow.pop %v3678
        %v3680 = vsel %vm833, %v3665, 0.0
        %3681 = vadd.xlane.f32.xlu0 %v3680
        %v3682 = vpop.xlane.xlu0 %3681
        %v3683 = vsel %vm833, %v3667, 0.0
        %3684 = vadd.xlane.f32.xlu0 %v3683
        %v3685 = vpop.xlane.xlu0 %3684
        %v3686 = vsel %vm833, %v3669, 0.0
        %3687 = vadd.xlane.f32.xlu0 %v3686
        %v3688 = vpop.xlane.xlu0 %3687
        %v3689 = vsel %vm833, %v3671, 0.0
        %3690 = vadd.xlane.f32.xlu0 %v3689
        %v3691 = vpop.xlane.xlu0 %3690
        %v3692 = vsel %vm833, %v3673, 0.0
        %3693 = vadd.xlane.f32.xlu0 %v3692
        %v3694 = vpop.xlane.xlu0 %3693
        %v3695 = vsel %vm833, %v3675, 0.0
        %3696 = vadd.xlane.f32.xlu0 %v3695
        %v3697 = vpop.xlane.xlu0 %3696
        %v3698 = vsel %vm833, %v3677, 0.0
        %3699 = vadd.xlane.f32.xlu0 %v3698
        %v3700 = vpop.xlane.xlu0 %3699
        %v3701 = vsel %vm833, %v3679, 0.0
        %3702 = vadd.xlane.f32.xlu0 %v3701
        %v3703 = vpop.xlane.xlu0 %3702
        %v3704 = vrcp.pop %v3682
        %v3705 = vrcp.pop %v3685
        %v3706 = vrcp.pop %v3688
        %v3707 = vrcp.pop %v3691
        %v3708 = vrcp.pop %v3694
        %v3709 = vrcp.pop %v3697
        %v3710 = vrcp.pop %v3700
        %v3711 = vrcp.pop %v3703
        %v3712 = vmul.f32 %v3665, %v3704
        %v3713 = vmul.f32 %v3667, %v3705
        %v3714 = vmul.f32 %v3669, %v3706
        %v3715 = vmul.f32 %v3671, %v3707
        %v3716 = vmul.f32 %v3673, %v3708
        %v3717 = vmul.f32 %v3675, %v3709
        %v3718 = vmul.f32 %v3677, %v3710
        %v3719 = vmul.f32 %v3679, %v3711
        %3720 = vrot.lane.b32.xlu0 %v438, 40
        %v3721 = vpop.permute.xlu0 %3720
        %3722 = vrot.lane.b32.xlu0 %v443, 40
        %v3723 = vpop.permute.xlu0 %3722
        %v3727 = vsel %vm833, %v3712, 0
        %v3730 = vsel %vm833, %v3713, 0
        %3732 = vmatprep.subr.mxu0 0.0
        %3733 = vmatpush1.msra.mxu0 %v3721
        %3734 = vmatprep.subr.mxu0 0.0
        %3735 = vmatpush1.msra.mxu0 %v3723
        %3736 = vmatprep.subr.mxu0 0.0
        %3737 = vmatpush1.msra.mxu0 0.0
        %3738 = vmatprep.subr.mxu0 0.0
        %3739 = vmatpush1.msra.mxu0 0.0
        %3740 = vmatprep.subr.mxu0 0.0
        %3741 = vmatpush1.msra.mxu0 0.0
        %3742 = vmatprep.subr.mxu0 0.0
        %3743 = vmatpush1.msra.mxu0 0.0
        %3744 = vmatprep.subr.mxu0 0.0
        %3745 = vmatpush1.msra.mxu0 0.0
        %3746 = vmatprep.subr.mxu0 0.0
        %3747 = vmatpush1.msra.mxu0 0.0
        %3748 = vmatprep.subr.mxu0 0.0
        %3749 = vmatpush1.msra.mxu0 0.0
        %3750 = vmatprep.subr.mxu0 0.0
        %3751 = vmatpush1.msra.mxu0 0.0
        %3752 = vmatprep.subr.mxu0 0.0
        %3753 = vmatpush1.msra.mxu0 0.0
        %3754 = vmatprep.subr.mxu0 0.0
        %3755 = vmatpush1.msra.mxu0 0.0
        %3756 = vmatprep.subr.mxu0 0.0
        %3757 = vmatpush1.msra.mxu0 0.0
        %3758 = vmatprep.subr.mxu0 0.0
        %3759 = vmatpush1.msra.mxu0 0.0
        %3760 = vmatprep.subr.mxu0 0.0
        %3761 = vmatpush1.msra.mxu0 0.0
        %3762 = vmatprep.subr.mxu0 0.0
        %3763 = vmatpush1.msra.mxu0 0.0
        %3764 = vmatprep.subr.mxu0 0.0
        %3765 = vmatpush1.msra.mxu0 0.0
        %3766 = vmatprep.subr.mxu0 0.0
        %3767 = vmatpush1.msra.mxu0 0.0
        %3768 = vmatprep.subr.mxu0 0.0
        %3769 = vmatpush1.msra.mxu0 0.0
        %3770 = vmatprep.subr.mxu0 0.0
        %3771 = vmatpush1.msra.mxu0 0.0
        %3772 = vmatprep.subr.mxu0 0.0
        %3773 = vmatpush1.msra.mxu0 0.0
        %3774 = vmatprep.subr.mxu0 0.0
        %3775 = vmatpush1.msra.mxu0 0.0
        %3776 = vmatprep.subr.mxu0 0.0
        %3777 = vmatpush1.msra.mxu0 0.0
        %3778 = vmatprep.subr.mxu0 0.0
        %3779 = vmatpush1.msra.mxu0 0.0
        %3780 = vmatprep.subr.mxu0 0.0
        %3781 = vmatpush1.msra.mxu0 0.0
        %3782 = vmatprep.subr.mxu0 0.0
        %3783 = vmatpush1.msra.mxu0 0.0
        %3784 = vmatprep.subr.mxu0 0.0
        %3785 = vmatpush1.msra.mxu0 0.0
        %3786 = vmatprep.subr.mxu0 0.0
        %3787 = vmatpush1.msra.mxu0 0.0
        %3788 = vmatprep.subr.mxu0 0.0
        %3789 = vmatpush1.msra.mxu0 0.0
        %3790 = vmatprep.subr.mxu0 0.0
        %3791 = vmatpush1.msra.mxu0 0.0
        %3792 = vmatprep.subr.mxu0 0.0
        %3793 = vmatpush1.msra.mxu0 0.0
        %3794 = vmatprep.subr.mxu0 0.0
        %3795 = vmatpush1.msra.mxu0 0.0
        %3796 = vmatprep.mubr.f32.mxu0 0.0
        %3797 = vmatmul.mubr.f32.gmra.mrb[0].mxu0 %v3727
        %v3798 = vpop.f32.mrb[0].mxu0
        %v3799 = vadd.f32 0.0, %v3798
        %v3800 = vpop.f32.mrb[0].mxu0
        %3801 = vmatprep.mubr.f32.mxu0 0.0
        %3802 = vmatmul.mubr.f32.gmra.mrb[0].mxu0 %v3730
        %v3803 = vpop.f32.mrb[0].mxu0
        %v3804 = vadd.f32 0.0, %v3803
        %v3805 = vpop.f32.mrb[0].mxu0
        %3806 = vdwg.mxu0
        %3807 = vrot.lane.b32.xlu0 %v448, 40
        %v3808 = vpop.permute.xlu0 %3807
        %3809 = vrot.lane.b32.xlu0 %v453, 40
        %v3810 = vpop.permute.xlu0 %3809
        %v3814 = vsel %vm833, %v3714, 0
        %v3817 = vsel %vm833, %v3715, 0
        %3819 = vmatprep.subr.mxu0 0.0
        %3820 = vmatpush1.msra.mxu0 %v3808
        %3821 = vmatprep.subr.mxu0 0.0
        %3822 = vmatpush1.msra.mxu0 %v3810
        %3823 = vmatprep.subr.mxu0 0.0
        %3824 = vmatpush1.msra.mxu0 0.0
        %3825 = vmatprep.subr.mxu0 0.0
        %3826 = vmatpush1.msra.mxu0 0.0
        %3827 = vmatprep.subr.mxu0 0.0
        %3828 = vmatpush1.msra.mxu0 0.0
        %3829 = vmatprep.subr.mxu0 0.0
        %3830 = vmatpush1.msra.mxu0 0.0
        %3831 = vmatprep.subr.mxu0 0.0
        %3832 = vmatpush1.msra.mxu0 0.0
        %3833 = vmatprep.subr.mxu0 0.0
        %3834 = vmatpush1.msra.mxu0 0.0
        %3835 = vmatprep.subr.mxu0 0.0
        %3836 = vmatpush1.msra.mxu0 0.0
        %3837 = vmatprep.subr.mxu0 0.0
        %3838 = vmatpush1.msra.mxu0 0.0
        %3839 = vmatprep.subr.mxu0 0.0
        %3840 = vmatpush1.msra.mxu0 0.0
        %3841 = vmatprep.subr.mxu0 0.0
        %3842 = vmatpush1.msra.mxu0 0.0
        %3843 = vmatprep.subr.mxu0 0.0
        %3844 = vmatpush1.msra.mxu0 0.0
        %3845 = vmatprep.subr.mxu0 0.0
        %3846 = vmatpush1.msra.mxu0 0.0
        %3847 = vmatprep.subr.mxu0 0.0
        %3848 = vmatpush1.msra.mxu0 0.0
        %3849 = vmatprep.subr.mxu0 0.0
        %3850 = vmatpush1.msra.mxu0 0.0
        %3851 = vmatprep.subr.mxu0 0.0
        %3852 = vmatpush1.msra.mxu0 0.0
        %3853 = vmatprep.subr.mxu0 0.0
        %3854 = vmatpush1.msra.mxu0 0.0
        %3855 = vmatprep.subr.mxu0 0.0
        %3856 = vmatpush1.msra.mxu0 0.0
        %3857 = vmatprep.subr.mxu0 0.0
        %3858 = vmatpush1.msra.mxu0 0.0
        %3859 = vmatprep.subr.mxu0 0.0
        %3860 = vmatpush1.msra.mxu0 0.0
        %3861 = vmatprep.subr.mxu0 0.0
        %3862 = vmatpush1.msra.mxu0 0.0
        %3863 = vmatprep.subr.mxu0 0.0
        %3864 = vmatpush1.msra.mxu0 0.0
        %3865 = vmatprep.subr.mxu0 0.0
        %3866 = vmatpush1.msra.mxu0 0.0
        %3867 = vmatprep.subr.mxu0 0.0
        %3868 = vmatpush1.msra.mxu0 0.0
        %3869 = vmatprep.subr.mxu0 0.0
        %3870 = vmatpush1.msra.mxu0 0.0
        %3871 = vmatprep.subr.mxu0 0.0
        %3872 = vmatpush1.msra.mxu0 0.0
        %3873 = vmatprep.subr.mxu0 0.0
        %3874 = vmatpush1.msra.mxu0 0.0
        %3875 = vmatprep.subr.mxu0 0.0
        %3876 = vmatpush1.msra.mxu0 0.0
        %3877 = vmatprep.subr.mxu0 0.0
        %3878 = vmatpush1.msra.mxu0 0.0
        %3879 = vmatprep.subr.mxu0 0.0
        %3880 = vmatpush1.msra.mxu0 0.0
        %3881 = vmatprep.subr.mxu0 0.0
        %3882 = vmatpush1.msra.mxu0 0.0
        %3883 = vmatprep.mubr.f32.mxu0 0.0
        %3884 = vmatmul.mubr.f32.gmra.mrb[0].mxu0 %v3814
        %v3885 = vpop.f32.mrb[0].mxu0
        %v3886 = vadd.f32 0.0, %v3885
        %v3887 = vpop.f32.mrb[0].mxu0
        %3888 = vmatprep.mubr.f32.mxu0 0.0
        %3889 = vmatmul.mubr.f32.gmra.mrb[0].mxu0 %v3817
        %v3890 = vpop.f32.mrb[0].mxu0
        %v3891 = vadd.f32 0.0, %v3890
        %v3892 = vpop.f32.mrb[0].mxu0
        %3893 = vdwg.mxu0
        %3894 = vrot.lane.b32.xlu0 %v458, 40
        %v3895 = vpop.permute.xlu0 %3894
        %3896 = vrot.lane.b32.xlu0 %v463, 40
        %v3897 = vpop.permute.xlu0 %3896
        %v3901 = vsel %vm833, %v3716, 0
        %v3904 = vsel %vm833, %v3717, 0
        %3906 = vmatprep.subr.mxu0 0.0
        %3907 = vmatpush1.msra.mxu0 %v3895
        %3908 = vmatprep.subr.mxu0 0.0
        %3909 = vmatpush1.msra.mxu0 %v3897
        %3910 = vmatprep.subr.mxu0 0.0
        %3911 = vmatpush1.msra.mxu0 0.0
        %3912 = vmatprep.subr.mxu0 0.0
        %3913 = vmatpush1.msra.mxu0 0.0
        %3914 = vmatprep.subr.mxu0 0.0
        %3915 = vmatpush1.msra.mxu0 0.0
        %3916 = vmatprep.subr.mxu0 0.0
        %3917 = vmatpush1.msra.mxu0 0.0
        %3918 = vmatprep.subr.mxu0 0.0
        %3919 = vmatpush1.msra.mxu0 0.0
        %3920 = vmatprep.subr.mxu0 0.0
        %3921 = vmatpush1.msra.mxu0 0.0
        %3922 = vmatprep.subr.mxu0 0.0
        %3923 = vmatpush1.msra.mxu0 0.0
        %3924 = vmatprep.subr.mxu0 0.0
        %3925 = vmatpush1.msra.mxu0 0.0
        %3926 = vmatprep.subr.mxu0 0.0
        %3927 = vmatpush1.msra.mxu0 0.0
        %3928 = vmatprep.subr.mxu0 0.0
        %3929 = vmatpush1.msra.mxu0 0.0
        %3930 = vmatprep.subr.mxu0 0.0
        %3931 = vmatpush1.msra.mxu0 0.0
        %3932 = vmatprep.subr.mxu0 0.0
        %3933 = vmatpush1.msra.mxu0 0.0
        %3934 = vmatprep.subr.mxu0 0.0
        %3935 = vmatpush1.msra.mxu0 0.0
        %3936 = vmatprep.subr.mxu0 0.0
        %3937 = vmatpush1.msra.mxu0 0.0
        %3938 = vmatprep.subr.mxu0 0.0
        %3939 = vmatpush1.msra.mxu0 0.0
        %3940 = vmatprep.subr.mxu0 0.0
        %3941 = vmatpush1.msra.mxu0 0.0
        %3942 = vmatprep.subr.mxu0 0.0
        %3943 = vmatpush1.msra.mxu0 0.0
        %3944 = vmatprep.subr.mxu0 0.0
        %3945 = vmatpush1.msra.mxu0 0.0
        %3946 = vmatprep.subr.mxu0 0.0
        %3947 = vmatpush1.msra.mxu0 0.0
        %3948 = vmatprep.subr.mxu0 0.0
        %3949 = vmatpush1.msra.mxu0 0.0
        %3950 = vmatprep.subr.mxu0 0.0
        %3951 = vmatpush1.msra.mxu0 0.0
        %3952 = vmatprep.subr.mxu0 0.0
        %3953 = vmatpush1.msra.mxu0 0.0
        %3954 = vmatprep.subr.mxu0 0.0
        %3955 = vmatpush1.msra.mxu0 0.0
        %3956 = vmatprep.subr.mxu0 0.0
        %3957 = vmatpush1.msra.mxu0 0.0
        %3958 = vmatprep.subr.mxu0 0.0
        %3959 = vmatpush1.msra.mxu0 0.0
        %3960 = vmatprep.subr.mxu0 0.0
        %3961 = vmatpush1.msra.mxu0 0.0
        %3962 = vmatprep.subr.mxu0 0.0
        %3963 = vmatpush1.msra.mxu0 0.0
        %3964 = vmatprep.subr.mxu0 0.0
        %3965 = vmatpush1.msra.mxu0 0.0
        %3966 = vmatprep.subr.mxu0 0.0
        %3967 = vmatpush1.msra.mxu0 0.0
        %3968 = vmatprep.subr.mxu0 0.0
        %3969 = vmatpush1.msra.mxu0 0.0
        %3970 = vmatprep.mubr.f32.mxu0 0.0
        %3971 = vmatmul.mubr.f32.gmra.mrb[0].mxu0 %v3901
        %v3972 = vpop.f32.mrb[0].mxu0
        %v3973 = vadd.f32 0.0, %v3972
        %v3974 = vpop.f32.mrb[0].mxu0
        %3975 = vmatprep.mubr.f32.mxu0 0.0
        %3976 = vmatmul.mubr.f32.gmra.mrb[0].mxu0 %v3904
        %v3977 = vpop.f32.mrb[0].mxu0
        %v3978 = vadd.f32 0.0, %v3977
        %v3979 = vpop.f32.mrb[0].mxu0
        %3980 = vdwg.mxu0
        %3981 = vrot.lane.b32.xlu0 %v468, 40
        %v3982 = vpop.permute.xlu0 %3981
        %3983 = vrot.lane.b32.xlu0 %v473, 40
        %v3984 = vpop.permute.xlu0 %3983
        %v3988 = vsel %vm833, %v3718, 0
        %v3991 = vsel %vm833, %v3719, 0
        %3993 = vmatprep.subr.mxu0 0.0
        %3994 = vmatpush1.msra.mxu0 %v3982
        %3995 = vmatprep.subr.mxu0 0.0
        %3996 = vmatpush1.msra.mxu0 %v3984
        %3997 = vmatprep.subr.mxu0 0.0
        %3998 = vmatpush1.msra.mxu0 0.0
        %3999 = vmatprep.subr.mxu0 0.0
        %4000 = vmatpush1.msra.mxu0 0.0
        %4001 = vmatprep.subr.mxu0 0.0
        %4002 = vmatpush1.msra.mxu0 0.0
        %4003 = vmatprep.subr.mxu0 0.0
        %4004 = vmatpush1.msra.mxu0 0.0
        %4005 = vmatprep.subr.mxu0 0.0
        %4006 = vmatpush1.msra.mxu0 0.0
        %4007 = vmatprep.subr.mxu0 0.0
        %4008 = vmatpush1.msra.mxu0 0.0
        %4009 = vmatprep.subr.mxu0 0.0
        %4010 = vmatpush1.msra.mxu0 0.0
        %4011 = vmatprep.subr.mxu0 0.0
        %4012 = vmatpush1.msra.mxu0 0.0
        %4013 = vmatprep.subr.mxu0 0.0
        %4014 = vmatpush1.msra.mxu0 0.0
        %4015 = vmatprep.subr.mxu0 0.0
        %4016 = vmatpush1.msra.mxu0 0.0
        %4017 = vmatprep.subr.mxu0 0.0
        %4018 = vmatpush1.msra.mxu0 0.0
        %4019 = vmatprep.subr.mxu0 0.0
        %4020 = vmatpush1.msra.mxu0 0.0
        %4021 = vmatprep.subr.mxu0 0.0
        %4022 = vmatpush1.msra.mxu0 0.0
        %4023 = vmatprep.subr.mxu0 0.0
        %4024 = vmatpush1.msra.mxu0 0.0
        %4025 = vmatprep.subr.mxu0 0.0
        %4026 = vmatpush1.msra.mxu0 0.0
        %4027 = vmatprep.subr.mxu0 0.0
        %4028 = vmatpush1.msra.mxu0 0.0
        %4029 = vmatprep.subr.mxu0 0.0
        %4030 = vmatpush1.msra.mxu0 0.0
        %4031 = vmatprep.subr.mxu0 0.0
        %4032 = vmatpush1.msra.mxu0 0.0
        %4033 = vmatprep.subr.mxu0 0.0
        %4034 = vmatpush1.msra.mxu0 0.0
        %4035 = vmatprep.subr.mxu0 0.0
        %4036 = vmatpush1.msra.mxu0 0.0
        %4037 = vmatprep.subr.mxu0 0.0
        %4038 = vmatpush1.msra.mxu0 0.0
        %4039 = vmatprep.subr.mxu0 0.0
        %4040 = vmatpush1.msra.mxu0 0.0
        %4041 = vmatprep.subr.mxu0 0.0
        %4042 = vmatpush1.msra.mxu0 0.0
        %4043 = vmatprep.subr.mxu0 0.0
        %4044 = vmatpush1.msra.mxu0 0.0
        %4045 = vmatprep.subr.mxu0 0.0
        %4046 = vmatpush1.msra.mxu0 0.0
        %4047 = vmatprep.subr.mxu0 0.0
        %4048 = vmatpush1.msra.mxu0 0.0
        %4049 = vmatprep.subr.mxu0 0.0
        %4050 = vmatpush1.msra.mxu0 0.0
        %4051 = vmatprep.subr.mxu0 0.0
        %4052 = vmatpush1.msra.mxu0 0.0
        %4053 = vmatprep.subr.mxu0 0.0
        %4054 = vmatpush1.msra.mxu0 0.0
        %4055 = vmatprep.subr.mxu0 0.0
        %4056 = vmatpush1.msra.mxu0 0.0
        %4057 = vmatprep.mubr.f32.mxu0 0.0
        %4058 = vmatmul.mubr.f32.gmra.mrb[0].mxu0 %v3988
        %v4059 = vpop.f32.mrb[0].mxu0
        %v4060 = vadd.f32 0.0, %v4059
        %v4061 = vpop.f32.mrb[0].mxu0
        %4062 = vmatprep.mubr.f32.mxu0 0.0
        %4063 = vmatmul.mubr.f32.gmra.mrb[0].mxu0 %v3991
        %v4064 = vpop.f32.mrb[0].mxu0
        %v4065 = vadd.f32 0.0, %v4064
        %v4066 = vpop.f32.mrb[0].mxu0
        %4067 = vdwg.mxu0
        %v4068 = vld [vmem:[#allocation8 + $0x18] sm:$0xff]
        %v4070 = vsel %vm482, %v3799, 0
        %v4073 = vsel %vm482, %v3804, 0
        %v4076 = vsel %vm482, %v3886, 0
        %v4079 = vsel %vm482, %v3891, 0
        %v4082 = vsel %vm482, %v3973, 0
        %v4085 = vsel %vm482, %v3978, 0
        %v4088 = vsel %vm482, %v4060, 0
        %v4091 = vsel %vm482, %v4065, 0
        %4093 = vmatprep.subr.mxu0 0.0
        %4094 = vmatpush1.msra.mxu0 %v4068
        %4095 = vmatprep.subr.mxu0 0.0
        %4096 = vmatpush1.msra.mxu0 0.0
        %4097 = vmatprep.subr.mxu0 0.0
        %4098 = vmatpush1.msra.mxu0 0.0
        %4099 = vmatprep.subr.mxu0 0.0
        %4100 = vmatpush1.msra.mxu0 0.0
        %4101 = vmatprep.subr.mxu0 0.0
        %4102 = vmatpush1.msra.mxu0 0.0
        %4103 = vmatprep.subr.mxu0 0.0
        %4104 = vmatpush1.msra.mxu0 0.0
        %4105 = vmatprep.subr.mxu0 0.0
        %4106 = vmatpush1.msra.mxu0 0.0
        %4107 = vmatprep.subr.mxu0 0.0
        %4108 = vmatpush1.msra.mxu0 0.0
        %4109 = vmatprep.subr.mxu0 0.0
        %4110 = vmatpush1.msra.mxu0 0.0
        %4111 = vmatprep.subr.mxu0 0.0
        %4112 = vmatpush1.msra.mxu0 0.0
        %4113 = vmatprep.subr.mxu0 0.0
        %4114 = vmatpush1.msra.mxu0 0.0
        %4115 = vmatprep.subr.mxu0 0.0
        %4116 = vmatpush1.msra.mxu0 0.0
        %4117 = vmatprep.subr.mxu0 0.0
        %4118 = vmatpush1.msra.mxu0 0.0
        %4119 = vmatprep.subr.mxu0 0.0
        %4120 = vmatpush1.msra.mxu0 0.0
        %4121 = vmatprep.subr.mxu0 0.0
        %4122 = vmatpush1.msra.mxu0 0.0
        %4123 = vmatprep.subr.mxu0 0.0
        %4124 = vmatpush1.msra.mxu0 0.0
        %4125 = vmatprep.subr.mxu0 0.0
        %4126 = vmatpush1.msra.mxu0 0.0
        %4127 = vmatprep.subr.mxu0 0.0
        %4128 = vmatpush1.msra.mxu0 0.0
        %4129 = vmatprep.subr.mxu0 0.0
        %4130 = vmatpush1.msra.mxu0 0.0
        %4131 = vmatprep.subr.mxu0 0.0
        %4132 = vmatpush1.msra.mxu0 0.0
        %4133 = vmatprep.subr.mxu0 0.0
        %4134 = vmatpush1.msra.mxu0 0.0
        %4135 = vmatprep.subr.mxu0 0.0
        %4136 = vmatpush1.msra.mxu0 0.0
        %4137 = vmatprep.subr.mxu0 0.0
        %4138 = vmatpush1.msra.mxu0 0.0
        %4139 = vmatprep.subr.mxu0 0.0
        %4140 = vmatpush1.msra.mxu0 0.0
        %4141 = vmatprep.subr.mxu0 0.0
        %4142 = vmatpush1.msra.mxu0 0.0
        %4143 = vmatprep.subr.mxu0 0.0
        %4144 = vmatpush1.msra.mxu0 0.0
        %4145 = vmatprep.subr.mxu0 0.0
        %4146 = vmatpush1.msra.mxu0 0.0
        %4147 = vmatprep.subr.mxu0 0.0
        %4148 = vmatpush1.msra.mxu0 0.0
        %4149 = vmatprep.subr.mxu0 0.0
        %4150 = vmatpush1.msra.mxu0 0.0
        %4151 = vmatprep.subr.mxu0 0.0
        %4152 = vmatpush1.msra.mxu0 0.0
        %4153 = vmatprep.subr.mxu0 0.0
        %4154 = vmatpush1.msra.mxu0 0.0
        %4155 = vmatprep.subr.mxu0 0.0
        %4156 = vmatpush1.msra.mxu0 0.0
        %4157 = vmatprep.mubr.f32.mxu0 0.0
        %4158 = vmatmul.mubr.f32.gmra.mrb[0].mxu0 %v4070
        %v4159 = vpop.f32.mrb[0].mxu0
        %v4160 = vadd.f32 0.0, %v4159
        %v4161 = vpop.f32.mrb[0].mxu0
        %4162 = vmatprep.mubr.f32.mxu0 0.0
        %4163 = vmatmul.mubr.f32.gmra.mrb[0].mxu0 %v4073
        %v4164 = vpop.f32.mrb[0].mxu0
        %v4165 = vadd.f32 0.0, %v4164
        %v4166 = vpop.f32.mrb[0].mxu0
        %4167 = vmatprep.mubr.f32.mxu0 0.0
        %4168 = vmatmul.mubr.f32.gmra.mrb[0].mxu0 %v4076
        %v4169 = vpop.f32.mrb[0].mxu0
        %v4170 = vadd.f32 0.0, %v4169
        %v4171 = vpop.f32.mrb[0].mxu0
        %4172 = vmatprep.mubr.f32.mxu0 0.0
        %4173 = vmatmul.mubr.f32.gmra.mrb[0].mxu0 %v4079
        %v4174 = vpop.f32.mrb[0].mxu0
        %v4175 = vadd.f32 0.0, %v4174
        %v4176 = vpop.f32.mrb[0].mxu0
        %4177 = vmatprep.mubr.f32.mxu0 0.0
        %4178 = vmatmul.mubr.f32.gmra.mrb[0].mxu0 %v4082
        %v4179 = vpop.f32.mrb[0].mxu0
        %v4180 = vadd.f32 0.0, %v4179
        %v4181 = vpop.f32.mrb[0].mxu0
        %4182 = vmatprep.mubr.f32.mxu0 0.0
        %4183 = vmatmul.mubr.f32.gmra.mrb[0].mxu0 %v4085
        %v4184 = vpop.f32.mrb[0].mxu0
        %v4185 = vadd.f32 0.0, %v4184
        %v4186 = vpop.f32.mrb[0].mxu0
        %4187 = vmatprep.mubr.f32.mxu0 0.0
        %4188 = vmatmul.mubr.f32.gmra.mrb[0].mxu0 %v4088
        %v4189 = vpop.f32.mrb[0].mxu0
        %v4190 = vadd.f32 0.0, %v4189
        %v4191 = vpop.f32.mrb[0].mxu0
        %4192 = vmatprep.mubr.f32.mxu0 0.0
        %4193 = vmatmul.mubr.f32.gmra.mrb[0].mxu0 %v4091
        %v4194 = vpop.f32.mrb[0].mxu0
        %v4195 = vadd.f32 0.0, %v4194
        %v4196 = vpop.f32.mrb[0].mxu0
        %4197 = vdwg.mxu0
        %v4198 = vadd.f32 %v3260, %v4160
        %v4199 = vadd.f32 %v3261, %v4165
        %v4200 = vadd.f32 %v3262, %v4170
        %v4201 = vadd.f32 %v3263, %v4175
        %v4202 = vadd.f32 %v3264, %v4180
        %v4203 = vadd.f32 %v3265, %v4185
        %v4204 = vadd.f32 %v3266, %v4190
        %v4205 = vadd.f32 %v3267, %v4195
        %v4206 = vld [vmem:[%s5] sm:$0x1]
        %v4208 = vlaneseq
        %v4209 = vshrl.u32 %v4208, 7
        %v4210 = vsub.s32 0, %v4209
        %v4211 = vrot.slane %v4206, %v4210
        %v4213 = vadd.f32 %v4198, %v4211
        %v4214 = vadd.f32 %v4199, %v4211
        %v4215 = vadd.f32 %v4200, %v4211
        %v4216 = vadd.f32 %v4201, %v4211
        %v4217 = vadd.f32 %v4202, %v4211
        %v4218 = vadd.f32 %v4203, %v4211
        %v4219 = vadd.f32 %v4204, %v4211
        %v4220 = vadd.f32 %v4205, %v4211
        %4221 = vst [vmem:[%s314] sm:$0xff] %v4213
        %4222 = vst [vmem:[%s314 + $0x8] sm:$0xff] %v4214
        %4223 = vst [vmem:[%s314 + $0x10] sm:$0xff] %v4215
        %4224 = vst [vmem:[%s314 + $0x18] sm:$0xff] %v4216
        %4225 = vst [vmem:[%s314 + $0x20] sm:$0xff] %v4217
        %4226 = vst [vmem:[%s314 + $0x28] sm:$0xff] %v4218
        %4227 = vst [vmem:[%s314 + $0x30] sm:$0xff] %v4219
        %4228 = vst [vmem:[%s314 + $0x38] sm:$0xff] %v4220
        %s4229 = sand.u32 %s164, 1
        %s4230 = scalar_lea.sflag [#allocation4], %s4229
        %s4231 = sand.u32 %s164, 1
        %s4232 = smul.addr %s4231, 64
        %s4233 = scalar_lea.vmem [#allocation10], %s4232
        // Predicated region
        $region61: #{tpu_custom_call.1} parent=43 // pred_check
          %p4234 = pneg %p174
        $region62: #{tpu_custom_call.1} parent=43 // pred_check_branch
          %4236 = sbr.rel (%p4234) target = $region64
        $region63: #{tpu_custom_call.1} parent=43 // pred_region
          %s4237 = smul.u32 4, %s25
          %s4239 = ssub.s32 1024, 1024
          %4240 = vsyncadd %s4230, %s4239
          %s4241 = smul.addr %s4237, 2
          %s4242 = smul.addr %s4241, 128
          %s4243 = scalar_lea.hbm %s6, %s4242
          %s4244 = sshll.u32 %s4233, 4
          %s4245 = int_to_ptr.vmem [resolvable:$true] %s4244
          %4250 = dma.vmem_to_hbm [thread:$0]  %s4245, 1024, %s4243, %s4230, 128, 128, 8
        $region64: #{tpu_custom_call.1} parent=43 // pred_fallthru
          _
      $region44: #{tpu_custom_call.1} parent=5 // pred_fallthru
        _
      %p4251 = scmp.le.s32.totalorder 2, %s20
      // Predicated region
      $region65: #{tpu_custom_call.1} parent=5 // pred_check
        %p4252 = pneg %p4251
      $region66: #{tpu_custom_call.1} parent=5 // pred_check_branch
        %4254 = sbr.rel (%p4252) target = $region68
      $region67: #{tpu_custom_call.1} parent=5 // pred_region
        %s4255 = ssub.s32 %s20, 2
        // Predicated region
        $region69: #{tpu_custom_call.1} parent=67 // pred_check
          %p4256 = pneg %p180
        $region70: #{tpu_custom_call.1} parent=67 // pred_check_branch
          %4258 = sbr.rel (%p4256) target = $region72
        $region71: #{tpu_custom_call.1} parent=67 // pred_region
          %s4259 = sand.u32 %s165, 1
          %s4260 = scalar_lea.sflag [#allocation4], %s4259
          %s4261 = sand.u32 %s165, 1
          %s4262 = smul.addr %s4261, 64
          %s4263 = scalar_lea.vmem [#allocation10], %s4262
          %4264 = dma.done %s4260, 1024
        $region72: #{tpu_custom_call.1} parent=67 // pred_fallthru
          _
      $region68: #{tpu_custom_call.1} parent=5 // pred_fallthru
        _
    $region6: #{tpu_custom_call.1} parent=1 // loop_footer
      %s24 = sadd.s32 1, %s20
    $region7: #{tpu_custom_call.1} parent=1 // loop_footer_branch
      %19 = sbr.rel target = $region3
    $region8: #{tpu_custom_call.1} parent=1 // loop_exit
      _
    %4265 = vsyncpa [#allocation3], 1
    %s4266 = scalar_lea.sflag [#allocation3], 1
    %4267 = vsyncpa %s4266, 1
    %4268 = vsyncpa [#allocation6], 1
    %4269 = vsyncpa [#allocation9], 1
    %4270 = vsyncpa [#allocation4], 1
    %s4271 = scalar_lea.sflag [#allocation4], 1
    %4272 = vsyncpa %s4271, 1

</llo_original>
